<compile_context>
chip_gen: v5e
topology: v5e:2x2
jax: 0.10.0
libtpu: 0.0.40
codegen_flags: <defaults>
</compile_context>

<pallas_src>
import functools
import math

import jax
import jax.numpy as jnp
from jax import lax
from jax.experimental import pallas as pl
from jax.experimental.pallas import tpu as pltpu


# ----------------------------------------------------------------------------
# Pallas kernels
# ----------------------------------------------------------------------------
def _dyn_dense_concat_silu_kernel(*refs, n_x, c_offs):
    """Per-sample fused-concat 1x1 CondConv tile.

    refs = (x_0, ..., x_{n_x-1}, w, b, o)
      x_i: (1, TM, Ci) channels-last pieces of the (virtual) concat input
      w:   (1, sum(Ci), Cout) per-sample mixed kernel
      b:   (1, 1, Cout)       per-sample mixed bias
      o:   (1, TM, Cout)
    out = SiLU(concat(x_i, axis=-1) @ W_b + bias_b), computed as a sum of one
    MXU matmul per piece against a *static* slice of W (no concat in HBM).
    """
    w_ref = refs[n_x]
    b_ref = refs[n_x + 1]
    o_ref = refs[n_x + 2]

    x0 = refs[0]
    acc = jnp.dot(x0[0], w_ref[0, pl.ds(0, x0.shape[-1]), :],
                  preferred_element_type=jnp.float32)
    for i in range(1, n_x):
        xi = refs[i]
        ci = xi.shape[-1]
        acc = acc + jnp.dot(xi[0], w_ref[0, pl.ds(c_offs[i], ci), :],
                            preferred_element_type=jnp.float32)
    acc = acc + b_ref[0].astype(jnp.float32)
    o_ref[0] = (acc * jax.nn.sigmoid(acc)).astype(o_ref.dtype)


def dyn_conv1x1_concat_silu(xs, w, b, *, vmem_block_budget=20 * 1024 * 1024):
    """Dynamic (per-sample) 1x1 conv + bias + SiLU over a fused channel concat.

    xs: list of (B, HW, Ci) channels-last, spatially flattened pieces
    w:  (B, sum(Ci), Cout) per-sample mixed kernels (channel order == concat order)
    b:  (B, 1, Cout)       per-sample mixed bias
    returns (B, HW, Cout)
    """
    B, HW = xs[0].shape[0], xs[0].shape[1]
    cins = [int(x.shape[-1]) for x in xs]
    cin_total = sum(cins)
    assert int(w.shape[1]) == cin_total, (w.shape, cins)
    Cout = int(w.shape[-1])
    dtype = xs[0].dtype
    itemsize = dtype.itemsize

    # Large, lane-dense blocks: full channel extent on lanes, as many spatial
    # rows per grid step as the VMEM budget allows (double-buffered in/out,
    # f32 accumulator, per-sample weight block resident).
    bytes_per_row = 2 * itemsize * (cin_total + Cout) + 4 * Cout
    fixed_bytes = 2 * itemsize * (cin_total * Cout + Cout)
    tm = (vmem_block_budget - fixed_bytes) // max(bytes_per_row, 1)
    if tm >= HW:
        tm = HW                       # whole sample per step
    else:
        tm = max(8, (tm // 8) * 8)    # sublane-aligned tile

    c_offs = tuple(int(sum(cins[:i])) for i in range(len(cins)))
    grid = (B, pl.cdiv(HW, tm))

    in_specs = [pl.BlockSpec((1, tm, ci), lambda bi, mi: (bi, mi, 0))
                for ci in cins]
    in_specs += [
        pl.BlockSpec((1, cin_total, Cout), lambda bi, mi: (bi, 0, 0)),
        pl.BlockSpec((1, 1, Cout), lambda bi, mi: (bi, 0, 0)),
    ]

    cost = pl.CostEstimate(
        flops=2 * B * HW * cin_total * Cout,
        transcendentals=B * HW * Cout,
        bytes_accessed=itemsize * (sum(x.size for x in xs) + w.size + b.size
                                   + B * HW * Cout),
    )
    kernel = functools.partial(_dyn_dense_concat_silu_kernel,
                               n_x=len(xs), c_offs=c_offs)
    return pl.pallas_call(
        kernel,
        out_shape=jax.ShapeDtypeStruct((B, HW, Cout), dtype),
        grid_spec=pltpu.PrefetchScalarGridSpec(
            num_scalar_prefetch=0,
            grid=grid,
            in_specs=in_specs,
            out_specs=pl.BlockSpec((1, tm, Cout), lambda bi, mi: (bi, mi, 0)),
        ),
        compiler_params=pltpu.CompilerParams(
            dimension_semantics=("parallel", "parallel"),
            vmem_limit_bytes=32 * 1024 * 1024,
        ),
        cost_estimate=cost,
    )(*xs, w, b)


def _dyn_conv3x3_silu_kernel(x_ref, w_ref, b_ref, o_ref, *, pw, out_rows):
    """Per-sample 3x3 'same' CondConv over a zero-padded, flattened image.

    The padded sample is laid out row-major as ((H+3)*(W+2), Cin); the wide
    output raster is (H*(W+2), Cout).  For tap (ky, kx) the contribution to
    wide-output row r comes from padded-input row r + ky*(W+2) + kx, so every
    tap is one contiguous 2-D slice followed by one MXU matmul.  The 2 pad
    columns of each output image row are garbage and dropped by the wrapper.
    """
    cout = o_ref.shape[-1]
    acc = jnp.zeros((out_rows, cout), jnp.float32)
    for t in range(9):
        ky, kx = divmod(t, 3)
        tap = x_ref[0, pl.ds(ky * pw + kx, out_rows), :]
        acc = acc + jnp.dot(tap, w_ref[0, t], preferred_element_type=jnp.float32)
    acc = acc + b_ref[0].astype(jnp.float32)
    o_ref[0] = (acc * jax.nn.sigmoid(acc)).astype(o_ref.dtype)


def dyn_conv3x3_silu(x_bhwc, w, b):
    """Dynamic (per-sample) 3x3 'same' conv + bias + SiLU.

    x_bhwc: (B, H, W, Cin); w: (B, 9, Cin, Cout); b: (B, 1, Cout)
    returns (B, H, W, Cout)
    """
    B, H, W, Cin = x_bhwc.shape
    Cout = int(w.shape[-1])
    pw = W + 2
    out_rows = H * pw
    # Pad 1 px top/left/right and 2 px bottom (the extra bottom row keeps the
    # largest tap slice in bounds), then flatten the spatial dims row-major.
    xp = jnp.pad(x_bhwc, ((0, 0), (1, 2), (1, 1), (0, 0)))
    in_rows = (H + 3) * pw
    xp = xp.reshape(B, in_rows, Cin)

    itemsize = x_bhwc.dtype.itemsize
    cost = pl.CostEstimate(
        flops=2 * 9 * B * out_rows * Cin * Cout,
        transcendentals=B * out_rows * Cout,
        bytes_accessed=itemsize * (xp.size + w.size + b.size + B * out_rows * Cout),
    )
    kernel = functools.partial(_dyn_conv3x3_silu_kernel, pw=pw, out_rows=out_rows)
    # TODO(synk): for very large H*W (early backbone levels) add a halo-tiled
    # spatial grid axis (manual DMA) instead of keeping a whole sample in VMEM.
    y = pl.pallas_call(
        kernel,
        out_shape=jax.ShapeDtypeStruct((B, out_rows, Cout), x_bhwc.dtype),
        grid_spec=pltpu.PrefetchScalarGridSpec(
            num_scalar_prefetch=0,
            grid=(B,),
            in_specs=[
                pl.BlockSpec((1, in_rows, Cin), lambda bi: (bi, 0, 0)),
                pl.BlockSpec((1, 9, Cin, Cout), lambda bi: (bi, 0, 0, 0)),
                pl.BlockSpec((1, 1, Cout), lambda bi: (bi, 0, 0)),
            ],
            out_specs=pl.BlockSpec((1, out_rows, Cout), lambda bi: (bi, 0, 0)),
        ),
        compiler_params=pltpu.CompilerParams(
            dimension_semantics=("parallel",),
            vmem_limit_bytes=32 * 1024 * 1024,
        ),
        cost_estimate=cost,
    )(xp, w, b)
    return y.reshape(B, H, pw, Cout)[:, :, :W, :]


# ----------------------------------------------------------------------------
# CondConv routing (tiny GEMMs, left to XLA) and parameter initialisation
# ----------------------------------------------------------------------------
def init_condconv(key, cin, cout, ksize, experts_num):
    kw, kb, kr = jax.random.split(key, 3)
    taps = ksize * ksize
    return {
        "ksize": ksize,
        "route_w": 0.2 * jax.random.normal(kr, (experts_num, cin), jnp.float32),
        "route_b": jnp.zeros((experts_num,), jnp.float32),
        "experts_w": jax.random.normal(kw, (experts_num, taps, cin, cout),
                                       jnp.float32) * (0.5 / math.sqrt(cin * taps)),
        "experts_b": 0.1 * jax.random.normal(kb, (experts_num, cout), jnp.float32),
    }


def _route_and_mix(pooled_f32, p, out_dtype):
    """CondConv routing -> per-sample mixed kernel (B,T,Cin,Cout), bias (B,1,Cout).

    pooled_f32: (B, Cin) global-average-pooled features (f32).
    nn.Dropout(drop_ratio) on the pooled features is an inference no-op.
    """
    r = jax.nn.sigmoid(pooled_f32 @ p["route_w"].T + p["route_b"])    # (B, E)
    w = jnp.einsum("be,etio->btio", r, p["experts_w"],
                   precision=lax.Precision.HIGHEST)
    b = (r @ p["experts_b"])[:, None, :]
    return w.astype(out_dtype), b.astype(out_dtype)


def _gap_pieces(xs):
    """GAP over concat(xs, channel) == concat of per-piece GAPs -> (B, sum Ci)."""
    return jnp.concatenate(
        [jnp.mean(x.astype(jnp.float32), axis=1) for x in xs], axis=-1)


def condconv_apply_1x1(xs, p):
    """1x1 CondConv (+SiLU) over a (virtual) channel concat of channels-last pieces."""
    pooled = _gap_pieces(xs)
    w, b = _route_and_mix(pooled, p, xs[0].dtype)
    return dyn_conv1x1_concat_silu(xs, w[:, 0], b)


def condconv_apply_3x3(x_flat, p, hw):
    """3x3 CondConv (+SiLU) over channels-last activations (B, HW, Cin)."""
    H, W = hw
    pooled = jnp.mean(x_flat.astype(jnp.float32), axis=1)
    w, b = _route_and_mix(pooled, p, x_flat.dtype)
    B, HW, Cin = x_flat.shape
    y = dyn_conv3x3_silu(x_flat.reshape(B, H, W, Cin), w, b)
    return y.reshape(B, HW, -1)


# ----------------------------------------------------------------------------
# C2fCondConv forward (Pallas path)
# ----------------------------------------------------------------------------
def init_c2f_condconv(key, c1, c2, n=1, shortcut=False, experts_num=8,
                      drop_ratio=0.2, e=0.5):
    del drop_ratio  # dropout on the routing path is identity at inference
    c = int(c2 * e)
    keys = jax.random.split(key, 2 + 2 * n)
    return {
        "c": c,
        "shortcut": bool(shortcut),
        "cv1": init_condconv(keys[0], c1, 2 * c, 1, experts_num),
        "cv2": init_condconv(keys[1], (2 + n) * c, c2, 1, experts_num),
        "m": [
            {
                "cv1": init_condconv(keys[2 + 2 * i], c, c, 3, experts_num),
                "cv2": init_condconv(keys[3 + 2 * i], c, c, 3, experts_num),
            }
            for i in range(n)
        ],
    }


def c2f_condconv_forward(x_nchw, params):
    """Pallas forward for C2fCondConv: (B, c1, H, W) -> (B, c2, H, W)."""
    B, c1, H, W = x_nchw.shape
    HW = H * W
    c = params["c"]
    # channels-last so the channel axis sits on TPU lanes inside every kernel
    x = jnp.transpose(x_nchw, (0, 2, 3, 1)).reshape(B, HW, c1)

    y = condconv_apply_1x1([x], params["cv1"])            # (B, HW, 2c)
    # chunk(2, dim=1) in NCHW == split of the last (channel) axis here; keep y
    # whole as the first concat piece (its two halves are contiguous).
    pieces = [y]
    cur = y[..., c:]
    for blk in params["m"]:                               # BottleneckCondConv, k=(3,3), e=1.0
        t = condconv_apply_3x3(cur, blk["cv1"], (H, W))
        t = condconv_apply_3x3(t, blk["cv2"], (H, W))
        cur = cur + t if params["shortcut"] else t
        pieces.append(cur)
    # cv2: 1x1 over concat(y0, y1, cur_1, ..., cur_n) — concat fused in-kernel.
    out = condconv_apply_1x1(pieces, params["cv2"])       # (B, HW, c2)
    return jnp.transpose(out.reshape(B, H, W, -1), (0, 3, 1, 2))


# ----------------------------------------------------------------------------
# Pure-JAX (XLA) reference, NCHW, via lax.conv_general_dilated
# ----------------------------------------------------------------------------
def _condconv_ref(x_nchw, p):
    B, cin, H, W = x_nchw.shape
    k = p["ksize"]
    pooled = jnp.mean(x_nchw.astype(jnp.float32), axis=(2, 3))
    r = jax.nn.sigmoid(pooled @ p["route_w"].T + p["route_b"])
    wmix = jnp.einsum("be,etio->btio", r, p["experts_w"],
                      precision=lax.Precision.HIGHEST)               # (B, k*k, cin, cout)
    cout = wmix.shape[-1]
    wk = wmix.reshape(B, k, k, cin, cout).transpose(0, 4, 3, 1, 2)   # (B, cout, cin, k, k)
    bmix = r @ p["experts_b"]

    def one(xb, wb, bb):
        y = lax.conv_general_dilated(
            xb[None], wb, window_strides=(1, 1), padding="SAME",
            dimension_numbers=("NCHW", "OIHW", "NCHW"),
            precision=lax.Precision.HIGHEST)[0]
        return y + bb[:, None, None]

    y = jax.vmap(one)(x_nchw.astype(jnp.float32), wk, bmix)
    return (y * jax.nn.sigmoid(y)).astype(x_nchw.dtype)


def c2f_condconv_ref(x, params):
    c = params["c"]
    y = _condconv_ref(x, params["cv1"])
    ys = [y[:, :c], y[:, c:]]
    cur = ys[-1]
    for blk in params["m"]:
        t = _condconv_ref(cur, blk["cv1"])
        t = _condconv_ref(t, blk["cv2"])
        cur = cur + t if params["shortcut"] else t
        ys.append(cur)
    return _condconv_ref(jnp.concatenate(ys, axis=1), params["cv2"])


if __name__ == "__main__":
    key = jax.random.PRNGKey(0)
    kx, kp = jax.random.split(key)

    B, C1, C2, H, W = 2, 64, 64, 16, 16
    n, shortcut, experts_num = 1, True, 8

    x = jax.random.normal(kx, (B, C1, H, W), dtype=jnp.float32)
    params = init_c2f_condconv(kp, C1, C2, n=n, shortcut=shortcut,
                               experts_num=experts_num)

    fwd = jax.jit(lambda inp: c2f_condconv_forward(inp, params))
    out = jax.block_until_ready(fwd(x))

    ref = jax.block_until_ready(c2f_condconv_ref(x, params))
    assert out.shape == (B, C2, H, W), out.shape
    assert out.dtype == x.dtype
    max_err = float(jnp.max(jnp.abs(out - ref)))
    assert jnp.allclose(out, ref, atol=3e-2, rtol=3e-2), (
        f"mismatch vs reference (max abs err {max_err})")
    print("KERNEL_OK")
</pallas_src>

<mosaic_0001>
module attributes {stable_mosaic.version = 11 : i64} {
  func.func @_dyn_dense_concat_silu_kernel(%arg0: i32, %arg1: i32, %arg2: memref<1x256x64xf32, #tpu.memory_space<vmem>>, %arg3: memref<1x64x64xf32, #tpu.memory_space<vmem>>, %arg4: memref<1x1x64xf32, #tpu.memory_space<vmem>>, %arg5: memref<1x256x64xf32, #tpu.memory_space<vmem>>) attributes {dimension_semantics = [#tpu.dimension_semantics<parallel>, #tpu.dimension_semantics<parallel>], iteration_bounds = array<i64: 2, 1>, scalar_prefetch = 0 : i64, scratch_operands = 0 : i64, tpu.core_type = #tpu.core_type<tc>, window_params = [{transform_indices = @transform_0, window_bounds = array<i64: 1, 256, 64>}, {transform_indices = @transform_1, window_bounds = array<i64: 1, 64, 64>}, {transform_indices = @transform_2, window_bounds = array<i64: 1, 1, 64>}, {transform_indices = @transform_3, window_bounds = array<i64: 1, 256, 64>}]} {
    %c0 = arith.constant 0 : index
    %c0_0 = arith.constant 0 : index
    %c0_1 = arith.constant 0 : index
    %0 = vector.load %arg2[%c0, %c0_0, %c0_1] : memref<1x256x64xf32, #tpu.memory_space<vmem>>, vector<1x256x64xf32>
    %1 = vector.shape_cast %0 : vector<1x256x64xf32> to vector<256x64xf32>
    %c0_2 = arith.constant 0 : index
    %c0_3 = arith.constant 0 : index
    %c0_4 = arith.constant 0 : index
    %2 = vector.load %arg3[%c0_2, %c0_3, %c0_4] : memref<1x64x64xf32, #tpu.memory_space<vmem>>, vector<1x64x64xf32>
    %3 = vector.shape_cast %2 : vector<1x64x64xf32> to vector<64x64xf32>
    %cst = arith.constant dense<0.000000e+00> : vector<256x64xf32>
    %4 = tpu.matmul %1, %3, %cst {dimension_numbers = #tpu.dot_dimension_numbers<[1], [0], [0], [1], [0, 0, 1, 1], [], []>} : vector<256x64xf32>, vector<64x64xf32>, vector<256x64xf32> -> vector<256x64xf32>
    %c0_5 = arith.constant 0 : index
    %c0_6 = arith.constant 0 : index
    %c0_7 = arith.constant 0 : index
    %5 = vector.load %arg4[%c0_5, %c0_6, %c0_7] : memref<1x1x64xf32, #tpu.memory_space<vmem>>, vector<1x1x64xf32>
    %6 = vector.shape_cast %5 : vector<1x1x64xf32> to vector<1x64xf32>
    %7 = vector.broadcast %6 : vector<1x64xf32> to vector<256x64xf32>
    %8 = arith.addf %4, %7 : vector<256x64xf32>
    %9 = arith.negf %8 : vector<256x64xf32>
    %10 = math.exp %9 : vector<256x64xf32>
    %cst_8 = arith.constant 1.000000e+00 : f32
    %11 = vector.broadcast %cst_8 : f32 to vector<256x64xf32>
    %12 = arith.addf %11, %10 : vector<256x64xf32>
    %13 = arith.divf %11, %12 : vector<256x64xf32>
    %14 = arith.mulf %8, %13 : vector<256x64xf32>
    %c0_9 = arith.constant 0 : index
    %c0_10 = arith.constant 0 : index
    %c0_11 = arith.constant 0 : index
    %15 = vector.load %arg5[%c0_9, %c0_10, %c0_11] : memref<1x256x64xf32, #tpu.memory_space<vmem>>, vector<1x256x64xf32>
    %16 = vector.shape_cast %15 : vector<1x256x64xf32> to vector<256x64xf32>
    %17 = vector.shape_cast %14 : vector<256x64xf32> to vector<1x256x64xf32>
    tpu.vector_store %arg5[%c0_9, %c0_10, %c0_11], %17 {strides = array<i32>} : memref<1x256x64xf32, #tpu.memory_space<vmem>>, vector<1x256x64xf32>,
    return
  }
  func.func @transform_0(%arg0: i32, %arg1: i32) -> (i32, i32, i32) {
    %c0_i32 = arith.constant 0 : i32
    %c0_i32_0 = arith.constant 0 : i32
    return %arg0, %arg1, %c0_i32 : i32, i32, i32
  }
  func.func @transform_1(%arg0: i32, %arg1: i32) -> (i32, i32, i32) {
    %c0_i32 = arith.constant 0 : i32
    %c0_i32_0 = arith.constant 0 : i32
    %c0_i32_1 = arith.constant 0 : i32
    return %arg0, %c0_i32, %c0_i32_0 : i32, i32, i32
  }
  func.func @transform_2(%arg0: i32, %arg1: i32) -> (i32, i32, i32) {
    %c0_i32 = arith.constant 0 : i32
    %c0_i32_0 = arith.constant 0 : i32
    %c0_i32_1 = arith.constant 0 : i32
    return %arg0, %c0_i32, %c0_i32_0 : i32, i32, i32
  }
  func.func @transform_3(%arg0: i32, %arg1: i32) -> (i32, i32, i32) {
    %c0_i32 = arith.constant 0 : i32
    %c0_i32_0 = arith.constant 0 : i32
    return %arg0, %arg1, %c0_i32 : i32, i32, i32
  }
}

module attributes {stable_mosaic.version = 11 : i64} {
  func.func @_dyn_conv3x3_silu_kernel(%arg0: i32, %arg1: memref<1x342x32xf32, #tpu.memory_space<vmem>>, %arg2: memref<1x9x32x32xf32, #tpu.memory_space<vmem>>, %arg3: memref<1x1x32xf32, #tpu.memory_space<vmem>>, %arg4: memref<1x288x32xf32, #tpu.memory_space<vmem>>) attributes {dimension_semantics = [#tpu.dimension_semantics<parallel>], iteration_bounds = array<i64: 2>, scalar_prefetch = 0 : i64, scratch_operands = 0 : i64, tpu.core_type = #tpu.core_type<tc>, window_params = [{transform_indices = @transform_0, window_bounds = array<i64: 1, 342, 32>}, {transform_indices = @transform_1, window_bounds = array<i64: 1, 9, 32, 32>}, {transform_indices = @transform_2, window_bounds = array<i64: 1, 1, 32>}, {transform_indices = @transform_3, window_bounds = array<i64: 1, 288, 32>}]} {
    %cst = arith.constant 0.000000e+00 : f32
    %0 = vector.broadcast %cst : f32 to vector<288x32xf32>
    %c0 = arith.constant 0 : index
    %c0_0 = arith.constant 0 : index
    %c0_1 = arith.constant 0 : index
    %1 = vector.load %arg1[%c0, %c0_0, %c0_1] : memref<1x342x32xf32, #tpu.memory_space<vmem>>, vector<1x288x32xf32>
    %2 = vector.shape_cast %1 : vector<1x288x32xf32> to vector<288x32xf32>
    %c0_2 = arith.constant 0 : index
    %c0_3 = arith.constant 0 : index
    %c0_4 = arith.constant 0 : index
    %c0_5 = arith.constant 0 : index
    %3 = vector.load %arg2[%c0_2, %c0_3, %c0_4, %c0_5] : memref<1x9x32x32xf32, #tpu.memory_space<vmem>>, vector<1x1x32x32xf32>
    %4 = vector.shape_cast %3 : vector<1x1x32x32xf32> to vector<32x32xf32>
    %cst_6 = arith.constant dense<0.000000e+00> : vector<288x32xf32>
    %5 = tpu.matmul %2, %4, %cst_6 {dimension_numbers = #tpu.dot_dimension_numbers<[1], [0], [0], [1], [0, 0, 1, 1], [], []>} : vector<288x32xf32>, vector<32x32xf32>, vector<288x32xf32> -> vector<288x32xf32>
    %6 = arith.addf %0, %5 : vector<288x32xf32>
    %c0_7 = arith.constant 0 : index
    %c1 = arith.constant 1 : index
    %c0_8 = arith.constant 0 : index
    %7 = vector.load %arg1[%c0_7, %c1, %c0_8] : memref<1x342x32xf32, #tpu.memory_space<vmem>>, vector<1x288x32xf32>
    %8 = vector.shape_cast %7 : vector<1x288x32xf32> to vector<288x32xf32>
    %c0_9 = arith.constant 0 : index
    %c1_10 = arith.constant 1 : index
    %c0_11 = arith.constant 0 : index
    %c0_12 = arith.constant 0 : index
    %9 = vector.load %arg2[%c0_9, %c1_10, %c0_11, %c0_12] : memref<1x9x32x32xf32, #tpu.memory_space<vmem>>, vector<1x1x32x32xf32>
    %10 = vector.shape_cast %9 : vector<1x1x32x32xf32> to vector<32x32xf32>
    %cst_13 = arith.constant dense<0.000000e+00> : vector<288x32xf32>
    %11 = tpu.matmul %8, %10, %cst_13 {dimension_numbers = #tpu.dot_dimension_numbers<[1], [0], [0], [1], [0, 0, 1, 1], [], []>} : vector<288x32xf32>, vector<32x32xf32>, vector<288x32xf32> -> vector<288x32xf32>
    %12 = arith.addf %6, %11 : vector<288x32xf32>
    %c0_14 = arith.constant 0 : index
    %c2 = arith.constant 2 : index
    %c0_15 = arith.constant 0 : index
    %13 = vector.load %arg1[%c0_14, %c2, %c0_15] : memref<1x342x32xf32, #tpu.memory_space<vmem>>, vector<1x288x32xf32>
    %14 = vector.shape_cast %13 : vector<1x288x32xf32> to vector<288x32xf32>
    %c0_16 = arith.constant 0 : index
    %c2_17 = arith.constant 2 : index
    %c0_18 = arith.constant 0 : index
    %c0_19 = arith.constant 0 : index
    %15 = vector.load %arg2[%c0_16, %c2_17, %c0_18, %c0_19] : memref<1x9x32x32xf32, #tpu.memory_space<vmem>>, vector<1x1x32x32xf32>
    %16 = vector.shape_cast %15 : vector<1x1x32x32xf32> to vector<32x32xf32>
    %cst_20 = arith.constant dense<0.000000e+00> : vector<288x32xf32>
    %17 = tpu.matmul %14, %16, %cst_20 {dimension_numbers = #tpu.dot_dimension_numbers<[1], [0], [0], [1], [0, 0, 1, 1], [], []>} : vector<288x32xf32>, vector<32x32xf32>, vector<288x32xf32> -> vector<288x32xf32>
    %18 = arith.addf %12, %17 : vector<288x32xf32>
    %c0_21 = arith.constant 0 : index
    %c18 = arith.constant 18 : index
    %c0_22 = arith.constant 0 : index
    %19 = vector.load %arg1[%c0_21, %c18, %c0_22] : memref<1x342x32xf32, #tpu.memory_space<vmem>>, vector<1x288x32xf32>
    %20 = vector.shape_cast %19 : vector<1x288x32xf32> to vector<288x32xf32>
    %c0_23 = arith.constant 0 : index
    %c3 = arith.constant 3 : index
    %c0_24 = arith.constant 0 : index
    %c0_25 = arith.constant 0 : index
    %21 = vector.load %arg2[%c0_23, %c3, %c0_24, %c0_25] : memref<1x9x32x32xf32, #tpu.memory_space<vmem>>, vector<1x1x32x32xf32>
    %22 = vector.shape_cast %21 : vector<1x1x32x32xf32> to vector<32x32xf32>
    %cst_26 = arith.constant dense<0.000000e+00> : vector<288x32xf32>
    %23 = tpu.matmul %20, %22, %cst_26 {dimension_numbers = #tpu.dot_dimension_numbers<[1], [0], [0], [1], [0, 0, 1, 1], [], []>} : vector<288x32xf32>, vector<32x32xf32>, vector<288x32xf32> -> vector<288x32xf32>
    %24 = arith.addf %18, %23 : vector<288x32xf32>
    %c0_27 = arith.constant 0 : index
    %c19 = arith.constant 19 : index
    %c0_28 = arith.constant 0 : index
    %25 = vector.load %arg1[%c0_27, %c19, %c0_28] : memref<1x342x32xf32, #tpu.memory_space<vmem>>, vector<1x288x32xf32>
    %26 = vector.shape_cast %25 : vector<1x288x32xf32> to vector<288x32xf32>
    %c0_29 = arith.constant 0 : index
    %c4 = arith.constant 4 : index
    %c0_30 = arith.constant 0 : index
    %c0_31 = arith.constant 0 : index
    %27 = vector.load %arg2[%c0_29, %c4, %c0_30, %c0_31] : memref<1x9x32x32xf32, #tpu.memory_space<vmem>>, vector<1x1x32x32xf32>
    %28 = vector.shape_cast %27 : vector<1x1x32x32xf32> to vector<32x32xf32>
    %cst_32 = arith.constant dense<0.000000e+00> : vector<288x32xf32>
    %29 = tpu.matmul %26, %28, %cst_32 {dimension_numbers = #tpu.dot_dimension_numbers<[1], [0], [0], [1], [0, 0, 1, 1], [], []>} : vector<288x32xf32>, vector<32x32xf32>, vector<288x32xf32> -> vector<288x32xf32>
    %30 = arith.addf %24, %29 : vector<288x32xf32>
    %c0_33 = arith.constant 0 : index
    %c20 = arith.constant 20 : index
    %c0_34 = arith.constant 0 : index
    %31 = vector.load %arg1[%c0_33, %c20, %c0_34] : memref<1x342x32xf32, #tpu.memory_space<vmem>>, vector<1x288x32xf32>
    %32 = vector.shape_cast %31 : vector<1x288x32xf32> to vector<288x32xf32>
    %c0_35 = arith.constant 0 : index
    %c5 = arith.constant 5 : index
    %c0_36 = arith.constant 0 : index
    %c0_37 = arith.constant 0 : index
    %33 = vector.load %arg2[%c0_35, %c5, %c0_36, %c0_37] : memref<1x9x32x32xf32, #tpu.memory_space<vmem>>, vector<1x1x32x32xf32>
    %34 = vector.shape_cast %33 : vector<1x1x32x32xf32> to vector<32x32xf32>
    %cst_38 = arith.constant dense<0.000000e+00> : vector<288x32xf32>
    %35 = tpu.matmul %32, %34, %cst_38 {dimension_numbers = #tpu.dot_dimension_numbers<[1], [0], [0], [1], [0, 0, 1, 1], [], []>} : vector<288x32xf32>, vector<32x32xf32>, vector<288x32xf32> -> vector<288x32xf32>
    %36 = arith.addf %30, %35 : vector<288x32xf32>
    %c0_39 = arith.constant 0 : index
    %c36 = arith.constant 36 : index
    %c0_40 = arith.constant 0 : index
    %37 = vector.load %arg1[%c0_39, %c36, %c0_40] : memref<1x342x32xf32, #tpu.memory_space<vmem>>, vector<1x288x32xf32>
    %38 = vector.shape_cast %37 : vector<1x288x32xf32> to vector<288x32xf32>
    %c0_41 = arith.constant 0 : index
    %c6 = arith.constant 6 : index
    %c0_42 = arith.constant 0 : index
    %c0_43 = arith.constant 0 : index
    %39 = vector.load %arg2[%c0_41, %c6, %c0_42, %c0_43] : memref<1x9x32x32xf32, #tpu.memory_space<vmem>>, vector<1x1x32x32xf32>
    %40 = vector.shape_cast %39 : vector<1x1x32x32xf32> to vector<32x32xf32>
    %cst_44 = arith.constant dense<0.000000e+00> : vector<288x32xf32>
    %41 = tpu.matmul %38, %40, %cst_44 {dimension_numbers = #tpu.dot_dimension_numbers<[1], [0], [0], [1], [0, 0, 1, 1], [], []>} : vector<288x32xf32>, vector<32x32xf32>, vector<288x32xf32> -> vector<288x32xf32>
    %42 = arith.addf %36, %41 : vector<288x32xf32>
    %c0_45 = arith.constant 0 : index
    %c37 = arith.constant 37 : index
    %c0_46 = arith.constant 0 : index
    %43 = vector.load %arg1[%c0_45, %c37, %c0_46] : memref<1x342x32xf32, #tpu.memory_space<vmem>>, vector<1x288x32xf32>
    %44 = vector.shape_cast %43 : vector<1x288x32xf32> to vector<288x32xf32>
    %c0_47 = arith.constant 0 : index
    %c7 = arith.constant 7 : index
    %c0_48 = arith.constant 0 : index
    %c0_49 = arith.constant 0 : index
    %45 = vector.load %arg2[%c0_47, %c7, %c0_48, %c0_49] : memref<1x9x32x32xf32, #tpu.memory_space<vmem>>, vector<1x1x32x32xf32>
    %46 = vector.shape_cast %45 : vector<1x1x32x32xf32> to vector<32x32xf32>
    %cst_50 = arith.constant dense<0.000000e+00> : vector<288x32xf32>
    %47 = tpu.matmul %44, %46, %cst_50 {dimension_numbers = #tpu.dot_dimension_numbers<[1], [0], [0], [1], [0, 0, 1, 1], [], []>} : vector<288x32xf32>, vector<32x32xf32>, vector<288x32xf32> -> vector<288x32xf32>
    %48 = arith.addf %42, %47 : vector<288x32xf32>
    %c0_51 = arith.constant 0 : index
    %c38 = arith.constant 38 : index
    %c0_52 = arith.constant 0 : index
    %49 = vector.load %arg1[%c0_51, %c38, %c0_52] : memref<1x342x32xf32, #tpu.memory_space<vmem>>, vector<1x288x32xf32>
    %50 = vector.shape_cast %49 : vector<1x288x32xf32> to vector<288x32xf32>
    %c0_53 = arith.constant 0 : index
    %c8 = arith.constant 8 : index
    %c0_54 = arith.constant 0 : index
    %c0_55 = arith.constant 0 : index
    %51 = vector.load %arg2[%c0_53, %c8, %c0_54, %c0_55] : memref<1x9x32x32xf32, #tpu.memory_space<vmem>>, vector<1x1x32x32xf32>
    %52 = vector.shape_cast %51 : vector<1x1x32x32xf32> to vector<32x32xf32>
    %cst_56 = arith.constant dense<0.000000e+00> : vector<288x32xf32>
    %53 = tpu.matmul %50, %52, %cst_56 {dimension_numbers = #tpu.dot_dimension_numbers<[1], [0], [0], [1], [0, 0, 1, 1], [], []>} : vector<288x32xf32>, vector<32x32xf32>, vector<288x32xf32> -> vector<288x32xf32>
    %54 = arith.addf %48, %53 : vector<288x32xf32>
    %c0_57 = arith.constant 0 : index
    %c0_58 = arith.constant 0 : index
    %c0_59 = arith.constant 0 : index
    %55 = vector.load %arg3[%c0_57, %c0_58, %c0_59] : memref<1x1x32xf32, #tpu.memory_space<vmem>>, vector<1x1x32xf32>
    %56 = vector.shape_cast %55 : vector<1x1x32xf32> to vector<1x32xf32>
    %57 = vector.broadcast %56 : vector<1x32xf32> to vector<288x32xf32>
    %58 = arith.addf %54, %57 : vector<288x32xf32>
    %59 = arith.negf %58 : vector<288x32xf32>
    %60 = math.exp %59 : vector<288x32xf32>
    %cst_60 = arith.constant 1.000000e+00 : f32
    %61 = vector.broadcast %cst_60 : f32 to vector<288x32xf32>
    %62 = arith.addf %61, %60 : vector<288x32xf32>
    %63 = arith.divf %61, %62 : vector<288x32xf32>
    %64 = arith.mulf %58, %63 : vector<288x32xf32>
    %c0_61 = arith.constant 0 : index
    %c0_62 = arith.constant 0 : index
    %c0_63 = arith.constant 0 : index
    %65 = vector.load %arg4[%c0_61, %c0_62, %c0_63] : memref<1x288x32xf32, #tpu.memory_space<vmem>>, vector<1x288x32xf32>
    %66 = vector.shape_cast %65 : vector<1x288x32xf32> to vector<288x32xf32>
    %67 = vector.shape_cast %64 : vector<288x32xf32> to vector<1x288x32xf32>
    tpu.vector_store %arg4[%c0_61, %c0_62, %c0_63], %67 {strides = array<i32>} : memref<1x288x32xf32, #tpu.memory_space<vmem>>, vector<1x288x32xf32>,
    return
  }
  func.func @transform_0(%arg0: i32) -> (i32, i32, i32) {
    %c0_i32 = arith.constant 0 : i32
    %c0_i32_0 = arith.constant 0 : i32
    %c0_i32_1 = arith.constant 0 : i32
    return %arg0, %c0_i32, %c0_i32_0 : i32, i32, i32
  }
  func.func @transform_1(%arg0: i32) -> (i32, i32, i32, i32) {
    %c0_i32 = arith.constant 0 : i32
    %c0_i32_0 = arith.constant 0 : i32
    %c0_i32_1 = arith.constant 0 : i32
    %c0_i32_2 = arith.constant 0 : i32
    return %arg0, %c0_i32, %c0_i32_0, %c0_i32_1 : i32, i32, i32, i32
  }
  func.func @transform_2(%arg0: i32) -> (i32, i32, i32) {
    %c0_i32 = arith.constant 0 : i32
    %c0_i32_0 = arith.constant 0 : i32
    %c0_i32_1 = arith.constant 0 : i32
    return %arg0, %c0_i32, %c0_i32_0 : i32, i32, i32
  }
  func.func @transform_3(%arg0: i32) -> (i32, i32, i32) {
    %c0_i32 = arith.constant 0 : i32
    %c0_i32_0 = arith.constant 0 : i32
    %c0_i32_1 = arith.constant 0 : i32
    return %arg0, %c0_i32, %c0_i32_0 : i32, i32, i32
  }
}

module attributes {stable_mosaic.version = 11 : i64} {
  func.func @_dyn_dense_concat_silu_kernel(%arg0: i32, %arg1: i32, %arg2: memref<1x256x64xf32, #tpu.memory_space<vmem>>, %arg3: memref<1x256x32xf32, #tpu.memory_space<vmem>>, %arg4: memref<1x96x64xf32, #tpu.memory_space<vmem>>, %arg5: memref<1x1x64xf32, #tpu.memory_space<vmem>>, %arg6: memref<1x256x64xf32, #tpu.memory_space<vmem>>) attributes {dimension_semantics = [#tpu.dimension_semantics<parallel>, #tpu.dimension_semantics<parallel>], iteration_bounds = array<i64: 2, 1>, scalar_prefetch = 0 : i64, scratch_operands = 0 : i64, tpu.core_type = #tpu.core_type<tc>, window_params = [{transform_indices = @transform_0, window_bounds = array<i64: 1, 256, 64>}, {transform_indices = @transform_1, window_bounds = array<i64: 1, 256, 32>}, {transform_indices = @transform_2, window_bounds = array<i64: 1, 96, 64>}, {transform_indices = @transform_3, window_bounds = array<i64: 1, 1, 64>}, {transform_indices = @transform_4, window_bounds = array<i64: 1, 256, 64>}]} {
    %c0 = arith.constant 0 : index
    %c0_0 = arith.constant 0 : index
    %c0_1 = arith.constant 0 : index
    %0 = vector.load %arg2[%c0, %c0_0, %c0_1] : memref<1x256x64xf32, #tpu.memory_space<vmem>>, vector<1x256x64xf32>
    %1 = vector.shape_cast %0 : vector<1x256x64xf32> to vector<256x64xf32>
    %c0_2 = arith.constant 0 : index
    %c0_3 = arith.constant 0 : index
    %c0_4 = arith.constant 0 : index
    %2 = vector.load %arg4[%c0_2, %c0_3, %c0_4] : memref<1x96x64xf32, #tpu.memory_space<vmem>>, vector<1x64x64xf32>
    %3 = vector.shape_cast %2 : vector<1x64x64xf32> to vector<64x64xf32>
    %cst = arith.constant dense<0.000000e+00> : vector<256x64xf32>
    %4 = tpu.matmul %1, %3, %cst {dimension_numbers = #tpu.dot_dimension_numbers<[1], [0], [0], [1], [0, 0, 1, 1], [], []>} : vector<256x64xf32>, vector<64x64xf32>, vector<256x64xf32> -> vector<256x64xf32>
    %c0_5 = arith.constant 0 : index
    %c0_6 = arith.constant 0 : index
    %c0_7 = arith.constant 0 : index
    %5 = vector.load %arg3[%c0_5, %c0_6, %c0_7] : memref<1x256x32xf32, #tpu.memory_space<vmem>>, vector<1x256x32xf32>
    %6 = vector.shape_cast %5 : vector<1x256x32xf32> to vector<256x32xf32>
    %c0_8 = arith.constant 0 : index
    %c64 = arith.constant 64 : index
    %c0_9 = arith.constant 0 : index
    %7 = vector.load %arg4[%c0_8, %c64, %c0_9] : memref<1x96x64xf32, #tpu.memory_space<vmem>>, vector<1x32x64xf32>
    %8 = vector.shape_cast %7 : vector<1x32x64xf32> to vector<32x64xf32>
    %cst_10 = arith.constant dense<0.000000e+00> : vector<256x64xf32>
    %9 = tpu.matmul %6, %8, %cst_10 {dimension_numbers = #tpu.dot_dimension_numbers<[1], [0], [0], [1], [0, 0, 1, 1], [], []>} : vector<256x32xf32>, vector<32x64xf32>, vector<256x64xf32> -> vector<256x64xf32>
    %10 = arith.addf %4, %9 : vector<256x64xf32>
    %c0_11 = arith.constant 0 : index
    %c0_12 = arith.constant 0 : index
    %c0_13 = arith.constant 0 : index
    %11 = vector.load %arg5[%c0_11, %c0_12, %c0_13] : memref<1x1x64xf32, #tpu.memory_space<vmem>>, vector<1x1x64xf32>
    %12 = vector.shape_cast %11 : vector<1x1x64xf32> to vector<1x64xf32>
    %13 = vector.broadcast %12 : vector<1x64xf32> to vector<256x64xf32>
    %14 = arith.addf %10, %13 : vector<256x64xf32>
    %15 = arith.negf %14 : vector<256x64xf32>
    %16 = math.exp %15 : vector<256x64xf32>
    %cst_14 = arith.constant 1.000000e+00 : f32
    %17 = vector.broadcast %cst_14 : f32 to vector<256x64xf32>
    %18 = arith.addf %17, %16 : vector<256x64xf32>
    %19 = arith.divf %17, %18 : vector<256x64xf32>
    %20 = arith.mulf %14, %19 : vector<256x64xf32>
    %c0_15 = arith.constant 0 : index
    %c0_16 = arith.constant 0 : index
    %c0_17 = arith.constant 0 : index
    %21 = vector.load %arg6[%c0_15, %c0_16, %c0_17] : memref<1x256x64xf32, #tpu.memory_space<vmem>>, vector<1x256x64xf32>
    %22 = vector.shape_cast %21 : vector<1x256x64xf32> to vector<256x64xf32>
    %23 = vector.shape_cast %20 : vector<256x64xf32> to vector<1x256x64xf32>
    tpu.vector_store %arg6[%c0_15, %c0_16, %c0_17], %23 {strides = array<i32>} : memref<1x256x64xf32, #tpu.memory_space<vmem>>, vector<1x256x64xf32>,
    return
  }
  func.func @transform_0(%arg0: i32, %arg1: i32) -> (i32, i32, i32) {
    %c0_i32 = arith.constant 0 : i32
    %c0_i32_0 = arith.constant 0 : i32
    return %arg0, %arg1, %c0_i32 : i32, i32, i32
  }
  func.func @transform_1(%arg0: i32, %arg1: i32) -> (i32, i32, i32) {
    %c0_i32 = arith.constant 0 : i32
    %c0_i32_0 = arith.constant 0 : i32
    return %arg0, %arg1, %c0_i32 : i32, i32, i32
  }
  func.func @transform_2(%arg0: i32, %arg1: i32) -> (i32, i32, i32) {
    %c0_i32 = arith.constant 0 : i32
    %c0_i32_0 = arith.constant 0 : i32
    %c0_i32_1 = arith.constant 0 : i32
    return %arg0, %c0_i32, %c0_i32_0 : i32, i32, i32
  }
  func.func @transform_3(%arg0: i32, %arg1: i32) -> (i32, i32, i32) {
    %c0_i32 = arith.constant 0 : i32
    %c0_i32_0 = arith.constant 0 : i32
    %c0_i32_1 = arith.constant 0 : i32
    return %arg0, %c0_i32, %c0_i32_0 : i32, i32, i32
  }
  func.func @transform_4(%arg0: i32, %arg1: i32) -> (i32, i32, i32) {
    %c0_i32 = arith.constant 0 : i32
    %c0_i32_0 = arith.constant 0 : i32
    return %arg0, %arg1, %c0_i32 : i32, i32, i32
  }
}

</mosaic_0001>

<llo_original>
// kernel: _lambda_.4
$region0: #{_lambda_.4}
  #allocation0 [shape = 'u32[]', space=smem, size = 0x4, offset = 0x4, fixed_abs, tag = 'smem constant byte address 0x4 - core index']
  #allocation1 [shape = 'u32[72,128]{1,0:T(1,128)}', space=vmem, size = 0x9000, scoped, tag = 'internal scratch']
  %s0 = inlined_call_operand.hbm [shape: f32[2,256,64], index: 0, kind: input, shape index: {}]
  %s1 = inlined_call_operand.vmem [shape: f32[2,64,64], index: 1, kind: input, shape index: {}]
  %s2 = inlined_call_operand.vmem [shape: f32[2,1,64], index: 2, kind: input, shape index: {}]
  %s3 = inlined_call_operand.vmem [shape: f32[2,256,64], index: 3, kind: output, shape index: {}]
  %s4 = sld [smem:[#allocation0]]
  $region49: #{_lambda_.4} parent=0
    _
  %s6 = ssub.s32 1, %s4
  %s7 = scalar_select 0, %s6, %s4
  $region1: #{_lambda_.4} parent=0
    #allocation2 [shape = 'u8[262144]{0}', space=vmem, size = 0x40000, scoped, tag = 'input window, operand 0']
    #allocation3 [shape = 's32[2]{0}', space=sflag, size = 0x8, scoped, tag = 'scoped memory for _lambda_.4']
    %8 = vsyncpa [#allocation3], 0
    %s9 = scalar_lea.sflag [#allocation3], 1
    %10 = vsyncpa %s9, 0
    loop: start=0, step=1, limit=4
    $region2: #{_lambda_.4} parent=1 // loop_pre_header
      _
    $region3: #{_lambda_.4} parent=1 // loop_header
      %s12 = sphi 0, %s16
      %p13 = scmp.ge.s32.totalorder %s12, 4
      %s19 = sphi 0, %s31
      %s20 = sphi 0, %s27
      %s21 = sphi 0, %s19
      %s22 = sphi 0, %s20
      %s23 = sphi 0, %s21
      %s24 = sphi 0, %s22
      %s36 = sphi 0, %s38
      %s39 = sphi 0, %s36
      %s40 = sphi 0, %s39
      %s56 = sphi 0, %s40
      %s62 = sphi 0, %s64
      %s65 = sphi 0, %s62
      %s66 = sphi 0, %s65
      %s82 = sphi 0, %s66
      %s88 = sphi 0, %s90
      %s91 = sphi 0, %s88
      %s92 = sphi 0, %s91
      %s108 = sphi 0, %s92
      %s116 = sphi 0, %s118
      %s119 = sphi 0, %s116
      %s120 = sphi 0, %s119
      %s136 = sphi 0, %s120
    $region4: #{_lambda_.4} parent=1 // loop_header_branch
      %15 = sbr.rel (%p13) target = $region8
    $region5: #{_lambda_.4} parent=1 // loop_body
      %s17 = ssub.s32 %s12, 1
      %s18 = ssub.s32 %s12, 2
      %s25 = sadd.s32 1, %s20
      %p26 = scmp.ge.s32.totalorder %s25, 1
      %s27 = scalar_select %p26, 0, %s25
      %s28 = sadd.s32 1, %s19
      %s29 = scalar_select %p26, %s28, %s19
      %p30 = scmp.ge.s32.totalorder %s29, 2
      %s31 = scalar_select %p30, 0, %s29
      %s32 = ssub.s32 %s19, %s31
      %s33 = ssub.s32 %s20, %s27
      %s34 = sor.u32 %s32, %s33
      %p35 = scmp.eq.s32.totalorder %s34, 0
      %s37 = sadd.s32 %s36, 1
      %s38 = scalar_select %p35, %s36, %s37
      %p41 = pneg %p35
      %p42 = scmp.eq.s32.totalorder %s12, 1
      %p43 = por %p41, %p42
      %p44 = scmp.ne.s32.totalorder %s36, %s39
      %p45 = scmp.eq.s32.totalorder %s12, 0
      %p46 = por %p44, %p45
      %p47 = scmp.ne.s32.totalorder %s36, %s39
      %p48 = scmp.eq.s32.totalorder %s17, 1
      %p49 = por %p47, %p48
      %p50 = scmp.ne.s32.totalorder %s39, %s40
      %p51 = scmp.eq.s32.totalorder %s17, 0
      %p52 = por %p50, %p51
      %p53 = scmp.ne.s32.totalorder %s39, %s40
      %p54 = scmp.eq.s32.totalorder %s18, 1
      %p55 = por %p53, %p54
      %p57 = scmp.ne.s32.totalorder %s40, %s56
      %p58 = scmp.eq.s32.totalorder %s18, 0
      %p59 = por %p57, %p58
      %s60 = ssub.s32 %s19, %s31
      %p61 = scmp.eq.s32.totalorder %s60, 0
      %s63 = sadd.s32 %s62, 1
      %s64 = scalar_select %p61, %s62, %s63
      %p67 = pneg %p61
      %p68 = scmp.eq.s32.totalorder %s12, 1
      %p69 = por %p67, %p68
      %p70 = scmp.ne.s32.totalorder %s62, %s65
      %p71 = scmp.eq.s32.totalorder %s12, 0
      %p72 = por %p70, %p71
      %p73 = scmp.ne.s32.totalorder %s62, %s65
      %p74 = scmp.eq.s32.totalorder %s17, 1
      %p75 = por %p73, %p74
      %p76 = scmp.ne.s32.totalorder %s65, %s66
      %p77 = scmp.eq.s32.totalorder %s17, 0
      %p78 = por %p76, %p77
      %p79 = scmp.ne.s32.totalorder %s65, %s66
      %p80 = scmp.eq.s32.totalorder %s18, 1
      %p81 = por %p79, %p80
      %p83 = scmp.ne.s32.totalorder %s66, %s82
      %p84 = scmp.eq.s32.totalorder %s18, 0
      %p85 = por %p83, %p84
      %s86 = ssub.s32 %s19, %s31
      %p87 = scmp.eq.s32.totalorder %s86, 0
      %s89 = sadd.s32 %s88, 1
      %s90 = scalar_select %p87, %s88, %s89
      %p93 = pneg %p87
      %p94 = scmp.eq.s32.totalorder %s12, 1
      %p95 = por %p93, %p94
      %p96 = scmp.ne.s32.totalorder %s88, %s91
      %p97 = scmp.eq.s32.totalorder %s12, 0
      %p98 = por %p96, %p97
      %p99 = scmp.ne.s32.totalorder %s88, %s91
      %p100 = scmp.eq.s32.totalorder %s17, 1
      %p101 = por %p99, %p100
      %p102 = scmp.ne.s32.totalorder %s91, %s92
      %p103 = scmp.eq.s32.totalorder %s17, 0
      %p104 = por %p102, %p103
      %p105 = scmp.ne.s32.totalorder %s91, %s92
      %p106 = scmp.eq.s32.totalorder %s18, 1
      %p107 = por %p105, %p106
      %p109 = scmp.ne.s32.totalorder %s92, %s108
      %p110 = scmp.eq.s32.totalorder %s18, 0
      %p111 = por %p109, %p110
      %s112 = ssub.s32 %s19, %s31
      %s113 = ssub.s32 %s20, %s27
      %s114 = sor.u32 %s112, %s113
      %p115 = scmp.eq.s32.totalorder %s114, 0
      %s117 = sadd.s32 %s116, 1
      %s118 = scalar_select %p115, %s116, %s117
      %p121 = pneg %p115
      %p122 = scmp.eq.s32.totalorder %s12, 1
      %p123 = por %p121, %p122
      %p124 = scmp.ne.s32.totalorder %s116, %s119
      %p125 = scmp.eq.s32.totalorder %s12, 0
      %p126 = por %p124, %p125
      %p127 = scmp.ne.s32.totalorder %s116, %s119
      %p128 = scmp.eq.s32.totalorder %s17, 1
      %p129 = por %p127, %p128
      %p130 = scmp.ne.s32.totalorder %s119, %s120
      %p131 = scmp.eq.s32.totalorder %s17, 0
      %p132 = por %p130, %p131
      %p133 = scmp.ne.s32.totalorder %s119, %s120
      %p134 = scmp.eq.s32.totalorder %s18, 1
      %p135 = por %p133, %p134
      %p137 = scmp.ne.s32.totalorder %s120, %s136
      %p138 = scmp.eq.s32.totalorder %s18, 0
      %p139 = por %p137, %p138
      %p140 = scmp.le.s32.totalorder 1, %s12
      %p141 = scmp.lt.s32.totalorder %s12, 3
      %p142 = pnand %p140, %p141
      %p143 = pneg %p142
      // Predicated region
      $region9: #{_lambda_.4} parent=5 // pred_check
        _
      $region10: #{_lambda_.4} parent=5 // pred_check_branch
        %145 = sbr.rel (%p142) target = $region12
      $region11: #{_lambda_.4} parent=5 // pred_region
        %s146 = ssub.s32 %s12, 1
      $region12: #{_lambda_.4} parent=5 // pred_fallthru
        _
      %p147 = scmp.lt.s32.totalorder %s12, 2
      // Predicated region
      $region13: #{_lambda_.4} parent=5 // pred_check
        %p148 = pneg %p147
      $region14: #{_lambda_.4} parent=5 // pred_check_branch
        %150 = sbr.rel (%p148) target = $region16
      $region15: #{_lambda_.4} parent=5 // pred_region
        // Predicated region
        $region17: #{_lambda_.4} parent=15 // pred_check
          %p151 = pneg %p46
        $region18: #{_lambda_.4} parent=15 // pred_check_branch
          %153 = sbr.rel (%p151) target = $region20
        $region19: #{_lambda_.4} parent=15 // pred_region
          %s154 = sand.u32 %s36, 1
          %s155 = scalar_lea.sflag [#allocation3], %s154
          %s156 = sand.u32 %s36, 1
          %s157 = smul.addr %s156, 256
          %s158 = scalar_lea.vmem [#allocation2], %s157
          %s159 = smul.u32 32, %s20
          %161 = vsyncadd %s155, 0
          %s162 = smul.addr %s19, 32
          %s163 = sadd.s32 %s159, %s162
          %s164 = smul.addr %s163, 8
          %s165 = scalar_lea.hbm %s0, %s164
          %s166 = sshll.u32 %s165, 4
          %s167 = int_to_ptr.hbm [resolvable:$true] %s166
          %s168 = sshll.u32 %s158, 4
          %s169 = int_to_ptr.vmem [resolvable:$true] %s168
          %174 = dma.hbm_to_vmem [thread:$0]  %s167, 4096, %s169, %s155, 128, 128, 8
        $region20: #{_lambda_.4} parent=15 // pred_fallthru
          _
        // Predicated region
        $region21: #{_lambda_.4} parent=15 // pred_check
          %p175 = pneg %p72
        $region22: #{_lambda_.4} parent=15 // pred_check_branch
          %177 = sbr.rel (%p175) target = $region24
        $region23: #{_lambda_.4} parent=15 // pred_region
          %p178 = scmp.lt.s32.totalorder %s19, 1
          %s179 = scalar_select %p178, %s19, 1
          %s180 = smul.addr %s179, 8
          %s181 = smul.addr %s180, 8
          %s182 = scalar_lea.vmem %s1, %s181
        $region24: #{_lambda_.4} parent=15 // pred_fallthru
          _
        // Predicated region
        $region25: #{_lambda_.4} parent=15 // pred_check
          %p183 = pneg %p98
        $region26: #{_lambda_.4} parent=15 // pred_check_branch
          %185 = sbr.rel (%p183) target = $region28
        $region27: #{_lambda_.4} parent=15 // pred_region
          %p186 = scmp.lt.s32.totalorder %s19, 1
          %s187 = scalar_select %p186, %s19, 1
          %s188 = scalar_lea.vmem %s2, %s187
        $region28: #{_lambda_.4} parent=15 // pred_fallthru
          _
      $region16: #{_lambda_.4} parent=5 // pred_fallthru
        _
      %p189 = scmp.le.s32.totalorder 1, %s12
      %p190 = scmp.lt.s32.totalorder %s12, 3
      %p191 = pnand %p189, %p190
      %p192 = pneg %p191
      // Predicated region
      $region29: #{_lambda_.4} parent=5 // pred_check
        _
      $region30: #{_lambda_.4} parent=5 // pred_check_branch
        %194 = sbr.rel (%p191) target = $region32
      $region31: #{_lambda_.4} parent=5 // pred_region
        %s195 = ssub.s32 %s12, 1
        %s196 = sand.u32 %s39, 1
        %s197 = scalar_lea.sflag [#allocation3], %s196
        %s198 = sand.u32 %s39, 1
        %s199 = smul.addr %s198, 256
        %s200 = scalar_lea.vmem [#allocation2], %s199
        // Predicated region
        $region33: #{_lambda_.4} parent=31 // pred_check
          %p201 = pneg %p52
        $region34: #{_lambda_.4} parent=31 // pred_check_branch
          %203 = sbr.rel (%p201) target = $region36
        $region35: #{_lambda_.4} parent=31 // pred_region
          %205 = dma.done %s197, 4096
        $region36: #{_lambda_.4} parent=31 // pred_fallthru
          _
        %s206 = sand.u32 %s39, 1
        %s207 = scalar_lea.sflag [#allocation3], %s206
        %s208 = sand.u32 %s39, 1
        %s209 = smul.addr %s208, 256
        %s210 = scalar_lea.vmem [#allocation2], %s209
        %p211 = pneg %p52
        %p212 = pneg %p49
        %p213 = scmp.lt.s32.totalorder %s21, 1
        %s214 = scalar_select %p213, %s21, 1
        %s215 = smul.addr %s214, 8
        %s216 = smul.addr %s215, 8
        %s217 = scalar_lea.vmem %s1, %s216
        %p218 = pneg %p78
        %p219 = pneg %p75
        %p220 = scmp.lt.s32.totalorder %s21, 1
        %s221 = scalar_select %p220, %s21, 1
        %s222 = scalar_lea.vmem %s2, %s221
        %p223 = pneg %p104
        %p224 = pneg %p101
        %p225 = pneg %p132
        %p226 = pneg %p129
        %s227 = smul.u32 32, %s22
        %p228 = scmp.lt.s32.totalorder %s21, 1
        %s229 = scalar_select %p228, %s21, 1
        %p230 = scmp.lt.s32.totalorder %s227, 31
        %s231 = scalar_select %p230, %s227, 31
        %s232 = smul.addr %s229, 32
        %s233 = sadd.s32 %s231, %s232
        %s234 = smul.addr %s233, 8
        %s235 = scalar_lea.vmem %s3, %s234
        %s236 = smul.u32 32, %s22
        %p237 = scmp.lt.s32.totalorder %s21, 1
        %s238 = scalar_select %p237, %s21, 1
        %s239 = smul.addr %s238, 8
        %s240 = smul.addr %s239, 8
        %s241 = scalar_lea.vmem %s1, %s240
        %p242 = scmp.lt.s32.totalorder %s21, 1
        %s243 = scalar_select %p242, %s21, 1
        %s244 = scalar_lea.vmem %s2, %s243
        %s245 = smul.u32 32, %s22
        %p246 = scmp.lt.s32.totalorder %s21, 1
        %s247 = scalar_select %p246, %s21, 1
        %p248 = scmp.lt.s32.totalorder %s245, 31
        %s249 = scalar_select %p248, %s245, 31
        %s250 = smul.addr %s247, 32
        %s251 = sadd.s32 %s249, %s250
        %s252 = smul.addr %s251, 8
        %s253 = scalar_lea.vmem %s3, %s252
        %s254 = smul.u32 32, %s22
        %v255 = vld [vmem:[%s200] sm:$0xff]
        %v256 = vld [vmem:[%s200 + $0x8] sm:$0xff]
        %v257 = vld [vmem:[%s200 + $0x10] sm:$0xff]
        %v258 = vld [vmem:[%s200 + $0x18] sm:$0xff]
        %v259 = vld [vmem:[%s200 + $0x20] sm:$0xff]
        %v260 = vld [vmem:[%s200 + $0x28] sm:$0xff]
        %v261 = vld [vmem:[%s200 + $0x30] sm:$0xff]
        %v262 = vld [vmem:[%s200 + $0x38] sm:$0xff]
        %v263 = vld [vmem:[%s200 + $0x40] sm:$0xff]
        %v264 = vld [vmem:[%s200 + $0x48] sm:$0xff]
        %v265 = vld [vmem:[%s200 + $0x50] sm:$0xff]
        %v266 = vld [vmem:[%s200 + $0x58] sm:$0xff]
        %v267 = vld [vmem:[%s200 + $0x60] sm:$0xff]
        %v268 = vld [vmem:[%s200 + $0x68] sm:$0xff]
        %v269 = vld [vmem:[%s200 + $0x70] sm:$0xff]
        %v270 = vld [vmem:[%s200 + $0x78] sm:$0xff]
        %v271 = vld [vmem:[%s200 + $0x80] sm:$0xff]
        %v272 = vld [vmem:[%s200 + $0x88] sm:$0xff]
        %v273 = vld [vmem:[%s200 + $0x90] sm:$0xff]
        %v274 = vld [vmem:[%s200 + $0x98] sm:$0xff]
        %v275 = vld [vmem:[%s200 + $0xa0] sm:$0xff]
        %v276 = vld [vmem:[%s200 + $0xa8] sm:$0xff]
        %v277 = vld [vmem:[%s200 + $0xb0] sm:$0xff]
        %v278 = vld [vmem:[%s200 + $0xb8] sm:$0xff]
        %v279 = vld [vmem:[%s200 + $0xc0] sm:$0xff]
        %v280 = vld [vmem:[%s200 + $0xc8] sm:$0xff]
        %v281 = vld [vmem:[%s200 + $0xd0] sm:$0xff]
        %v282 = vld [vmem:[%s200 + $0xd8] sm:$0xff]
        %v283 = vld [vmem:[%s200 + $0xe0] sm:$0xff]
        %v284 = vld [vmem:[%s200 + $0xe8] sm:$0xff]
        %v285 = vld [vmem:[%s200 + $0xf0] sm:$0xff]
        %v286 = vld [vmem:[%s200 + $0xf8] sm:$0xff]
        %v287 = vld [vmem:[%s241] sm:$0xff]
        %v288 = vld [vmem:[%s241 + $0x8] sm:$0xff]
        %v289 = vld [vmem:[%s241 + $0x10] sm:$0xff]
        %v290 = vld [vmem:[%s241 + $0x18] sm:$0xff]
        %v291 = vld [vmem:[%s241 + $0x20] sm:$0xff]
        %v292 = vld [vmem:[%s241 + $0x28] sm:$0xff]
        %v293 = vld [vmem:[%s241 + $0x30] sm:$0xff]
        %v294 = vld [vmem:[%s241 + $0x38] sm:$0xff]
        %v295 = vld [vmem:[%s244] sm:$0x1]
        %v297 = vperm.slane %v295, 0
        %vm299 = vcmask 523264
        %v301 = vsel %vm299, %v255, 0
        %v304 = vsel %vm299, %v256, 0
        %v307 = vsel %vm299, %v257, 0
        %v310 = vsel %vm299, %v258, 0
        %v313 = vsel %vm299, %v259, 0
        %v316 = vsel %vm299, %v260, 0
        %v319 = vsel %vm299, %v261, 0
        %v322 = vsel %vm299, %v262, 0
        %v325 = vsel %vm299, %v263, 0
        %v328 = vsel %vm299, %v264, 0
        %v331 = vsel %vm299, %v265, 0
        %v334 = vsel %vm299, %v266, 0
        %v337 = vsel %vm299, %v267, 0
        %v340 = vsel %vm299, %v268, 0
        %v343 = vsel %vm299, %v269, 0
        %v346 = vsel %vm299, %v270, 0
        %v349 = vsel %vm299, %v271, 0
        %v352 = vsel %vm299, %v272, 0
        %v355 = vsel %vm299, %v273, 0
        %v358 = vsel %vm299, %v274, 0
        %v361 = vsel %vm299, %v275, 0
        %v364 = vsel %vm299, %v276, 0
        %v367 = vsel %vm299, %v277, 0
        %v370 = vsel %vm299, %v278, 0
        %v373 = vsel %vm299, %v279, 0
        %v376 = vsel %vm299, %v280, 0
        %v379 = vsel %vm299, %v281, 0
        %v382 = vsel %vm299, %v282, 0
        %v385 = vsel %vm299, %v283, 0
        %v388 = vsel %vm299, %v284, 0
        %v391 = vsel %vm299, %v285, 0
        %v394 = vsel %vm299, %v286, 0
        %396 = vmatpush.msra.mxu0 0.0
        %397 = vmatpush.msra.mxu0 0.0
        %398 = vmatpush.msra.mxu0 0.0
        %399 = vmatpush.msra.mxu0 0.0
        %400 = vmatpush.msra.mxu0 0.0
        %401 = vmatpush.msra.mxu0 0.0
        %402 = vmatpush.msra.mxu0 0.0
        %403 = vmatpush.msra.mxu0 0.0
        %404 = vmatpush.msra.mxu0 %v294
        %405 = vmatpush.msra.mxu0 %v293
        %406 = vmatpush.msra.mxu0 %v292
        %407 = vmatpush.msra.mxu0 %v291
        %408 = vmatpush.msra.mxu0 %v290
        %409 = vmatpush.msra.mxu0 %v289
        %410 = vmatpush.msra.mxu0 %v288
        %411 = vmatpush.msra.mxu0 %v287
        %412 = vmatmul.f32.gmra.mxu0 %v301
        %v413 = vpop.f32.mrf.mxu0
        %v414 = vadd.f32 %v297, %v413
        %415 = vmatmul.f32.gmra.mxu0 %v304
        %v416 = vpop.f32.mrf.mxu0
        %v417 = vadd.f32 %v297, %v416
        %418 = vmatmul.f32.gmra.mxu0 %v307
        %v419 = vpop.f32.mrf.mxu0
        %v420 = vadd.f32 %v297, %v419
        %421 = vmatmul.f32.gmra.mxu0 %v310
        %v422 = vpop.f32.mrf.mxu0
        %v423 = vadd.f32 %v297, %v422
        %424 = vmatmul.f32.gmra.mxu0 %v313
        %v425 = vpop.f32.mrf.mxu0
        %v426 = vadd.f32 %v297, %v425
        %427 = vmatmul.f32.gmra.mxu0 %v316
        %v428 = vpop.f32.mrf.mxu0
        %v429 = vadd.f32 %v297, %v428
        %430 = vmatmul.f32.gmra.mxu0 %v319
        %v431 = vpop.f32.mrf.mxu0
        %v432 = vadd.f32 %v297, %v431
        %433 = vmatmul.f32.gmra.mxu0 %v322
        %v434 = vpop.f32.mrf.mxu0
        %v435 = vadd.f32 %v297, %v434
        %436 = vmatmul.f32.gmra.mxu0 %v325
        %v437 = vpop.f32.mrf.mxu0
        %v438 = vadd.f32 %v297, %v437
        %439 = vmatmul.f32.gmra.mxu0 %v328
        %v440 = vpop.f32.mrf.mxu0
        %v441 = vadd.f32 %v297, %v440
        %442 = vmatmul.f32.gmra.mxu0 %v331
        %v443 = vpop.f32.mrf.mxu0
        %v444 = vadd.f32 %v297, %v443
        %445 = vmatmul.f32.gmra.mxu0 %v334
        %v446 = vpop.f32.mrf.mxu0
        %v447 = vadd.f32 %v297, %v446
        %448 = vmatmul.f32.gmra.mxu0 %v337
        %v449 = vpop.f32.mrf.mxu0
        %v450 = vadd.f32 %v297, %v449
        %451 = vmatmul.f32.gmra.mxu0 %v340
        %v452 = vpop.f32.mrf.mxu0
        %v453 = vadd.f32 %v297, %v452
        %454 = vmatmul.f32.gmra.mxu0 %v343
        %v455 = vpop.f32.mrf.mxu0
        %v456 = vadd.f32 %v297, %v455
        %457 = vmatmul.f32.gmra.mxu0 %v346
        %v458 = vpop.f32.mrf.mxu0
        %v459 = vadd.f32 %v297, %v458
        %460 = vmatmul.f32.gmra.mxu0 %v349
        %v461 = vpop.f32.mrf.mxu0
        %v462 = vadd.f32 %v297, %v461
        %463 = vmatmul.f32.gmra.mxu0 %v352
        %v464 = vpop.f32.mrf.mxu0
        %v465 = vadd.f32 %v297, %v464
        %466 = vmatmul.f32.gmra.mxu0 %v355
        %v467 = vpop.f32.mrf.mxu0
        %v468 = vadd.f32 %v297, %v467
        %469 = vmatmul.f32.gmra.mxu0 %v358
        %v470 = vpop.f32.mrf.mxu0
        %v471 = vadd.f32 %v297, %v470
        %472 = vmatmul.f32.gmra.mxu0 %v361
        %v473 = vpop.f32.mrf.mxu0
        %v474 = vadd.f32 %v297, %v473
        %475 = vmatmul.f32.gmra.mxu0 %v364
        %v476 = vpop.f32.mrf.mxu0
        %v477 = vadd.f32 %v297, %v476
        %478 = vmatmul.f32.gmra.mxu0 %v367
        %v479 = vpop.f32.mrf.mxu0
        %v480 = vadd.f32 %v297, %v479
        %481 = vmatmul.f32.gmra.mxu0 %v370
        %v482 = vpop.f32.mrf.mxu0
        %v483 = vadd.f32 %v297, %v482
        %484 = vmatmul.f32.gmra.mxu0 %v373
        %v485 = vpop.f32.mrf.mxu0
        %v486 = vadd.f32 %v297, %v485
        %487 = vmatmul.f32.gmra.mxu0 %v376
        %v488 = vpop.f32.mrf.mxu0
        %v489 = vadd.f32 %v297, %v488
        %490 = vmatmul.f32.gmra.mxu0 %v379
        %v491 = vpop.f32.mrf.mxu0
        %v492 = vadd.f32 %v297, %v491
        %493 = vmatmul.f32.gmra.mxu0 %v382
        %v494 = vpop.f32.mrf.mxu0
        %v495 = vadd.f32 %v297, %v494
        %496 = vmatmul.f32.gmra.mxu0 %v385
        %v497 = vpop.f32.mrf.mxu0
        %v498 = vadd.f32 %v297, %v497
        %499 = vmatmul.f32.gmra.mxu0 %v388
        %v500 = vpop.f32.mrf.mxu0
        %v501 = vadd.f32 %v297, %v500
        %502 = vmatmul.f32.gmra.mxu0 %v391
        %v503 = vpop.f32.mrf.mxu0
        %v504 = vadd.f32 %v297, %v503
        %505 = vmatmul.f32.gmra.mxu0 %v394
        %v506 = vpop.f32.mrf.mxu0
        %v507 = vadd.f32 %v297, %v506
        %508 = vdwg.mxu0
        %v509 = vxor.u32 %v414, 2147483648
        %v510 = vxor.u32 %v417, 2147483648
        %v511 = vxor.u32 %v420, 2147483648
        %v512 = vxor.u32 %v423, 2147483648
        %v513 = vxor.u32 %v426, 2147483648
        %v514 = vxor.u32 %v429, 2147483648
        %v515 = vxor.u32 %v432, 2147483648
        %v516 = vxor.u32 %v435, 2147483648
        %v517 = vxor.u32 %v438, 2147483648
        %v518 = vxor.u32 %v441, 2147483648
        %v519 = vxor.u32 %v444, 2147483648
        %v520 = vxor.u32 %v447, 2147483648
        %v521 = vxor.u32 %v450, 2147483648
        %v522 = vxor.u32 %v453, 2147483648
        %v523 = vxor.u32 %v456, 2147483648
        %v524 = vxor.u32 %v459, 2147483648
        %v525 = vxor.u32 %v462, 2147483648
        %v526 = vxor.u32 %v465, 2147483648
        %v527 = vxor.u32 %v468, 2147483648
        %v528 = vxor.u32 %v471, 2147483648
        %v529 = vxor.u32 %v474, 2147483648
        %v530 = vxor.u32 %v477, 2147483648
        %v531 = vxor.u32 %v480, 2147483648
        %v532 = vxor.u32 %v483, 2147483648
        %v533 = vxor.u32 %v486, 2147483648
        %v534 = vxor.u32 %v489, 2147483648
        %v535 = vxor.u32 %v492, 2147483648
        %v536 = vxor.u32 %v495, 2147483648
        %v537 = vxor.u32 %v498, 2147483648
        %v538 = vxor.u32 %v501, 2147483648
        %v539 = vxor.u32 %v504, 2147483648
        %v540 = vxor.u32 %v507, 2147483648
        %v541 = vmul.f32 %v509, 1.442695
        %v542 = vpow.pop %v541
        %v543 = vmul.f32 %v510, 1.442695
        %v544 = vpow.pop %v543
        %v545 = vmul.f32 %v511, 1.442695
        %v546 = vpow.pop %v545
        %v547 = vmul.f32 %v512, 1.442695
        %v548 = vpow.pop %v547
        %v549 = vmul.f32 %v513, 1.442695
        %v550 = vpow.pop %v549
        %v551 = vmul.f32 %v514, 1.442695
        %v552 = vpow.pop %v551
        %v553 = vmul.f32 %v515, 1.442695
        %v554 = vpow.pop %v553
        %v555 = vmul.f32 %v516, 1.442695
        %v556 = vpow.pop %v555
        %v557 = vmul.f32 %v517, 1.442695
        %v558 = vpow.pop %v557
        %v559 = vmul.f32 %v518, 1.442695
        %v560 = vpow.pop %v559
        %v561 = vmul.f32 %v519, 1.442695
        %v562 = vpow.pop %v561
        %v563 = vmul.f32 %v520, 1.442695
        %v564 = vpow.pop %v563
        %v565 = vmul.f32 %v521, 1.442695
        %v566 = vpow.pop %v565
        %v567 = vmul.f32 %v522, 1.442695
        %v568 = vpow.pop %v567
        %v569 = vmul.f32 %v523, 1.442695
        %v570 = vpow.pop %v569
        %v571 = vmul.f32 %v524, 1.442695
        %v572 = vpow.pop %v571
        %v573 = vmul.f32 %v525, 1.442695
        %v574 = vpow.pop %v573
        %v575 = vmul.f32 %v526, 1.442695
        %v576 = vpow.pop %v575
        %v577 = vmul.f32 %v527, 1.442695
        %v578 = vpow.pop %v577
        %v579 = vmul.f32 %v528, 1.442695
        %v580 = vpow.pop %v579
        %v581 = vmul.f32 %v529, 1.442695
        %v582 = vpow.pop %v581
        %v583 = vmul.f32 %v530, 1.442695
        %v584 = vpow.pop %v583
        %v585 = vmul.f32 %v531, 1.442695
        %v586 = vpow.pop %v585
        %v587 = vmul.f32 %v532, 1.442695
        %v588 = vpow.pop %v587
        %v589 = vmul.f32 %v533, 1.442695
        %v590 = vpow.pop %v589
        %v591 = vmul.f32 %v534, 1.442695
        %v592 = vpow.pop %v591
        %v593 = vmul.f32 %v535, 1.442695
        %v594 = vpow.pop %v593
        %v595 = vmul.f32 %v536, 1.442695
        %v596 = vpow.pop %v595
        %v597 = vmul.f32 %v537, 1.442695
        %v598 = vpow.pop %v597
        %v599 = vmul.f32 %v538, 1.442695
        %v600 = vpow.pop %v599
        %v601 = vmul.f32 %v539, 1.442695
        %v602 = vpow.pop %v601
        %v603 = vmul.f32 %v540, 1.442695
        %v604 = vpow.pop %v603
        %v605 = vadd.f32 %v542, 1.0
        %v606 = vadd.f32 %v544, 1.0
        %v607 = vadd.f32 %v546, 1.0
        %v608 = vadd.f32 %v548, 1.0
        %v609 = vadd.f32 %v550, 1.0
        %v610 = vadd.f32 %v552, 1.0
        %v611 = vadd.f32 %v554, 1.0
        %v612 = vadd.f32 %v556, 1.0
        %v613 = vadd.f32 %v558, 1.0
        %v614 = vadd.f32 %v560, 1.0
        %v615 = vadd.f32 %v562, 1.0
        %v616 = vadd.f32 %v564, 1.0
        %v617 = vadd.f32 %v566, 1.0
        %v618 = vadd.f32 %v568, 1.0
        %v619 = vadd.f32 %v570, 1.0
        %v620 = vadd.f32 %v572, 1.0
        %v621 = vadd.f32 %v574, 1.0
        %v622 = vadd.f32 %v576, 1.0
        %v623 = vadd.f32 %v578, 1.0
        %v624 = vadd.f32 %v580, 1.0
        %v625 = vadd.f32 %v582, 1.0
        %v626 = vadd.f32 %v584, 1.0
        %v627 = vadd.f32 %v586, 1.0
        %v628 = vadd.f32 %v588, 1.0
        %v629 = vadd.f32 %v590, 1.0
        %v630 = vadd.f32 %v592, 1.0
        %v631 = vadd.f32 %v594, 1.0
        %v632 = vadd.f32 %v596, 1.0
        %v633 = vadd.f32 %v598, 1.0
        %v634 = vadd.f32 %v600, 1.0
        %v635 = vadd.f32 %v602, 1.0
        %v636 = vadd.f32 %v604, 1.0
        %v637 = vrcp.pop %v605
        %v638 = vmul.f32 %v605, %v637
        %v639 = vsub.f32 1.0, %v638
        %v640 = vmul.f32 %v637, %v639
        %v641 = vadd.f32 %v637, %v640
        %vm642 = vweird.f32 %v605
        %vm643 = vweird.f32 %v637
        %vm644 = vmor %vm642, %vm643
        %v645 = vsel %vm644, %v637, %v641
        %v646 = vand.u32 2147483647, %v605
        %vm647 = vcmp.eq.f32.partialorder %v646, 8.507059e+37
        %v648 = vand.u32 %v605, 2147483648
        %v649 = vor.u32 1.1754944e-38, %v648
        %v650 = vsel %vm647, %v649, %v645
        %v651 = vmul.f32 1.0, %v650
        %v652 = vrcp.pop %v606
        %v653 = vmul.f32 %v606, %v652
        %v654 = vsub.f32 1.0, %v653
        %v655 = vmul.f32 %v652, %v654
        %v656 = vadd.f32 %v652, %v655
        %vm657 = vweird.f32 %v606
        %vm658 = vweird.f32 %v652
        %vm659 = vmor %vm657, %vm658
        %v660 = vsel %vm659, %v652, %v656
        %v661 = vand.u32 2147483647, %v606
        %vm662 = vcmp.eq.f32.partialorder %v661, 8.507059e+37
        %v663 = vand.u32 %v606, 2147483648
        %v664 = vor.u32 1.1754944e-38, %v663
        %v665 = vsel %vm662, %v664, %v660
        %v666 = vmul.f32 1.0, %v665
        %v667 = vrcp.pop %v607
        %v668 = vmul.f32 %v607, %v667
        %v669 = vsub.f32 1.0, %v668
        %v670 = vmul.f32 %v667, %v669
        %v671 = vadd.f32 %v667, %v670
        %vm672 = vweird.f32 %v607
        %vm673 = vweird.f32 %v667
        %vm674 = vmor %vm672, %vm673
        %v675 = vsel %vm674, %v667, %v671
        %v676 = vand.u32 2147483647, %v607
        %vm677 = vcmp.eq.f32.partialorder %v676, 8.507059e+37
        %v678 = vand.u32 %v607, 2147483648
        %v679 = vor.u32 1.1754944e-38, %v678
        %v680 = vsel %vm677, %v679, %v675
        %v681 = vmul.f32 1.0, %v680
        %v682 = vrcp.pop %v608
        %v683 = vmul.f32 %v608, %v682
        %v684 = vsub.f32 1.0, %v683
        %v685 = vmul.f32 %v682, %v684
        %v686 = vadd.f32 %v682, %v685
        %vm687 = vweird.f32 %v608
        %vm688 = vweird.f32 %v682
        %vm689 = vmor %vm687, %vm688
        %v690 = vsel %vm689, %v682, %v686
        %v691 = vand.u32 2147483647, %v608
        %vm692 = vcmp.eq.f32.partialorder %v691, 8.507059e+37
        %v693 = vand.u32 %v608, 2147483648
        %v694 = vor.u32 1.1754944e-38, %v693
        %v695 = vsel %vm692, %v694, %v690
        %v696 = vmul.f32 1.0, %v695
        %v697 = vrcp.pop %v609
        %v698 = vmul.f32 %v609, %v697
        %v699 = vsub.f32 1.0, %v698
        %v700 = vmul.f32 %v697, %v699
        %v701 = vadd.f32 %v697, %v700
        %vm702 = vweird.f32 %v609
        %vm703 = vweird.f32 %v697
        %vm704 = vmor %vm702, %vm703
        %v705 = vsel %vm704, %v697, %v701
        %v706 = vand.u32 2147483647, %v609
        %vm707 = vcmp.eq.f32.partialorder %v706, 8.507059e+37
        %v708 = vand.u32 %v609, 2147483648
        %v709 = vor.u32 1.1754944e-38, %v708
        %v710 = vsel %vm707, %v709, %v705
        %v711 = vmul.f32 1.0, %v710
        %v712 = vrcp.pop %v610
        %v713 = vmul.f32 %v610, %v712
        %v714 = vsub.f32 1.0, %v713
        %v715 = vmul.f32 %v712, %v714
        %v716 = vadd.f32 %v712, %v715
        %vm717 = vweird.f32 %v610
        %vm718 = vweird.f32 %v712
        %vm719 = vmor %vm717, %vm718
        %v720 = vsel %vm719, %v712, %v716
        %v721 = vand.u32 2147483647, %v610
        %vm722 = vcmp.eq.f32.partialorder %v721, 8.507059e+37
        %v723 = vand.u32 %v610, 2147483648
        %v724 = vor.u32 1.1754944e-38, %v723
        %v725 = vsel %vm722, %v724, %v720
        %v726 = vmul.f32 1.0, %v725
        %v727 = vrcp.pop %v611
        %v728 = vmul.f32 %v611, %v727
        %v729 = vsub.f32 1.0, %v728
        %v730 = vmul.f32 %v727, %v729
        %v731 = vadd.f32 %v727, %v730
        %vm732 = vweird.f32 %v611
        %vm733 = vweird.f32 %v727
        %vm734 = vmor %vm732, %vm733
        %v735 = vsel %vm734, %v727, %v731
        %v736 = vand.u32 2147483647, %v611
        %vm737 = vcmp.eq.f32.partialorder %v736, 8.507059e+37
        %v738 = vand.u32 %v611, 2147483648
        %v739 = vor.u32 1.1754944e-38, %v738
        %v740 = vsel %vm737, %v739, %v735
        %v741 = vmul.f32 1.0, %v740
        %v742 = vrcp.pop %v612
        %v743 = vmul.f32 %v612, %v742
        %v744 = vsub.f32 1.0, %v743
        %v745 = vmul.f32 %v742, %v744
        %v746 = vadd.f32 %v742, %v745
        %vm747 = vweird.f32 %v612
        %vm748 = vweird.f32 %v742
        %vm749 = vmor %vm747, %vm748
        %v750 = vsel %vm749, %v742, %v746
        %v751 = vand.u32 2147483647, %v612
        %vm752 = vcmp.eq.f32.partialorder %v751, 8.507059e+37
        %v753 = vand.u32 %v612, 2147483648
        %v754 = vor.u32 1.1754944e-38, %v753
        %v755 = vsel %vm752, %v754, %v750
        %v756 = vmul.f32 1.0, %v755
        %v757 = vrcp.pop %v613
        %v758 = vmul.f32 %v613, %v757
        %v759 = vsub.f32 1.0, %v758
        %v760 = vmul.f32 %v757, %v759
        %v761 = vadd.f32 %v757, %v760
        %vm762 = vweird.f32 %v613
        %vm763 = vweird.f32 %v757
        %vm764 = vmor %vm762, %vm763
        %v765 = vsel %vm764, %v757, %v761
        %v766 = vand.u32 2147483647, %v613
        %vm767 = vcmp.eq.f32.partialorder %v766, 8.507059e+37
        %v768 = vand.u32 %v613, 2147483648
        %v769 = vor.u32 1.1754944e-38, %v768
        %v770 = vsel %vm767, %v769, %v765
        %v771 = vmul.f32 1.0, %v770
        %v772 = vrcp.pop %v614
        %v773 = vmul.f32 %v614, %v772
        %v774 = vsub.f32 1.0, %v773
        %v775 = vmul.f32 %v772, %v774
        %v776 = vadd.f32 %v772, %v775
        %vm777 = vweird.f32 %v614
        %vm778 = vweird.f32 %v772
        %vm779 = vmor %vm777, %vm778
        %v780 = vsel %vm779, %v772, %v776
        %v781 = vand.u32 2147483647, %v614
        %vm782 = vcmp.eq.f32.partialorder %v781, 8.507059e+37
        %v783 = vand.u32 %v614, 2147483648
        %v784 = vor.u32 1.1754944e-38, %v783
        %v785 = vsel %vm782, %v784, %v780
        %v786 = vmul.f32 1.0, %v785
        %v787 = vrcp.pop %v615
        %v788 = vmul.f32 %v615, %v787
        %v789 = vsub.f32 1.0, %v788
        %v790 = vmul.f32 %v787, %v789
        %v791 = vadd.f32 %v787, %v790
        %vm792 = vweird.f32 %v615
        %vm793 = vweird.f32 %v787
        %vm794 = vmor %vm792, %vm793
        %v795 = vsel %vm794, %v787, %v791
        %v796 = vand.u32 2147483647, %v615
        %vm797 = vcmp.eq.f32.partialorder %v796, 8.507059e+37
        %v798 = vand.u32 %v615, 2147483648
        %v799 = vor.u32 1.1754944e-38, %v798
        %v800 = vsel %vm797, %v799, %v795
        %v801 = vmul.f32 1.0, %v800
        %v802 = vrcp.pop %v616
        %v803 = vmul.f32 %v616, %v802
        %v804 = vsub.f32 1.0, %v803
        %v805 = vmul.f32 %v802, %v804
        %v806 = vadd.f32 %v802, %v805
        %vm807 = vweird.f32 %v616
        %vm808 = vweird.f32 %v802
        %vm809 = vmor %vm807, %vm808
        %v810 = vsel %vm809, %v802, %v806
        %v811 = vand.u32 2147483647, %v616
        %vm812 = vcmp.eq.f32.partialorder %v811, 8.507059e+37
        %v813 = vand.u32 %v616, 2147483648
        %v814 = vor.u32 1.1754944e-38, %v813
        %v815 = vsel %vm812, %v814, %v810
        %v816 = vmul.f32 1.0, %v815
        %v817 = vrcp.pop %v617
        %v818 = vmul.f32 %v617, %v817
        %v819 = vsub.f32 1.0, %v818
        %v820 = vmul.f32 %v817, %v819
        %v821 = vadd.f32 %v817, %v820
        %vm822 = vweird.f32 %v617
        %vm823 = vweird.f32 %v817
        %vm824 = vmor %vm822, %vm823
        %v825 = vsel %vm824, %v817, %v821
        %v826 = vand.u32 2147483647, %v617
        %vm827 = vcmp.eq.f32.partialorder %v826, 8.507059e+37
        %v828 = vand.u32 %v617, 2147483648
        %v829 = vor.u32 1.1754944e-38, %v828
        %v830 = vsel %vm827, %v829, %v825
        %v831 = vmul.f32 1.0, %v830
        %v832 = vrcp.pop %v618
        %v833 = vmul.f32 %v618, %v832
        %v834 = vsub.f32 1.0, %v833
        %v835 = vmul.f32 %v832, %v834
        %v836 = vadd.f32 %v832, %v835
        %vm837 = vweird.f32 %v618
        %vm838 = vweird.f32 %v832
        %vm839 = vmor %vm837, %vm838
        %v840 = vsel %vm839, %v832, %v836
        %v841 = vand.u32 2147483647, %v618
        %vm842 = vcmp.eq.f32.partialorder %v841, 8.507059e+37
        %v843 = vand.u32 %v618, 2147483648
        %v844 = vor.u32 1.1754944e-38, %v843
        %v845 = vsel %vm842, %v844, %v840
        %v846 = vmul.f32 1.0, %v845
        %v847 = vrcp.pop %v619
        %v848 = vmul.f32 %v619, %v847
        %v849 = vsub.f32 1.0, %v848
        %v850 = vmul.f32 %v847, %v849
        %v851 = vadd.f32 %v847, %v850
        %vm852 = vweird.f32 %v619
        %vm853 = vweird.f32 %v847
        %vm854 = vmor %vm852, %vm853
        %v855 = vsel %vm854, %v847, %v851
        %v856 = vand.u32 2147483647, %v619
        %vm857 = vcmp.eq.f32.partialorder %v856, 8.507059e+37
        %v858 = vand.u32 %v619, 2147483648
        %v859 = vor.u32 1.1754944e-38, %v858
        %v860 = vsel %vm857, %v859, %v855
        %v861 = vmul.f32 1.0, %v860
        %v862 = vrcp.pop %v620
        %v863 = vmul.f32 %v620, %v862
        %v864 = vsub.f32 1.0, %v863
        %v865 = vmul.f32 %v862, %v864
        %v866 = vadd.f32 %v862, %v865
        %vm867 = vweird.f32 %v620
        %vm868 = vweird.f32 %v862
        %vm869 = vmor %vm867, %vm868
        %v870 = vsel %vm869, %v862, %v866
        %v871 = vand.u32 2147483647, %v620
        %vm872 = vcmp.eq.f32.partialorder %v871, 8.507059e+37
        %v873 = vand.u32 %v620, 2147483648
        %v874 = vor.u32 1.1754944e-38, %v873
        %v875 = vsel %vm872, %v874, %v870
        %v876 = vmul.f32 1.0, %v875
        %v877 = vrcp.pop %v621
        %v878 = vmul.f32 %v621, %v877
        %v879 = vsub.f32 1.0, %v878
        %v880 = vmul.f32 %v877, %v879
        %v881 = vadd.f32 %v877, %v880
        %vm882 = vweird.f32 %v621
        %vm883 = vweird.f32 %v877
        %vm884 = vmor %vm882, %vm883
        %v885 = vsel %vm884, %v877, %v881
        %v886 = vand.u32 2147483647, %v621
        %vm887 = vcmp.eq.f32.partialorder %v886, 8.507059e+37
        %v888 = vand.u32 %v621, 2147483648
        %v889 = vor.u32 1.1754944e-38, %v888
        %v890 = vsel %vm887, %v889, %v885
        %v891 = vmul.f32 1.0, %v890
        %v892 = vrcp.pop %v622
        %v893 = vmul.f32 %v622, %v892
        %v894 = vsub.f32 1.0, %v893
        %v895 = vmul.f32 %v892, %v894
        %v896 = vadd.f32 %v892, %v895
        %vm897 = vweird.f32 %v622
        %vm898 = vweird.f32 %v892
        %vm899 = vmor %vm897, %vm898
        %v900 = vsel %vm899, %v892, %v896
        %v901 = vand.u32 2147483647, %v622
        %vm902 = vcmp.eq.f32.partialorder %v901, 8.507059e+37
        %v903 = vand.u32 %v622, 2147483648
        %v904 = vor.u32 1.1754944e-38, %v903
        %v905 = vsel %vm902, %v904, %v900
        %v906 = vmul.f32 1.0, %v905
        %v907 = vrcp.pop %v623
        %v908 = vmul.f32 %v623, %v907
        %v909 = vsub.f32 1.0, %v908
        %v910 = vmul.f32 %v907, %v909
        %v911 = vadd.f32 %v907, %v910
        %vm912 = vweird.f32 %v623
        %vm913 = vweird.f32 %v907
        %vm914 = vmor %vm912, %vm913
        %v915 = vsel %vm914, %v907, %v911
        %v916 = vand.u32 2147483647, %v623
        %vm917 = vcmp.eq.f32.partialorder %v916, 8.507059e+37
        %v918 = vand.u32 %v623, 2147483648
        %v919 = vor.u32 1.1754944e-38, %v918
        %v920 = vsel %vm917, %v919, %v915
        %v921 = vmul.f32 1.0, %v920
        %v922 = vrcp.pop %v624
        %v923 = vmul.f32 %v624, %v922
        %v924 = vsub.f32 1.0, %v923
        %v925 = vmul.f32 %v922, %v924
        %v926 = vadd.f32 %v922, %v925
        %vm927 = vweird.f32 %v624
        %vm928 = vweird.f32 %v922
        %vm929 = vmor %vm927, %vm928
        %v930 = vsel %vm929, %v922, %v926
        %v931 = vand.u32 2147483647, %v624
        %vm932 = vcmp.eq.f32.partialorder %v931, 8.507059e+37
        %v933 = vand.u32 %v624, 2147483648
        %v934 = vor.u32 1.1754944e-38, %v933
        %v935 = vsel %vm932, %v934, %v930
        %v936 = vmul.f32 1.0, %v935
        %v937 = vrcp.pop %v625
        %v938 = vmul.f32 %v625, %v937
        %v939 = vsub.f32 1.0, %v938
        %v940 = vmul.f32 %v937, %v939
        %v941 = vadd.f32 %v937, %v940
        %vm942 = vweird.f32 %v625
        %vm943 = vweird.f32 %v937
        %vm944 = vmor %vm942, %vm943
        %v945 = vsel %vm944, %v937, %v941
        %v946 = vand.u32 2147483647, %v625
        %vm947 = vcmp.eq.f32.partialorder %v946, 8.507059e+37
        %v948 = vand.u32 %v625, 2147483648
        %v949 = vor.u32 1.1754944e-38, %v948
        %v950 = vsel %vm947, %v949, %v945
        %v951 = vmul.f32 1.0, %v950
        %v952 = vrcp.pop %v626
        %v953 = vmul.f32 %v626, %v952
        %v954 = vsub.f32 1.0, %v953
        %v955 = vmul.f32 %v952, %v954
        %v956 = vadd.f32 %v952, %v955
        %vm957 = vweird.f32 %v626
        %vm958 = vweird.f32 %v952
        %vm959 = vmor %vm957, %vm958
        %v960 = vsel %vm959, %v952, %v956
        %v961 = vand.u32 2147483647, %v626
        %vm962 = vcmp.eq.f32.partialorder %v961, 8.507059e+37
        %v963 = vand.u32 %v626, 2147483648
        %v964 = vor.u32 1.1754944e-38, %v963
        %v965 = vsel %vm962, %v964, %v960
        %v966 = vmul.f32 1.0, %v965
        %v967 = vrcp.pop %v627
        %v968 = vmul.f32 %v627, %v967
        %v969 = vsub.f32 1.0, %v968
        %v970 = vmul.f32 %v967, %v969
        %v971 = vadd.f32 %v967, %v970
        %vm972 = vweird.f32 %v627
        %vm973 = vweird.f32 %v967
        %vm974 = vmor %vm972, %vm973
        %v975 = vsel %vm974, %v967, %v971
        %v976 = vand.u32 2147483647, %v627
        %vm977 = vcmp.eq.f32.partialorder %v976, 8.507059e+37
        %v978 = vand.u32 %v627, 2147483648
        %v979 = vor.u32 1.1754944e-38, %v978
        %v980 = vsel %vm977, %v979, %v975
        %v981 = vmul.f32 1.0, %v980
        %v982 = vrcp.pop %v628
        %v983 = vmul.f32 %v628, %v982
        %v984 = vsub.f32 1.0, %v983
        %v985 = vmul.f32 %v982, %v984
        %v986 = vadd.f32 %v982, %v985
        %vm987 = vweird.f32 %v628
        %vm988 = vweird.f32 %v982
        %vm989 = vmor %vm987, %vm988
        %v990 = vsel %vm989, %v982, %v986
        %v991 = vand.u32 2147483647, %v628
        %vm992 = vcmp.eq.f32.partialorder %v991, 8.507059e+37
        %v993 = vand.u32 %v628, 2147483648
        %v994 = vor.u32 1.1754944e-38, %v993
        %v995 = vsel %vm992, %v994, %v990
        %v996 = vmul.f32 1.0, %v995
        %v997 = vrcp.pop %v629
        %v998 = vmul.f32 %v629, %v997
        %v999 = vsub.f32 1.0, %v998
        %v1000 = vmul.f32 %v997, %v999
        %v1001 = vadd.f32 %v997, %v1000
        %vm1002 = vweird.f32 %v629
        %vm1003 = vweird.f32 %v997
        %vm1004 = vmor %vm1002, %vm1003
        %v1005 = vsel %vm1004, %v997, %v1001
        %v1006 = vand.u32 2147483647, %v629
        %vm1007 = vcmp.eq.f32.partialorder %v1006, 8.507059e+37
        %v1008 = vand.u32 %v629, 2147483648
        %v1009 = vor.u32 1.1754944e-38, %v1008
        %v1010 = vsel %vm1007, %v1009, %v1005
        %v1011 = vmul.f32 1.0, %v1010
        %v1012 = vrcp.pop %v630
        %v1013 = vmul.f32 %v630, %v1012
        %v1014 = vsub.f32 1.0, %v1013
        %v1015 = vmul.f32 %v1012, %v1014
        %v1016 = vadd.f32 %v1012, %v1015
        %vm1017 = vweird.f32 %v630
        %vm1018 = vweird.f32 %v1012
        %vm1019 = vmor %vm1017, %vm1018
        %v1020 = vsel %vm1019, %v1012, %v1016
        %v1021 = vand.u32 2147483647, %v630
        %vm1022 = vcmp.eq.f32.partialorder %v1021, 8.507059e+37
        %v1023 = vand.u32 %v630, 2147483648
        %v1024 = vor.u32 1.1754944e-38, %v1023
        %v1025 = vsel %vm1022, %v1024, %v1020
        %v1026 = vmul.f32 1.0, %v1025
        %v1027 = vrcp.pop %v631
        %v1028 = vmul.f32 %v631, %v1027
        %v1029 = vsub.f32 1.0, %v1028
        %v1030 = vmul.f32 %v1027, %v1029
        %v1031 = vadd.f32 %v1027, %v1030
        %vm1032 = vweird.f32 %v631
        %vm1033 = vweird.f32 %v1027
        %vm1034 = vmor %vm1032, %vm1033
        %v1035 = vsel %vm1034, %v1027, %v1031
        %v1036 = vand.u32 2147483647, %v631
        %vm1037 = vcmp.eq.f32.partialorder %v1036, 8.507059e+37
        %v1038 = vand.u32 %v631, 2147483648
        %v1039 = vor.u32 1.1754944e-38, %v1038
        %v1040 = vsel %vm1037, %v1039, %v1035
        %v1041 = vmul.f32 1.0, %v1040
        %v1042 = vrcp.pop %v632
        %v1043 = vmul.f32 %v632, %v1042
        %v1044 = vsub.f32 1.0, %v1043
        %v1045 = vmul.f32 %v1042, %v1044
        %v1046 = vadd.f32 %v1042, %v1045
        %vm1047 = vweird.f32 %v632
        %vm1048 = vweird.f32 %v1042
        %vm1049 = vmor %vm1047, %vm1048
        %v1050 = vsel %vm1049, %v1042, %v1046
        %v1051 = vand.u32 2147483647, %v632
        %vm1052 = vcmp.eq.f32.partialorder %v1051, 8.507059e+37
        %v1053 = vand.u32 %v632, 2147483648
        %v1054 = vor.u32 1.1754944e-38, %v1053
        %v1055 = vsel %vm1052, %v1054, %v1050
        %v1056 = vmul.f32 1.0, %v1055
        %v1057 = vrcp.pop %v633
        %v1058 = vmul.f32 %v633, %v1057
        %v1059 = vsub.f32 1.0, %v1058
        %v1060 = vmul.f32 %v1057, %v1059
        %v1061 = vadd.f32 %v1057, %v1060
        %vm1062 = vweird.f32 %v633
        %vm1063 = vweird.f32 %v1057
        %vm1064 = vmor %vm1062, %vm1063
        %v1065 = vsel %vm1064, %v1057, %v1061
        %v1066 = vand.u32 2147483647, %v633
        %vm1067 = vcmp.eq.f32.partialorder %v1066, 8.507059e+37
        %v1068 = vand.u32 %v633, 2147483648
        %v1069 = vor.u32 1.1754944e-38, %v1068
        %v1070 = vsel %vm1067, %v1069, %v1065
        %v1071 = vmul.f32 1.0, %v1070
        %v1072 = vrcp.pop %v634
        %v1073 = vmul.f32 %v634, %v1072
        %v1074 = vsub.f32 1.0, %v1073
        %v1075 = vmul.f32 %v1072, %v1074
        %v1076 = vadd.f32 %v1072, %v1075
        %vm1077 = vweird.f32 %v634
        %vm1078 = vweird.f32 %v1072
        %vm1079 = vmor %vm1077, %vm1078
        %v1080 = vsel %vm1079, %v1072, %v1076
        %v1081 = vand.u32 2147483647, %v634
        %vm1082 = vcmp.eq.f32.partialorder %v1081, 8.507059e+37
        %v1083 = vand.u32 %v634, 2147483648
        %v1084 = vor.u32 1.1754944e-38, %v1083
        %v1085 = vsel %vm1082, %v1084, %v1080
        %v1086 = vmul.f32 1.0, %v1085
        %v1087 = vrcp.pop %v635
        %v1088 = vmul.f32 %v635, %v1087
        %v1089 = vsub.f32 1.0, %v1088
        %v1090 = vmul.f32 %v1087, %v1089
        %v1091 = vadd.f32 %v1087, %v1090
        %vm1092 = vweird.f32 %v635
        %vm1093 = vweird.f32 %v1087
        %vm1094 = vmor %vm1092, %vm1093
        %v1095 = vsel %vm1094, %v1087, %v1091
        %v1096 = vand.u32 2147483647, %v635
        %vm1097 = vcmp.eq.f32.partialorder %v1096, 8.507059e+37
        %v1098 = vand.u32 %v635, 2147483648
        %v1099 = vor.u32 1.1754944e-38, %v1098
        %v1100 = vsel %vm1097, %v1099, %v1095
        %v1101 = vmul.f32 1.0, %v1100
        %v1102 = vrcp.pop %v636
        %v1103 = vmul.f32 %v636, %v1102
        %v1104 = vsub.f32 1.0, %v1103
        %v1105 = vmul.f32 %v1102, %v1104
        %v1106 = vadd.f32 %v1102, %v1105
        %vm1107 = vweird.f32 %v636
        %vm1108 = vweird.f32 %v1102
        %vm1109 = vmor %vm1107, %vm1108
        %v1110 = vsel %vm1109, %v1102, %v1106
        %v1111 = vand.u32 2147483647, %v636
        %vm1112 = vcmp.eq.f32.partialorder %v1111, 8.507059e+37
        %v1113 = vand.u32 %v636, 2147483648
        %v1114 = vor.u32 1.1754944e-38, %v1113
        %v1115 = vsel %vm1112, %v1114, %v1110
        %v1116 = vmul.f32 1.0, %v1115
        %v1117 = vmul.f32 %v414, %v651
        %v1118 = vmul.f32 %v417, %v666
        %v1119 = vmul.f32 %v420, %v681
        %v1120 = vmul.f32 %v423, %v696
        %v1121 = vmul.f32 %v426, %v711
        %v1122 = vmul.f32 %v429, %v726
        %v1123 = vmul.f32 %v432, %v741
        %v1124 = vmul.f32 %v435, %v756
        %v1125 = vmul.f32 %v438, %v771
        %v1126 = vmul.f32 %v441, %v786
        %v1127 = vmul.f32 %v444, %v801
        %v1128 = vmul.f32 %v447, %v816
        %v1129 = vmul.f32 %v450, %v831
        %v1130 = vmul.f32 %v453, %v846
        %v1131 = vmul.f32 %v456, %v861
        %v1132 = vmul.f32 %v459, %v876
        %v1133 = vmul.f32 %v462, %v891
        %v1134 = vmul.f32 %v465, %v906
        %v1135 = vmul.f32 %v468, %v921
        %v1136 = vmul.f32 %v471, %v936
        %v1137 = vmul.f32 %v474, %v951
        %v1138 = vmul.f32 %v477, %v966
        %v1139 = vmul.f32 %v480, %v981
        %v1140 = vmul.f32 %v483, %v996
        %v1141 = vmul.f32 %v486, %v1011
        %v1142 = vmul.f32 %v489, %v1026
        %v1143 = vmul.f32 %v492, %v1041
        %v1144 = vmul.f32 %v495, %v1056
        %v1145 = vmul.f32 %v498, %v1071
        %v1146 = vmul.f32 %v501, %v1086
        %v1147 = vmul.f32 %v504, %v1101
        %v1148 = vmul.f32 %v507, %v1116
        %1149 = vst.msk [vmem:[%s253] sm:$0xff] %vm299, %v1117
        %1150 = vst.msk [vmem:[%s253 + $0x8] sm:$0xff] %vm299, %v1118
        %1151 = vst.msk [vmem:[%s253 + $0x10] sm:$0xff] %vm299, %v1119
        %1152 = vst.msk [vmem:[%s253 + $0x18] sm:$0xff] %vm299, %v1120
        %1153 = vst.msk [vmem:[%s253 + $0x20] sm:$0xff] %vm299, %v1121
        %1154 = vst.msk [vmem:[%s253 + $0x28] sm:$0xff] %vm299, %v1122
        %1155 = vst.msk [vmem:[%s253 + $0x30] sm:$0xff] %vm299, %v1123
        %1156 = vst.msk [vmem:[%s253 + $0x38] sm:$0xff] %vm299, %v1124
        %1157 = vst.msk [vmem:[%s253 + $0x40] sm:$0xff] %vm299, %v1125
        %1158 = vst.msk [vmem:[%s253 + $0x48] sm:$0xff] %vm299, %v1126
        %1159 = vst.msk [vmem:[%s253 + $0x50] sm:$0xff] %vm299, %v1127
        %1160 = vst.msk [vmem:[%s253 + $0x58] sm:$0xff] %vm299, %v1128
        %1161 = vst.msk [vmem:[%s253 + $0x60] sm:$0xff] %vm299, %v1129
        %1162 = vst.msk [vmem:[%s253 + $0x68] sm:$0xff] %vm299, %v1130
        %1163 = vst.msk [vmem:[%s253 + $0x70] sm:$0xff] %vm299, %v1131
        %1164 = vst.msk [vmem:[%s253 + $0x78] sm:$0xff] %vm299, %v1132
        %1165 = vst.msk [vmem:[%s253 + $0x80] sm:$0xff] %vm299, %v1133
        %1166 = vst.msk [vmem:[%s253 + $0x88] sm:$0xff] %vm299, %v1134
        %1167 = vst.msk [vmem:[%s253 + $0x90] sm:$0xff] %vm299, %v1135
        %1168 = vst.msk [vmem:[%s253 + $0x98] sm:$0xff] %vm299, %v1136
        %1169 = vst.msk [vmem:[%s253 + $0xa0] sm:$0xff] %vm299, %v1137
        %1170 = vst.msk [vmem:[%s253 + $0xa8] sm:$0xff] %vm299, %v1138
        %1171 = vst.msk [vmem:[%s253 + $0xb0] sm:$0xff] %vm299, %v1139
        %1172 = vst.msk [vmem:[%s253 + $0xb8] sm:$0xff] %vm299, %v1140
        %1173 = vst.msk [vmem:[%s253 + $0xc0] sm:$0xff] %vm299, %v1141
        %1174 = vst.msk [vmem:[%s253 + $0xc8] sm:$0xff] %vm299, %v1142
        %1175 = vst.msk [vmem:[%s253 + $0xd0] sm:$0xff] %vm299, %v1143
        %1176 = vst.msk [vmem:[%s253 + $0xd8] sm:$0xff] %vm299, %v1144
        %1177 = vst.msk [vmem:[%s253 + $0xe0] sm:$0xff] %vm299, %v1145
        %1178 = vst.msk [vmem:[%s253 + $0xe8] sm:$0xff] %vm299, %v1146
        %1179 = vst.msk [vmem:[%s253 + $0xf0] sm:$0xff] %vm299, %v1147
        %1180 = vst.msk [vmem:[%s253 + $0xf8] sm:$0xff] %vm299, %v1148
        %s1181 = smul.u32 32, %s22
        %p1182 = scmp.lt.s32.totalorder %s21, 1
        %s1183 = scalar_select %p1182, %s21, 1
        %p1184 = scmp.lt.s32.totalorder %s1181, 31
        %s1185 = scalar_select %p1184, %s1181, 31
        %s1186 = smul.addr %s1183, 32
        %s1187 = sadd.s32 %s1185, %s1186
        %s1188 = smul.addr %s1187, 8
        %s1189 = scalar_lea.vmem %s3, %s1188
        // Predicated region
        $region37: #{_lambda_.4} parent=31 // pred_check
          %p1190 = pneg %p129
        $region38: #{_lambda_.4} parent=31 // pred_check_branch
          %1192 = sbr.rel (%p1190) target = $region40
        $region39: #{_lambda_.4} parent=31 // pred_region
          %s1193 = smul.u32 32, %s22
        $region40: #{_lambda_.4} parent=31 // pred_fallthru
          _
      $region32: #{_lambda_.4} parent=5 // pred_fallthru
        _
      %p1194 = scmp.le.s32.totalorder 2, %s12
      // Predicated region
      $region41: #{_lambda_.4} parent=5 // pred_check
        %p1195 = pneg %p1194
      $region42: #{_lambda_.4} parent=5 // pred_check_branch
        %1197 = sbr.rel (%p1195) target = $region44
      $region43: #{_lambda_.4} parent=5 // pred_region
        %s1198 = ssub.s32 %s12, 2
        // Predicated region
        $region45: #{_lambda_.4} parent=43 // pred_check
          %p1199 = pneg %p135
        $region46: #{_lambda_.4} parent=43 // pred_check_branch
          %1201 = sbr.rel (%p1199) target = $region48
        $region47: #{_lambda_.4} parent=43 // pred_region
          %s1202 = smul.u32 32, %s24
          %p1203 = scmp.lt.s32.totalorder %s23, 1
          %s1204 = scalar_select %p1203, %s23, 1
          %p1205 = scmp.lt.s32.totalorder %s1202, 31
          %s1206 = scalar_select %p1205, %s1202, 31
          %s1207 = smul.addr %s1204, 32
          %s1208 = sadd.s32 %s1206, %s1207
          %s1209 = smul.addr %s1208, 8
          %s1210 = scalar_lea.vmem %s3, %s1209
        $region48: #{_lambda_.4} parent=43 // pred_fallthru
          _
      $region44: #{_lambda_.4} parent=5 // pred_fallthru
        _
    $region6: #{_lambda_.4} parent=1 // loop_footer
      %s16 = sadd.s32 1, %s12
    $region7: #{_lambda_.4} parent=1 // loop_footer_branch
      %11 = sbr.rel target = $region3
    $region8: #{_lambda_.4} parent=1 // loop_exit
      _
    %1211 = vsyncpa [#allocation3], 1
    %s1212 = scalar_lea.sflag [#allocation3], 1
    %1213 = vsyncpa %s1212, 1

// kernel: _lambda_.5
$region0: #{_lambda_.5}
  #allocation0 [shape = 'u32[]', space=smem, size = 0x4, offset = 0x4, fixed_abs, tag = 'smem constant byte address 0x4 - core index']
  #allocation1 [shape = 'u32[72,128]{1,0:T(1,128)}', space=vmem, size = 0x9000, scoped, tag = 'internal scratch']
  %s0 = inlined_call_operand.vmem [shape: f32[2,342,32], index: 0, kind: input, shape index: {}]
  %s1 = inlined_call_operand.vmem [shape: f32[2,9,32,32], index: 1, kind: input, shape index: {}]
  %s2 = inlined_call_operand.vmem [shape: f32[2,1,32], index: 2, kind: input, shape index: {}]
  %s3 = inlined_call_operand.vmem [shape: f32[2,288,32], index: 3, kind: output, shape index: {}]
  %s4 = sld [smem:[#allocation0]]
  $region45: #{_lambda_.5} parent=0
    _
  %s6 = ssub.s32 1, %s4
  %s7 = scalar_select 0, %s6, %s4
  loop: start=0, step=1, limit=4
  $region2: #{_lambda_.5} parent=0 // loop_pre_header
    _
  $region3: #{_lambda_.5} parent=0 // loop_header
    %s9 = sphi 0, %s13
    %p10 = scmp.ge.s32.totalorder %s9, 4
    %s19 = sphi 0, %s21
    %s22 = sphi 0, %s19
    %s23 = sphi 0, %s22
    %s39 = sphi 0, %s23
    %s45 = sphi 0, %s47
    %s48 = sphi 0, %s45
    %s49 = sphi 0, %s48
    %s65 = sphi 0, %s49
    %s71 = sphi 0, %s73
    %s74 = sphi 0, %s71
    %s75 = sphi 0, %s74
    %s91 = sphi 0, %s75
    %s97 = sphi 0, %s99
    %s100 = sphi 0, %s97
    %s101 = sphi 0, %s100
    %s117 = sphi 0, %s101
  $region4: #{_lambda_.5} parent=0 // loop_header_branch
    %12 = sbr.rel (%p10) target = $region8
  $region5: #{_lambda_.5} parent=0 // loop_body
    %s14 = ssub.s32 %s9, 1
    %s15 = ssub.s32 %s9, 2
    %s16 = sadd.s32 %s9, 1
    %s17 = ssub.s32 %s9, %s16
    %p18 = scmp.eq.s32.totalorder %s17, 0
    %s20 = sadd.s32 %s19, 1
    %s21 = scalar_select %p18, %s19, %s20
    %p24 = pneg %p18
    %p25 = scmp.eq.s32.totalorder %s9, 1
    %p26 = por %p24, %p25
    %p27 = scmp.ne.s32.totalorder %s19, %s22
    %p28 = scmp.eq.s32.totalorder %s9, 0
    %p29 = por %p27, %p28
    %p30 = scmp.ne.s32.totalorder %s19, %s22
    %p31 = scmp.eq.s32.totalorder %s14, 1
    %p32 = por %p30, %p31
    %p33 = scmp.ne.s32.totalorder %s22, %s23
    %p34 = scmp.eq.s32.totalorder %s14, 0
    %p35 = por %p33, %p34
    %p36 = scmp.ne.s32.totalorder %s22, %s23
    %p37 = scmp.eq.s32.totalorder %s15, 1
    %p38 = por %p36, %p37
    %p40 = scmp.ne.s32.totalorder %s23, %s39
    %p41 = scmp.eq.s32.totalorder %s15, 0
    %p42 = por %p40, %p41
    %s43 = ssub.s32 %s9, %s16
    %p44 = scmp.eq.s32.totalorder %s43, 0
    %s46 = sadd.s32 %s45, 1
    %s47 = scalar_select %p44, %s45, %s46
    %p50 = pneg %p44
    %p51 = scmp.eq.s32.totalorder %s9, 1
    %p52 = por %p50, %p51
    %p53 = scmp.ne.s32.totalorder %s45, %s48
    %p54 = scmp.eq.s32.totalorder %s9, 0
    %p55 = por %p53, %p54
    %p56 = scmp.ne.s32.totalorder %s45, %s48
    %p57 = scmp.eq.s32.totalorder %s14, 1
    %p58 = por %p56, %p57
    %p59 = scmp.ne.s32.totalorder %s48, %s49
    %p60 = scmp.eq.s32.totalorder %s14, 0
    %p61 = por %p59, %p60
    %p62 = scmp.ne.s32.totalorder %s48, %s49
    %p63 = scmp.eq.s32.totalorder %s15, 1
    %p64 = por %p62, %p63
    %p66 = scmp.ne.s32.totalorder %s49, %s65
    %p67 = scmp.eq.s32.totalorder %s15, 0
    %p68 = por %p66, %p67
    %s69 = ssub.s32 %s9, %s16
    %p70 = scmp.eq.s32.totalorder %s69, 0
    %s72 = sadd.s32 %s71, 1
    %s73 = scalar_select %p70, %s71, %s72
    %p76 = pneg %p70
    %p77 = scmp.eq.s32.totalorder %s9, 1
    %p78 = por %p76, %p77
    %p79 = scmp.ne.s32.totalorder %s71, %s74
    %p80 = scmp.eq.s32.totalorder %s9, 0
    %p81 = por %p79, %p80
    %p82 = scmp.ne.s32.totalorder %s71, %s74
    %p83 = scmp.eq.s32.totalorder %s14, 1
    %p84 = por %p82, %p83
    %p85 = scmp.ne.s32.totalorder %s74, %s75
    %p86 = scmp.eq.s32.totalorder %s14, 0
    %p87 = por %p85, %p86
    %p88 = scmp.ne.s32.totalorder %s74, %s75
    %p89 = scmp.eq.s32.totalorder %s15, 1
    %p90 = por %p88, %p89
    %p92 = scmp.ne.s32.totalorder %s75, %s91
    %p93 = scmp.eq.s32.totalorder %s15, 0
    %p94 = por %p92, %p93
    %s95 = ssub.s32 %s9, %s16
    %p96 = scmp.eq.s32.totalorder %s95, 0
    %s98 = sadd.s32 %s97, 1
    %s99 = scalar_select %p96, %s97, %s98
    %p102 = pneg %p96
    %p103 = scmp.eq.s32.totalorder %s9, 1
    %p104 = por %p102, %p103
    %p105 = scmp.ne.s32.totalorder %s97, %s100
    %p106 = scmp.eq.s32.totalorder %s9, 0
    %p107 = por %p105, %p106
    %p108 = scmp.ne.s32.totalorder %s97, %s100
    %p109 = scmp.eq.s32.totalorder %s14, 1
    %p110 = por %p108, %p109
    %p111 = scmp.ne.s32.totalorder %s100, %s101
    %p112 = scmp.eq.s32.totalorder %s14, 0
    %p113 = por %p111, %p112
    %p114 = scmp.ne.s32.totalorder %s100, %s101
    %p115 = scmp.eq.s32.totalorder %s15, 1
    %p116 = por %p114, %p115
    %p118 = scmp.ne.s32.totalorder %s101, %s117
    %p119 = scmp.eq.s32.totalorder %s15, 0
    %p120 = por %p118, %p119
    %p121 = scmp.le.s32.totalorder 1, %s9
    %p122 = scmp.lt.s32.totalorder %s9, 3
    %p123 = pnand %p121, %p122
    %p124 = pneg %p123
    // Predicated region
    $region9: #{_lambda_.5} parent=5 // pred_check
      _
    $region10: #{_lambda_.5} parent=5 // pred_check_branch
      %126 = sbr.rel (%p123) target = $region12
    $region11: #{_lambda_.5} parent=5 // pred_region
      %s127 = ssub.s32 %s9, 1
    $region12: #{_lambda_.5} parent=5 // pred_fallthru
      _
    %p128 = scmp.lt.s32.totalorder %s9, 2
    // Predicated region
    $region13: #{_lambda_.5} parent=5 // pred_check
      %p129 = pneg %p128
    $region14: #{_lambda_.5} parent=5 // pred_check_branch
      %131 = sbr.rel (%p129) target = $region16
    $region15: #{_lambda_.5} parent=5 // pred_region
      // Predicated region
      $region17: #{_lambda_.5} parent=15 // pred_check
        %p132 = pneg %p29
      $region18: #{_lambda_.5} parent=15 // pred_check_branch
        %134 = sbr.rel (%p132) target = $region20
      $region19: #{_lambda_.5} parent=15 // pred_region
        %p135 = scmp.lt.s32.totalorder %s9, 1
        %s136 = scalar_select %p135, %s9, 1
        %s137 = smul.addr %s136, 43
        %s138 = smul.addr %s137, 8
        %s139 = scalar_lea.vmem %s0, %s138
      $region20: #{_lambda_.5} parent=15 // pred_fallthru
        _
      // Predicated region
      $region21: #{_lambda_.5} parent=15 // pred_check
        %p140 = pneg %p55
      $region22: #{_lambda_.5} parent=15 // pred_check_branch
        %142 = sbr.rel (%p140) target = $region24
      $region23: #{_lambda_.5} parent=15 // pred_region
        %p143 = scmp.lt.s32.totalorder %s9, 1
        %s144 = scalar_select %p143, %s9, 1
        %s145 = smul.addr %s144, 36
        %s146 = smul.addr %s145, 8
        %s147 = scalar_lea.vmem %s1, %s146
      $region24: #{_lambda_.5} parent=15 // pred_fallthru
        _
      // Predicated region
      $region25: #{_lambda_.5} parent=15 // pred_check
        %p148 = pneg %p81
      $region26: #{_lambda_.5} parent=15 // pred_check_branch
        %150 = sbr.rel (%p148) target = $region28
      $region27: #{_lambda_.5} parent=15 // pred_region
        %p151 = scmp.lt.s32.totalorder %s9, 1
        %s152 = scalar_select %p151, %s9, 1
        %s153 = scalar_lea.vmem %s2, %s152
      $region28: #{_lambda_.5} parent=15 // pred_fallthru
        _
    $region16: #{_lambda_.5} parent=5 // pred_fallthru
      _
    %p154 = scmp.le.s32.totalorder 1, %s9
    %p155 = scmp.lt.s32.totalorder %s9, 3
    %p156 = pnand %p154, %p155
    %p157 = pneg %p156
    // Predicated region
    $region29: #{_lambda_.5} parent=5 // pred_check
      _
    $region30: #{_lambda_.5} parent=5 // pred_check_branch
      %159 = sbr.rel (%p156) target = $region32
    $region31: #{_lambda_.5} parent=5 // pred_region
      %s160 = ssub.s32 %s9, 1
      %p161 = scmp.lt.s32.totalorder %s14, 1
      %s162 = scalar_select %p161, %s14, 1
      %s163 = smul.addr %s162, 43
      %s164 = smul.addr %s163, 8
      %s165 = scalar_lea.vmem %s0, %s164
      %p166 = pneg %p35
      %p167 = pneg %p32
      %p168 = scmp.lt.s32.totalorder %s14, 1
      %s169 = scalar_select %p168, %s14, 1
      %s170 = smul.addr %s169, 36
      %s171 = smul.addr %s170, 8
      %s172 = scalar_lea.vmem %s1, %s171
      %p173 = pneg %p61
      %p174 = pneg %p58
      %p175 = scmp.lt.s32.totalorder %s14, 1
      %s176 = scalar_select %p175, %s14, 1
      %s177 = scalar_lea.vmem %s2, %s176
      %p178 = pneg %p87
      %p179 = pneg %p84
      %p180 = pneg %p113
      %p181 = pneg %p110
      %p182 = scmp.lt.s32.totalorder %s14, 1
      %s183 = scalar_select %p182, %s14, 1
      %s184 = smul.addr %s183, 36
      %s185 = smul.addr %s184, 8
      %s186 = scalar_lea.vmem %s3, %s185
      %p187 = scmp.lt.s32.totalorder %s14, 1
      %s188 = scalar_select %p187, %s14, 1
      %s189 = smul.addr %s188, 43
      %s190 = smul.addr %s189, 8
      %s191 = scalar_lea.vmem %s0, %s190
      %p192 = scmp.lt.s32.totalorder %s14, 1
      %s193 = scalar_select %p192, %s14, 1
      %s194 = smul.addr %s193, 36
      %s195 = smul.addr %s194, 8
      %s196 = scalar_lea.vmem %s1, %s195
      %p197 = scmp.lt.s32.totalorder %s14, 1
      %s198 = scalar_select %p197, %s14, 1
      %s199 = scalar_lea.vmem %s2, %s198
      %p200 = scmp.lt.s32.totalorder %s14, 1
      %s201 = scalar_select %p200, %s14, 1
      %s202 = smul.addr %s201, 36
      %s203 = smul.addr %s202, 8
      %s204 = scalar_lea.vmem %s3, %s203
      %v205 = vld [vmem:[%s191] sm:$0xff]
      %v206 = vld [vmem:[%s191 + $0x8] sm:$0xff]
      %v207 = vld [vmem:[%s191 + $0x10] sm:$0xff]
      %v208 = vld [vmem:[%s191 + $0x18] sm:$0xff]
      %v209 = vld [vmem:[%s191 + $0x20] sm:$0xff]
      %v210 = vld [vmem:[%s191 + $0x28] sm:$0xff]
      %v211 = vld [vmem:[%s191 + $0x30] sm:$0xff]
      %v212 = vld [vmem:[%s191 + $0x38] sm:$0xff]
      %v213 = vld [vmem:[%s191 + $0x40] sm:$0xff]
      %v214 = vld [vmem:[%s191 + $0x48] sm:$0xff]
      %v215 = vld [vmem:[%s191 + $0x50] sm:$0xff]
      %v216 = vld [vmem:[%s191 + $0x58] sm:$0xff]
      %v217 = vld [vmem:[%s191 + $0x60] sm:$0xff]
      %v218 = vld [vmem:[%s191 + $0x68] sm:$0xff]
      %v219 = vld [vmem:[%s191 + $0x70] sm:$0xff]
      %v220 = vld [vmem:[%s191 + $0x78] sm:$0xff]
      %v221 = vld [vmem:[%s191 + $0x80] sm:$0xff]
      %v222 = vld [vmem:[%s191 + $0x88] sm:$0xff]
      %v223 = vld [vmem:[%s191 + $0x90] sm:$0xff]
      %v224 = vld [vmem:[%s191 + $0x98] sm:$0xff]
      %v225 = vld [vmem:[%s191 + $0xa0] sm:$0xff]
      %v226 = vld [vmem:[%s191 + $0xa8] sm:$0xff]
      %v227 = vld [vmem:[%s191 + $0xb0] sm:$0xff]
      %v228 = vld [vmem:[%s191 + $0xb8] sm:$0xff]
      %v229 = vld [vmem:[%s191 + $0xc0] sm:$0xff]
      %v230 = vld [vmem:[%s191 + $0xc8] sm:$0xff]
      %v231 = vld [vmem:[%s191 + $0xd0] sm:$0xff]
      %v232 = vld [vmem:[%s191 + $0xd8] sm:$0xff]
      %v233 = vld [vmem:[%s191 + $0xe0] sm:$0xff]
      %v234 = vld [vmem:[%s191 + $0xe8] sm:$0xff]
      %v235 = vld [vmem:[%s191 + $0xf0] sm:$0xff]
      %v236 = vld [vmem:[%s191 + $0xf8] sm:$0xff]
      %v237 = vld [vmem:[%s191 + $0x100] sm:$0xff]
      %v238 = vld [vmem:[%s191 + $0x108] sm:$0xff]
      %v239 = vld [vmem:[%s191 + $0x110] sm:$0xff]
      %v240 = vld [vmem:[%s191 + $0x118] sm:$0xff]
      %v241 = vld [vmem:[%s196] sm:$0xff]
      %v242 = vld [vmem:[%s196 + $0x8] sm:$0xff]
      %v243 = vld [vmem:[%s196 + $0x10] sm:$0xff]
      %v244 = vld [vmem:[%s196 + $0x18] sm:$0xff]
      %v245 = vld [vmem:[%s191 + $0x1] sm:$0xff]
      %v246 = vld [vmem:[%s191 + $0x9] sm:$0xff]
      %v247 = vld [vmem:[%s191 + $0x11] sm:$0xff]
      %v248 = vld [vmem:[%s191 + $0x19] sm:$0xff]
      %v249 = vld [vmem:[%s191 + $0x21] sm:$0xff]
      %v250 = vld [vmem:[%s191 + $0x29] sm:$0xff]
      %v251 = vld [vmem:[%s191 + $0x31] sm:$0xff]
      %v252 = vld [vmem:[%s191 + $0x39] sm:$0xff]
      %v253 = vld [vmem:[%s191 + $0x41] sm:$0xff]
      %v254 = vld [vmem:[%s191 + $0x49] sm:$0xff]
      %v255 = vld [vmem:[%s191 + $0x51] sm:$0xff]
      %v256 = vld [vmem:[%s191 + $0x59] sm:$0xff]
      %v257 = vld [vmem:[%s191 + $0x61] sm:$0xff]
      %v258 = vld [vmem:[%s191 + $0x69] sm:$0xff]
      %v259 = vld [vmem:[%s191 + $0x71] sm:$0xff]
      %v260 = vld [vmem:[%s191 + $0x79] sm:$0xff]
      %v261 = vld [vmem:[%s191 + $0x81] sm:$0xff]
      %v262 = vld [vmem:[%s191 + $0x89] sm:$0xff]
      %v263 = vld [vmem:[%s191 + $0x91] sm:$0xff]
      %v264 = vld [vmem:[%s191 + $0x99] sm:$0xff]
      %v265 = vld [vmem:[%s191 + $0xa1] sm:$0xff]
      %v266 = vld [vmem:[%s191 + $0xa9] sm:$0xff]
      %v267 = vld [vmem:[%s191 + $0xb1] sm:$0xff]
      %v268 = vld [vmem:[%s191 + $0xb9] sm:$0xff]
      %v269 = vld [vmem:[%s191 + $0xc1] sm:$0xff]
      %v270 = vld [vmem:[%s191 + $0xc9] sm:$0xff]
      %v271 = vld [vmem:[%s191 + $0xd1] sm:$0xff]
      %v272 = vld [vmem:[%s191 + $0xd9] sm:$0xff]
      %v273 = vld [vmem:[%s191 + $0xe1] sm:$0xff]
      %v274 = vld [vmem:[%s191 + $0xe9] sm:$0xff]
      %v275 = vld [vmem:[%s191 + $0xf1] sm:$0xff]
      %v276 = vld [vmem:[%s191 + $0xf9] sm:$0xff]
      %v277 = vld [vmem:[%s191 + $0x101] sm:$0xff]
      %v278 = vld [vmem:[%s191 + $0x109] sm:$0xff]
      %v279 = vld [vmem:[%s191 + $0x111] sm:$0xff]
      %v280 = vld [vmem:[%s191 + $0x119] sm:$0xff]
      %s281 = scalar_lea.vmem %s196, 32
      %v282 = vld [vmem:[%s281] sm:$0xff]
      %v283 = vld [vmem:[%s281 + $0x8] sm:$0xff]
      %v284 = vld [vmem:[%s281 + $0x10] sm:$0xff]
      %v285 = vld [vmem:[%s281 + $0x18] sm:$0xff]
      %vm286 = vcmask 261120
      %v288 = vsel %vm286, %v245, 0
      %v291 = vsel %vm286, %v246, 0
      %v294 = vsel %vm286, %v247, 0
      %v297 = vsel %vm286, %v248, 0
      %v300 = vsel %vm286, %v249, 0
      %v303 = vsel %vm286, %v250, 0
      %v306 = vsel %vm286, %v251, 0
      %v309 = vsel %vm286, %v252, 0
      %v312 = vsel %vm286, %v253, 0
      %v315 = vsel %vm286, %v254, 0
      %v318 = vsel %vm286, %v255, 0
      %v321 = vsel %vm286, %v256, 0
      %v324 = vsel %vm286, %v257, 0
      %v327 = vsel %vm286, %v258, 0
      %v330 = vsel %vm286, %v259, 0
      %v333 = vsel %vm286, %v260, 0
      %v336 = vsel %vm286, %v261, 0
      %v339 = vsel %vm286, %v262, 0
      %v342 = vsel %vm286, %v263, 0
      %v345 = vsel %vm286, %v264, 0
      %v348 = vsel %vm286, %v265, 0
      %v351 = vsel %vm286, %v266, 0
      %v354 = vsel %vm286, %v267, 0
      %v357 = vsel %vm286, %v268, 0
      %v360 = vsel %vm286, %v269, 0
      %v363 = vsel %vm286, %v270, 0
      %v366 = vsel %vm286, %v271, 0
      %v369 = vsel %vm286, %v272, 0
      %v372 = vsel %vm286, %v273, 0
      %v375 = vsel %vm286, %v274, 0
      %v378 = vsel %vm286, %v275, 0
      %v381 = vsel %vm286, %v276, 0
      %v384 = vsel %vm286, %v277, 0
      %v387 = vsel %vm286, %v278, 0
      %v390 = vsel %vm286, %v279, 0
      %v393 = vsel %vm286, %v280, 0
      %395 = vmatpush.msra.mxu0 0.0
      %396 = vmatpush.msra.mxu0 0.0
      %397 = vmatpush.msra.mxu0 0.0
      %398 = vmatpush.msra.mxu0 0.0
      %399 = vmatpush.msra.mxu0 0.0
      %400 = vmatpush.msra.mxu0 0.0
      %401 = vmatpush.msra.mxu0 0.0
      %402 = vmatpush.msra.mxu0 0.0
      %403 = vmatpush.msra.mxu0 0.0
      %404 = vmatpush.msra.mxu0 0.0
      %405 = vmatpush.msra.mxu0 0.0
      %406 = vmatpush.msra.mxu0 0.0
      %407 = vmatpush.msra.mxu0 %v285
      %408 = vmatpush.msra.mxu0 %v284
      %409 = vmatpush.msra.mxu0 %v283
      %410 = vmatpush.msra.mxu0 %v282
      %411 = vmatmul.f32.gmra.mxu0 %v288
      %v412 = vpop.f32.mrf.mxu0
      %v413 = vadd.f32 0.0, %v412
      %414 = vmatmul.f32.gmra.mxu0 %v291
      %v415 = vpop.f32.mrf.mxu0
      %v416 = vadd.f32 0.0, %v415
      %417 = vmatmul.f32.gmra.mxu0 %v294
      %v418 = vpop.f32.mrf.mxu0
      %v419 = vadd.f32 0.0, %v418
      %420 = vmatmul.f32.gmra.mxu0 %v297
      %v421 = vpop.f32.mrf.mxu0
      %v422 = vadd.f32 0.0, %v421
      %423 = vmatmul.f32.gmra.mxu0 %v300
      %v424 = vpop.f32.mrf.mxu0
      %v425 = vadd.f32 0.0, %v424
      %426 = vmatmul.f32.gmra.mxu0 %v303
      %v427 = vpop.f32.mrf.mxu0
      %v428 = vadd.f32 0.0, %v427
      %429 = vmatmul.f32.gmra.mxu0 %v306
      %v430 = vpop.f32.mrf.mxu0
      %v431 = vadd.f32 0.0, %v430
      %432 = vmatmul.f32.gmra.mxu0 %v309
      %v433 = vpop.f32.mrf.mxu0
      %v434 = vadd.f32 0.0, %v433
      %435 = vmatmul.f32.gmra.mxu0 %v312
      %v436 = vpop.f32.mrf.mxu0
      %v437 = vadd.f32 0.0, %v436
      %438 = vmatmul.f32.gmra.mxu0 %v315
      %v439 = vpop.f32.mrf.mxu0
      %v440 = vadd.f32 0.0, %v439
      %441 = vmatmul.f32.gmra.mxu0 %v318
      %v442 = vpop.f32.mrf.mxu0
      %v443 = vadd.f32 0.0, %v442
      %444 = vmatmul.f32.gmra.mxu0 %v321
      %v445 = vpop.f32.mrf.mxu0
      %v446 = vadd.f32 0.0, %v445
      %447 = vmatmul.f32.gmra.mxu0 %v324
      %v448 = vpop.f32.mrf.mxu0
      %v449 = vadd.f32 0.0, %v448
      %450 = vmatmul.f32.gmra.mxu0 %v327
      %v451 = vpop.f32.mrf.mxu0
      %v452 = vadd.f32 0.0, %v451
      %453 = vmatmul.f32.gmra.mxu0 %v330
      %v454 = vpop.f32.mrf.mxu0
      %v455 = vadd.f32 0.0, %v454
      %456 = vmatmul.f32.gmra.mxu0 %v333
      %v457 = vpop.f32.mrf.mxu0
      %v458 = vadd.f32 0.0, %v457
      %459 = vmatmul.f32.gmra.mxu0 %v336
      %v460 = vpop.f32.mrf.mxu0
      %v461 = vadd.f32 0.0, %v460
      %462 = vmatmul.f32.gmra.mxu0 %v339
      %v463 = vpop.f32.mrf.mxu0
      %v464 = vadd.f32 0.0, %v463
      %465 = vmatmul.f32.gmra.mxu0 %v342
      %v466 = vpop.f32.mrf.mxu0
      %v467 = vadd.f32 0.0, %v466
      %468 = vmatmul.f32.gmra.mxu0 %v345
      %v469 = vpop.f32.mrf.mxu0
      %v470 = vadd.f32 0.0, %v469
      %471 = vmatmul.f32.gmra.mxu0 %v348
      %v472 = vpop.f32.mrf.mxu0
      %v473 = vadd.f32 0.0, %v472
      %474 = vmatmul.f32.gmra.mxu0 %v351
      %v475 = vpop.f32.mrf.mxu0
      %v476 = vadd.f32 0.0, %v475
      %477 = vmatmul.f32.gmra.mxu0 %v354
      %v478 = vpop.f32.mrf.mxu0
      %v479 = vadd.f32 0.0, %v478
      %480 = vmatmul.f32.gmra.mxu0 %v357
      %v481 = vpop.f32.mrf.mxu0
      %v482 = vadd.f32 0.0, %v481
      %483 = vmatmul.f32.gmra.mxu0 %v360
      %v484 = vpop.f32.mrf.mxu0
      %v485 = vadd.f32 0.0, %v484
      %486 = vmatmul.f32.gmra.mxu0 %v363
      %v487 = vpop.f32.mrf.mxu0
      %v488 = vadd.f32 0.0, %v487
      %489 = vmatmul.f32.gmra.mxu0 %v366
      %v490 = vpop.f32.mrf.mxu0
      %v491 = vadd.f32 0.0, %v490
      %492 = vmatmul.f32.gmra.mxu0 %v369
      %v493 = vpop.f32.mrf.mxu0
      %v494 = vadd.f32 0.0, %v493
      %495 = vmatmul.f32.gmra.mxu0 %v372
      %v496 = vpop.f32.mrf.mxu0
      %v497 = vadd.f32 0.0, %v496
      %498 = vmatmul.f32.gmra.mxu0 %v375
      %v499 = vpop.f32.mrf.mxu0
      %v500 = vadd.f32 0.0, %v499
      %501 = vmatmul.f32.gmra.mxu0 %v378
      %v502 = vpop.f32.mrf.mxu0
      %v503 = vadd.f32 0.0, %v502
      %504 = vmatmul.f32.gmra.mxu0 %v381
      %v505 = vpop.f32.mrf.mxu0
      %v506 = vadd.f32 0.0, %v505
      %507 = vmatmul.f32.gmra.mxu0 %v384
      %v508 = vpop.f32.mrf.mxu0
      %v509 = vadd.f32 0.0, %v508
      %510 = vmatmul.f32.gmra.mxu0 %v387
      %v511 = vpop.f32.mrf.mxu0
      %v512 = vadd.f32 0.0, %v511
      %513 = vmatmul.f32.gmra.mxu0 %v390
      %v514 = vpop.f32.mrf.mxu0
      %v515 = vadd.f32 0.0, %v514
      %516 = vmatmul.f32.gmra.mxu0 %v393
      %v517 = vpop.f32.mrf.mxu0
      %v518 = vadd.f32 0.0, %v517
      %519 = vdwg.mxu0
      %v521 = vsel %vm286, %v205, 0
      %v524 = vsel %vm286, %v206, 0
      %v527 = vsel %vm286, %v207, 0
      %v530 = vsel %vm286, %v208, 0
      %v533 = vsel %vm286, %v209, 0
      %v536 = vsel %vm286, %v210, 0
      %v539 = vsel %vm286, %v211, 0
      %v542 = vsel %vm286, %v212, 0
      %v545 = vsel %vm286, %v213, 0
      %v548 = vsel %vm286, %v214, 0
      %v551 = vsel %vm286, %v215, 0
      %v554 = vsel %vm286, %v216, 0
      %v557 = vsel %vm286, %v217, 0
      %v560 = vsel %vm286, %v218, 0
      %v563 = vsel %vm286, %v219, 0
      %v566 = vsel %vm286, %v220, 0
      %v569 = vsel %vm286, %v221, 0
      %v572 = vsel %vm286, %v222, 0
      %v575 = vsel %vm286, %v223, 0
      %v578 = vsel %vm286, %v224, 0
      %v581 = vsel %vm286, %v225, 0
      %v584 = vsel %vm286, %v226, 0
      %v587 = vsel %vm286, %v227, 0
      %v590 = vsel %vm286, %v228, 0
      %v593 = vsel %vm286, %v229, 0
      %v596 = vsel %vm286, %v230, 0
      %v599 = vsel %vm286, %v231, 0
      %v602 = vsel %vm286, %v232, 0
      %v605 = vsel %vm286, %v233, 0
      %v608 = vsel %vm286, %v234, 0
      %v611 = vsel %vm286, %v235, 0
      %v614 = vsel %vm286, %v236, 0
      %v617 = vsel %vm286, %v237, 0
      %v620 = vsel %vm286, %v238, 0
      %v623 = vsel %vm286, %v239, 0
      %v626 = vsel %vm286, %v240, 0
      %628 = vmatpush.msra.mxu0 0.0
      %629 = vmatpush.msra.mxu0 0.0
      %630 = vmatpush.msra.mxu0 0.0
      %631 = vmatpush.msra.mxu0 0.0
      %632 = vmatpush.msra.mxu0 0.0
      %633 = vmatpush.msra.mxu0 0.0
      %634 = vmatpush.msra.mxu0 0.0
      %635 = vmatpush.msra.mxu0 0.0
      %636 = vmatpush.msra.mxu0 0.0
      %637 = vmatpush.msra.mxu0 0.0
      %638 = vmatpush.msra.mxu0 0.0
      %639 = vmatpush.msra.mxu0 0.0
      %640 = vmatpush.msra.mxu0 %v244
      %641 = vmatpush.msra.mxu0 %v243
      %642 = vmatpush.msra.mxu0 %v242
      %643 = vmatpush.msra.mxu0 %v241
      %644 = vmatmul.f32.gmra.mxu0 %v521
      %v645 = vpop.f32.mrf.mxu0
      %v646 = vadd.f32 %v413, %v645
      %647 = vmatmul.f32.gmra.mxu0 %v524
      %v648 = vpop.f32.mrf.mxu0
      %v649 = vadd.f32 %v416, %v648
      %650 = vmatmul.f32.gmra.mxu0 %v527
      %v651 = vpop.f32.mrf.mxu0
      %v652 = vadd.f32 %v419, %v651
      %653 = vmatmul.f32.gmra.mxu0 %v530
      %v654 = vpop.f32.mrf.mxu0
      %v655 = vadd.f32 %v422, %v654
      %656 = vmatmul.f32.gmra.mxu0 %v533
      %v657 = vpop.f32.mrf.mxu0
      %v658 = vadd.f32 %v425, %v657
      %659 = vmatmul.f32.gmra.mxu0 %v536
      %v660 = vpop.f32.mrf.mxu0
      %v661 = vadd.f32 %v428, %v660
      %662 = vmatmul.f32.gmra.mxu0 %v539
      %v663 = vpop.f32.mrf.mxu0
      %v664 = vadd.f32 %v431, %v663
      %665 = vmatmul.f32.gmra.mxu0 %v542
      %v666 = vpop.f32.mrf.mxu0
      %v667 = vadd.f32 %v434, %v666
      %668 = vmatmul.f32.gmra.mxu0 %v545
      %v669 = vpop.f32.mrf.mxu0
      %v670 = vadd.f32 %v437, %v669
      %671 = vmatmul.f32.gmra.mxu0 %v548
      %v672 = vpop.f32.mrf.mxu0
      %v673 = vadd.f32 %v440, %v672
      %674 = vmatmul.f32.gmra.mxu0 %v551
      %v675 = vpop.f32.mrf.mxu0
      %v676 = vadd.f32 %v443, %v675
      %677 = vmatmul.f32.gmra.mxu0 %v554
      %v678 = vpop.f32.mrf.mxu0
      %v679 = vadd.f32 %v446, %v678
      %680 = vmatmul.f32.gmra.mxu0 %v557
      %v681 = vpop.f32.mrf.mxu0
      %v682 = vadd.f32 %v449, %v681
      %683 = vmatmul.f32.gmra.mxu0 %v560
      %v684 = vpop.f32.mrf.mxu0
      %v685 = vadd.f32 %v452, %v684
      %686 = vmatmul.f32.gmra.mxu0 %v563
      %v687 = vpop.f32.mrf.mxu0
      %v688 = vadd.f32 %v455, %v687
      %689 = vmatmul.f32.gmra.mxu0 %v566
      %v690 = vpop.f32.mrf.mxu0
      %v691 = vadd.f32 %v458, %v690
      %692 = vmatmul.f32.gmra.mxu0 %v569
      %v693 = vpop.f32.mrf.mxu0
      %v694 = vadd.f32 %v461, %v693
      %695 = vmatmul.f32.gmra.mxu0 %v572
      %v696 = vpop.f32.mrf.mxu0
      %v697 = vadd.f32 %v464, %v696
      %698 = vmatmul.f32.gmra.mxu0 %v575
      %v699 = vpop.f32.mrf.mxu0
      %v700 = vadd.f32 %v467, %v699
      %701 = vmatmul.f32.gmra.mxu0 %v578
      %v702 = vpop.f32.mrf.mxu0
      %v703 = vadd.f32 %v470, %v702
      %704 = vmatmul.f32.gmra.mxu0 %v581
      %v705 = vpop.f32.mrf.mxu0
      %v706 = vadd.f32 %v473, %v705
      %707 = vmatmul.f32.gmra.mxu0 %v584
      %v708 = vpop.f32.mrf.mxu0
      %v709 = vadd.f32 %v476, %v708
      %710 = vmatmul.f32.gmra.mxu0 %v587
      %v711 = vpop.f32.mrf.mxu0
      %v712 = vadd.f32 %v479, %v711
      %713 = vmatmul.f32.gmra.mxu0 %v590
      %v714 = vpop.f32.mrf.mxu0
      %v715 = vadd.f32 %v482, %v714
      %716 = vmatmul.f32.gmra.mxu0 %v593
      %v717 = vpop.f32.mrf.mxu0
      %v718 = vadd.f32 %v485, %v717
      %719 = vmatmul.f32.gmra.mxu0 %v596
      %v720 = vpop.f32.mrf.mxu0
      %v721 = vadd.f32 %v488, %v720
      %722 = vmatmul.f32.gmra.mxu0 %v599
      %v723 = vpop.f32.mrf.mxu0
      %v724 = vadd.f32 %v491, %v723
      %725 = vmatmul.f32.gmra.mxu0 %v602
      %v726 = vpop.f32.mrf.mxu0
      %v727 = vadd.f32 %v494, %v726
      %728 = vmatmul.f32.gmra.mxu0 %v605
      %v729 = vpop.f32.mrf.mxu0
      %v730 = vadd.f32 %v497, %v729
      %731 = vmatmul.f32.gmra.mxu0 %v608
      %v732 = vpop.f32.mrf.mxu0
      %v733 = vadd.f32 %v500, %v732
      %734 = vmatmul.f32.gmra.mxu0 %v611
      %v735 = vpop.f32.mrf.mxu0
      %v736 = vadd.f32 %v503, %v735
      %737 = vmatmul.f32.gmra.mxu0 %v614
      %v738 = vpop.f32.mrf.mxu0
      %v739 = vadd.f32 %v506, %v738
      %740 = vmatmul.f32.gmra.mxu0 %v617
      %v741 = vpop.f32.mrf.mxu0
      %v742 = vadd.f32 %v509, %v741
      %743 = vmatmul.f32.gmra.mxu0 %v620
      %v744 = vpop.f32.mrf.mxu0
      %v745 = vadd.f32 %v512, %v744
      %746 = vmatmul.f32.gmra.mxu0 %v623
      %v747 = vpop.f32.mrf.mxu0
      %v748 = vadd.f32 %v515, %v747
      %749 = vmatmul.f32.gmra.mxu0 %v626
      %v750 = vpop.f32.mrf.mxu0
      %v751 = vadd.f32 %v518, %v750
      %752 = vdwg.mxu0
      %v753 = vld [vmem:[%s191 + $0x2] sm:$0xff]
      %v754 = vld [vmem:[%s191 + $0xa] sm:$0xff]
      %v755 = vld [vmem:[%s191 + $0x12] sm:$0xff]
      %v756 = vld [vmem:[%s191 + $0x1a] sm:$0xff]
      %v757 = vld [vmem:[%s191 + $0x22] sm:$0xff]
      %v758 = vld [vmem:[%s191 + $0x2a] sm:$0xff]
      %v759 = vld [vmem:[%s191 + $0x32] sm:$0xff]
      %v760 = vld [vmem:[%s191 + $0x3a] sm:$0xff]
      %v761 = vld [vmem:[%s191 + $0x42] sm:$0xff]
      %v762 = vld [vmem:[%s191 + $0x4a] sm:$0xff]
      %v763 = vld [vmem:[%s191 + $0x52] sm:$0xff]
      %v764 = vld [vmem:[%s191 + $0x5a] sm:$0xff]
      %v765 = vld [vmem:[%s191 + $0x62] sm:$0xff]
      %v766 = vld [vmem:[%s191 + $0x6a] sm:$0xff]
      %v767 = vld [vmem:[%s191 + $0x72] sm:$0xff]
      %v768 = vld [vmem:[%s191 + $0x7a] sm:$0xff]
      %v769 = vld [vmem:[%s191 + $0x82] sm:$0xff]
      %v770 = vld [vmem:[%s191 + $0x8a] sm:$0xff]
      %v771 = vld [vmem:[%s191 + $0x92] sm:$0xff]
      %v772 = vld [vmem:[%s191 + $0x9a] sm:$0xff]
      %v773 = vld [vmem:[%s191 + $0xa2] sm:$0xff]
      %v774 = vld [vmem:[%s191 + $0xaa] sm:$0xff]
      %v775 = vld [vmem:[%s191 + $0xb2] sm:$0xff]
      %v776 = vld [vmem:[%s191 + $0xba] sm:$0xff]
      %v777 = vld [vmem:[%s191 + $0xc2] sm:$0xff]
      %v778 = vld [vmem:[%s191 + $0xca] sm:$0xff]
      %v779 = vld [vmem:[%s191 + $0xd2] sm:$0xff]
      %v780 = vld [vmem:[%s191 + $0xda] sm:$0xff]
      %v781 = vld [vmem:[%s191 + $0xe2] sm:$0xff]
      %v782 = vld [vmem:[%s191 + $0xea] sm:$0xff]
      %v783 = vld [vmem:[%s191 + $0xf2] sm:$0xff]
      %v784 = vld [vmem:[%s191 + $0xfa] sm:$0xff]
      %v785 = vld [vmem:[%s191 + $0x102] sm:$0xff]
      %v786 = vld [vmem:[%s191 + $0x10a] sm:$0xff]
      %v787 = vld [vmem:[%s191 + $0x112] sm:$0xff]
      %v788 = vld [vmem:[%s191 + $0x11a] sm:$0xff]
      %s789 = scalar_lea.vmem %s196, 64
      %v790 = vld [vmem:[%s789] sm:$0xff]
      %v791 = vld [vmem:[%s789 + $0x8] sm:$0xff]
      %v792 = vld [vmem:[%s789 + $0x10] sm:$0xff]
      %v793 = vld [vmem:[%s789 + $0x18] sm:$0xff]
      %v795 = vsel %vm286, %v753, 0
      %v798 = vsel %vm286, %v754, 0
      %v801 = vsel %vm286, %v755, 0
      %v804 = vsel %vm286, %v756, 0
      %v807 = vsel %vm286, %v757, 0
      %v810 = vsel %vm286, %v758, 0
      %v813 = vsel %vm286, %v759, 0
      %v816 = vsel %vm286, %v760, 0
      %v819 = vsel %vm286, %v761, 0
      %v822 = vsel %vm286, %v762, 0
      %v825 = vsel %vm286, %v763, 0
      %v828 = vsel %vm286, %v764, 0
      %v831 = vsel %vm286, %v765, 0
      %v834 = vsel %vm286, %v766, 0
      %v837 = vsel %vm286, %v767, 0
      %v840 = vsel %vm286, %v768, 0
      %v843 = vsel %vm286, %v769, 0
      %v846 = vsel %vm286, %v770, 0
      %v849 = vsel %vm286, %v771, 0
      %v852 = vsel %vm286, %v772, 0
      %v855 = vsel %vm286, %v773, 0
      %v858 = vsel %vm286, %v774, 0
      %v861 = vsel %vm286, %v775, 0
      %v864 = vsel %vm286, %v776, 0
      %v867 = vsel %vm286, %v777, 0
      %v870 = vsel %vm286, %v778, 0
      %v873 = vsel %vm286, %v779, 0
      %v876 = vsel %vm286, %v780, 0
      %v879 = vsel %vm286, %v781, 0
      %v882 = vsel %vm286, %v782, 0
      %v885 = vsel %vm286, %v783, 0
      %v888 = vsel %vm286, %v784, 0
      %v891 = vsel %vm286, %v785, 0
      %v894 = vsel %vm286, %v786, 0
      %v897 = vsel %vm286, %v787, 0
      %v900 = vsel %vm286, %v788, 0
      %902 = vmatpush.msra.mxu0 0.0
      %903 = vmatpush.msra.mxu0 0.0
      %904 = vmatpush.msra.mxu0 0.0
      %905 = vmatpush.msra.mxu0 0.0
      %906 = vmatpush.msra.mxu0 0.0
      %907 = vmatpush.msra.mxu0 0.0
      %908 = vmatpush.msra.mxu0 0.0
      %909 = vmatpush.msra.mxu0 0.0
      %910 = vmatpush.msra.mxu0 0.0
      %911 = vmatpush.msra.mxu0 0.0
      %912 = vmatpush.msra.mxu0 0.0
      %913 = vmatpush.msra.mxu0 0.0
      %914 = vmatpush.msra.mxu0 %v793
      %915 = vmatpush.msra.mxu0 %v792
      %916 = vmatpush.msra.mxu0 %v791
      %917 = vmatpush.msra.mxu0 %v790
      %918 = vmatmul.f32.gmra.mxu0 %v795
      %v919 = vpop.f32.mrf.mxu0
      %v920 = vadd.f32 0.0, %v919
      %921 = vmatmul.f32.gmra.mxu0 %v798
      %v922 = vpop.f32.mrf.mxu0
      %v923 = vadd.f32 0.0, %v922
      %924 = vmatmul.f32.gmra.mxu0 %v801
      %v925 = vpop.f32.mrf.mxu0
      %v926 = vadd.f32 0.0, %v925
      %927 = vmatmul.f32.gmra.mxu0 %v804
      %v928 = vpop.f32.mrf.mxu0
      %v929 = vadd.f32 0.0, %v928
      %930 = vmatmul.f32.gmra.mxu0 %v807
      %v931 = vpop.f32.mrf.mxu0
      %v932 = vadd.f32 0.0, %v931
      %933 = vmatmul.f32.gmra.mxu0 %v810
      %v934 = vpop.f32.mrf.mxu0
      %v935 = vadd.f32 0.0, %v934
      %936 = vmatmul.f32.gmra.mxu0 %v813
      %v937 = vpop.f32.mrf.mxu0
      %v938 = vadd.f32 0.0, %v937
      %939 = vmatmul.f32.gmra.mxu0 %v816
      %v940 = vpop.f32.mrf.mxu0
      %v941 = vadd.f32 0.0, %v940
      %942 = vmatmul.f32.gmra.mxu0 %v819
      %v943 = vpop.f32.mrf.mxu0
      %v944 = vadd.f32 0.0, %v943
      %945 = vmatmul.f32.gmra.mxu0 %v822
      %v946 = vpop.f32.mrf.mxu0
      %v947 = vadd.f32 0.0, %v946
      %948 = vmatmul.f32.gmra.mxu0 %v825
      %v949 = vpop.f32.mrf.mxu0
      %v950 = vadd.f32 0.0, %v949
      %951 = vmatmul.f32.gmra.mxu0 %v828
      %v952 = vpop.f32.mrf.mxu0
      %v953 = vadd.f32 0.0, %v952
      %954 = vmatmul.f32.gmra.mxu0 %v831
      %v955 = vpop.f32.mrf.mxu0
      %v956 = vadd.f32 0.0, %v955
      %957 = vmatmul.f32.gmra.mxu0 %v834
      %v958 = vpop.f32.mrf.mxu0
      %v959 = vadd.f32 0.0, %v958
      %960 = vmatmul.f32.gmra.mxu0 %v837
      %v961 = vpop.f32.mrf.mxu0
      %v962 = vadd.f32 0.0, %v961
      %963 = vmatmul.f32.gmra.mxu0 %v840
      %v964 = vpop.f32.mrf.mxu0
      %v965 = vadd.f32 0.0, %v964
      %966 = vmatmul.f32.gmra.mxu0 %v843
      %v967 = vpop.f32.mrf.mxu0
      %v968 = vadd.f32 0.0, %v967
      %969 = vmatmul.f32.gmra.mxu0 %v846
      %v970 = vpop.f32.mrf.mxu0
      %v971 = vadd.f32 0.0, %v970
      %972 = vmatmul.f32.gmra.mxu0 %v849
      %v973 = vpop.f32.mrf.mxu0
      %v974 = vadd.f32 0.0, %v973
      %975 = vmatmul.f32.gmra.mxu0 %v852
      %v976 = vpop.f32.mrf.mxu0
      %v977 = vadd.f32 0.0, %v976
      %978 = vmatmul.f32.gmra.mxu0 %v855
      %v979 = vpop.f32.mrf.mxu0
      %v980 = vadd.f32 0.0, %v979
      %981 = vmatmul.f32.gmra.mxu0 %v858
      %v982 = vpop.f32.mrf.mxu0
      %v983 = vadd.f32 0.0, %v982
      %984 = vmatmul.f32.gmra.mxu0 %v861
      %v985 = vpop.f32.mrf.mxu0
      %v986 = vadd.f32 0.0, %v985
      %987 = vmatmul.f32.gmra.mxu0 %v864
      %v988 = vpop.f32.mrf.mxu0
      %v989 = vadd.f32 0.0, %v988
      %990 = vmatmul.f32.gmra.mxu0 %v867
      %v991 = vpop.f32.mrf.mxu0
      %v992 = vadd.f32 0.0, %v991
      %993 = vmatmul.f32.gmra.mxu0 %v870
      %v994 = vpop.f32.mrf.mxu0
      %v995 = vadd.f32 0.0, %v994
      %996 = vmatmul.f32.gmra.mxu0 %v873
      %v997 = vpop.f32.mrf.mxu0
      %v998 = vadd.f32 0.0, %v997
      %999 = vmatmul.f32.gmra.mxu0 %v876
      %v1000 = vpop.f32.mrf.mxu0
      %v1001 = vadd.f32 0.0, %v1000
      %1002 = vmatmul.f32.gmra.mxu0 %v879
      %v1003 = vpop.f32.mrf.mxu0
      %v1004 = vadd.f32 0.0, %v1003
      %1005 = vmatmul.f32.gmra.mxu0 %v882
      %v1006 = vpop.f32.mrf.mxu0
      %v1007 = vadd.f32 0.0, %v1006
      %1008 = vmatmul.f32.gmra.mxu0 %v885
      %v1009 = vpop.f32.mrf.mxu0
      %v1010 = vadd.f32 0.0, %v1009
      %1011 = vmatmul.f32.gmra.mxu0 %v888
      %v1012 = vpop.f32.mrf.mxu0
      %v1013 = vadd.f32 0.0, %v1012
      %1014 = vmatmul.f32.gmra.mxu0 %v891
      %v1015 = vpop.f32.mrf.mxu0
      %v1016 = vadd.f32 0.0, %v1015
      %1017 = vmatmul.f32.gmra.mxu0 %v894
      %v1018 = vpop.f32.mrf.mxu0
      %v1019 = vadd.f32 0.0, %v1018
      %1020 = vmatmul.f32.gmra.mxu0 %v897
      %v1021 = vpop.f32.mrf.mxu0
      %v1022 = vadd.f32 0.0, %v1021
      %1023 = vmatmul.f32.gmra.mxu0 %v900
      %v1024 = vpop.f32.mrf.mxu0
      %v1025 = vadd.f32 0.0, %v1024
      %1026 = vdwg.mxu0
      %v1027 = vadd.f32 %v646, %v920
      %v1028 = vadd.f32 %v649, %v923
      %v1029 = vadd.f32 %v652, %v926
      %v1030 = vadd.f32 %v655, %v929
      %v1031 = vadd.f32 %v658, %v932
      %v1032 = vadd.f32 %v661, %v935
      %v1033 = vadd.f32 %v664, %v938
      %v1034 = vadd.f32 %v667, %v941
      %v1035 = vadd.f32 %v670, %v944
      %v1036 = vadd.f32 %v673, %v947
      %v1037 = vadd.f32 %v676, %v950
      %v1038 = vadd.f32 %v679, %v953
      %v1039 = vadd.f32 %v682, %v956
      %v1040 = vadd.f32 %v685, %v959
      %v1041 = vadd.f32 %v688, %v962
      %v1042 = vadd.f32 %v691, %v965
      %v1043 = vadd.f32 %v694, %v968
      %v1044 = vadd.f32 %v697, %v971
      %v1045 = vadd.f32 %v700, %v974
      %v1046 = vadd.f32 %v703, %v977
      %v1047 = vadd.f32 %v706, %v980
      %v1048 = vadd.f32 %v709, %v983
      %v1049 = vadd.f32 %v712, %v986
      %v1050 = vadd.f32 %v715, %v989
      %v1051 = vadd.f32 %v718, %v992
      %v1052 = vadd.f32 %v721, %v995
      %v1053 = vadd.f32 %v724, %v998
      %v1054 = vadd.f32 %v727, %v1001
      %v1055 = vadd.f32 %v730, %v1004
      %v1056 = vadd.f32 %v733, %v1007
      %v1057 = vadd.f32 %v736, %v1010
      %v1058 = vadd.f32 %v739, %v1013
      %v1059 = vadd.f32 %v742, %v1016
      %v1060 = vadd.f32 %v745, %v1019
      %v1061 = vadd.f32 %v748, %v1022
      %v1062 = vadd.f32 %v751, %v1025
      %v1063 = vld [vmem:[%s191 + $0x12] sm:$0xff]
      %v1064 = vld [vmem:[%s191 + $0x1a] sm:$0xff]
      %v1065 = vld [vmem:[%s191 + $0x22] sm:$0xff]
      %v1066 = vld [vmem:[%s191 + $0x2a] sm:$0xff]
      %v1067 = vld [vmem:[%s191 + $0x32] sm:$0xff]
      %v1068 = vld [vmem:[%s191 + $0x3a] sm:$0xff]
      %v1069 = vld [vmem:[%s191 + $0x42] sm:$0xff]
      %v1070 = vld [vmem:[%s191 + $0x4a] sm:$0xff]
      %v1071 = vld [vmem:[%s191 + $0x52] sm:$0xff]
      %v1072 = vld [vmem:[%s191 + $0x5a] sm:$0xff]
      %v1073 = vld [vmem:[%s191 + $0x62] sm:$0xff]
      %v1074 = vld [vmem:[%s191 + $0x6a] sm:$0xff]
      %v1075 = vld [vmem:[%s191 + $0x72] sm:$0xff]
      %v1076 = vld [vmem:[%s191 + $0x7a] sm:$0xff]
      %v1077 = vld [vmem:[%s191 + $0x82] sm:$0xff]
      %v1078 = vld [vmem:[%s191 + $0x8a] sm:$0xff]
      %v1079 = vld [vmem:[%s191 + $0x92] sm:$0xff]
      %v1080 = vld [vmem:[%s191 + $0x9a] sm:$0xff]
      %v1081 = vld [vmem:[%s191 + $0xa2] sm:$0xff]
      %v1082 = vld [vmem:[%s191 + $0xaa] sm:$0xff]
      %v1083 = vld [vmem:[%s191 + $0xb2] sm:$0xff]
      %v1084 = vld [vmem:[%s191 + $0xba] sm:$0xff]
      %v1085 = vld [vmem:[%s191 + $0xc2] sm:$0xff]
      %v1086 = vld [vmem:[%s191 + $0xca] sm:$0xff]
      %v1087 = vld [vmem:[%s191 + $0xd2] sm:$0xff]
      %v1088 = vld [vmem:[%s191 + $0xda] sm:$0xff]
      %v1089 = vld [vmem:[%s191 + $0xe2] sm:$0xff]
      %v1090 = vld [vmem:[%s191 + $0xea] sm:$0xff]
      %v1091 = vld [vmem:[%s191 + $0xf2] sm:$0xff]
      %v1092 = vld [vmem:[%s191 + $0xfa] sm:$0xff]
      %v1093 = vld [vmem:[%s191 + $0x102] sm:$0xff]
      %v1094 = vld [vmem:[%s191 + $0x10a] sm:$0xff]
      %v1095 = vld [vmem:[%s191 + $0x112] sm:$0xff]
      %v1096 = vld [vmem:[%s191 + $0x11a] sm:$0xff]
      %v1097 = vld [vmem:[%s191 + $0x122] sm:$0xff]
      %v1098 = vld [vmem:[%s191 + $0x12a] sm:$0xff]
      %s1099 = scalar_lea.vmem %s196, 96
      %v1100 = vld [vmem:[%s1099] sm:$0xff]
      %v1101 = vld [vmem:[%s1099 + $0x8] sm:$0xff]
      %v1102 = vld [vmem:[%s1099 + $0x10] sm:$0xff]
      %v1103 = vld [vmem:[%s1099 + $0x18] sm:$0xff]
      %v1105 = vsel %vm286, %v1063, 0
      %v1108 = vsel %vm286, %v1064, 0
      %v1111 = vsel %vm286, %v1065, 0
      %v1114 = vsel %vm286, %v1066, 0
      %v1117 = vsel %vm286, %v1067, 0
      %v1120 = vsel %vm286, %v1068, 0
      %v1123 = vsel %vm286, %v1069, 0
      %v1126 = vsel %vm286, %v1070, 0
      %v1129 = vsel %vm286, %v1071, 0
      %v1132 = vsel %vm286, %v1072, 0
      %v1135 = vsel %vm286, %v1073, 0
      %v1138 = vsel %vm286, %v1074, 0
      %v1141 = vsel %vm286, %v1075, 0
      %v1144 = vsel %vm286, %v1076, 0
      %v1147 = vsel %vm286, %v1077, 0
      %v1150 = vsel %vm286, %v1078, 0
      %v1153 = vsel %vm286, %v1079, 0
      %v1156 = vsel %vm286, %v1080, 0
      %v1159 = vsel %vm286, %v1081, 0
      %v1162 = vsel %vm286, %v1082, 0
      %v1165 = vsel %vm286, %v1083, 0
      %v1168 = vsel %vm286, %v1084, 0
      %v1171 = vsel %vm286, %v1085, 0
      %v1174 = vsel %vm286, %v1086, 0
      %v1177 = vsel %vm286, %v1087, 0
      %v1180 = vsel %vm286, %v1088, 0
      %v1183 = vsel %vm286, %v1089, 0
      %v1186 = vsel %vm286, %v1090, 0
      %v1189 = vsel %vm286, %v1091, 0
      %v1192 = vsel %vm286, %v1092, 0
      %v1195 = vsel %vm286, %v1093, 0
      %v1198 = vsel %vm286, %v1094, 0
      %v1201 = vsel %vm286, %v1095, 0
      %v1204 = vsel %vm286, %v1096, 0
      %v1207 = vsel %vm286, %v1097, 0
      %v1210 = vsel %vm286, %v1098, 0
      %1212 = vmatpush.msra.mxu0 0.0
      %1213 = vmatpush.msra.mxu0 0.0
      %1214 = vmatpush.msra.mxu0 0.0
      %1215 = vmatpush.msra.mxu0 0.0
      %1216 = vmatpush.msra.mxu0 0.0
      %1217 = vmatpush.msra.mxu0 0.0
      %1218 = vmatpush.msra.mxu0 0.0
      %1219 = vmatpush.msra.mxu0 0.0
      %1220 = vmatpush.msra.mxu0 0.0
      %1221 = vmatpush.msra.mxu0 0.0
      %1222 = vmatpush.msra.mxu0 0.0
      %1223 = vmatpush.msra.mxu0 0.0
      %1224 = vmatpush.msra.mxu0 %v1103
      %1225 = vmatpush.msra.mxu0 %v1102
      %1226 = vmatpush.msra.mxu0 %v1101
      %1227 = vmatpush.msra.mxu0 %v1100
      %1228 = vmatmul.f32.gmra.mxu0 %v1105
      %v1229 = vpop.f32.mrf.mxu0
      %v1230 = vadd.f32 0.0, %v1229
      %1231 = vmatmul.f32.gmra.mxu0 %v1108
      %v1232 = vpop.f32.mrf.mxu0
      %v1233 = vadd.f32 0.0, %v1232
      %1234 = vmatmul.f32.gmra.mxu0 %v1111
      %v1235 = vpop.f32.mrf.mxu0
      %v1236 = vadd.f32 0.0, %v1235
      %1237 = vmatmul.f32.gmra.mxu0 %v1114
      %v1238 = vpop.f32.mrf.mxu0
      %v1239 = vadd.f32 0.0, %v1238
      %1240 = vmatmul.f32.gmra.mxu0 %v1117
      %v1241 = vpop.f32.mrf.mxu0
      %v1242 = vadd.f32 0.0, %v1241
      %1243 = vmatmul.f32.gmra.mxu0 %v1120
      %v1244 = vpop.f32.mrf.mxu0
      %v1245 = vadd.f32 0.0, %v1244
      %1246 = vmatmul.f32.gmra.mxu0 %v1123
      %v1247 = vpop.f32.mrf.mxu0
      %v1248 = vadd.f32 0.0, %v1247
      %1249 = vmatmul.f32.gmra.mxu0 %v1126
      %v1250 = vpop.f32.mrf.mxu0
      %v1251 = vadd.f32 0.0, %v1250
      %1252 = vmatmul.f32.gmra.mxu0 %v1129
      %v1253 = vpop.f32.mrf.mxu0
      %v1254 = vadd.f32 0.0, %v1253
      %1255 = vmatmul.f32.gmra.mxu0 %v1132
      %v1256 = vpop.f32.mrf.mxu0
      %v1257 = vadd.f32 0.0, %v1256
      %1258 = vmatmul.f32.gmra.mxu0 %v1135
      %v1259 = vpop.f32.mrf.mxu0
      %v1260 = vadd.f32 0.0, %v1259
      %1261 = vmatmul.f32.gmra.mxu0 %v1138
      %v1262 = vpop.f32.mrf.mxu0
      %v1263 = vadd.f32 0.0, %v1262
      %1264 = vmatmul.f32.gmra.mxu0 %v1141
      %v1265 = vpop.f32.mrf.mxu0
      %v1266 = vadd.f32 0.0, %v1265
      %1267 = vmatmul.f32.gmra.mxu0 %v1144
      %v1268 = vpop.f32.mrf.mxu0
      %v1269 = vadd.f32 0.0, %v1268
      %1270 = vmatmul.f32.gmra.mxu0 %v1147
      %v1271 = vpop.f32.mrf.mxu0
      %v1272 = vadd.f32 0.0, %v1271
      %1273 = vmatmul.f32.gmra.mxu0 %v1150
      %v1274 = vpop.f32.mrf.mxu0
      %v1275 = vadd.f32 0.0, %v1274
      %1276 = vmatmul.f32.gmra.mxu0 %v1153
      %v1277 = vpop.f32.mrf.mxu0
      %v1278 = vadd.f32 0.0, %v1277
      %1279 = vmatmul.f32.gmra.mxu0 %v1156
      %v1280 = vpop.f32.mrf.mxu0
      %v1281 = vadd.f32 0.0, %v1280
      %1282 = vmatmul.f32.gmra.mxu0 %v1159
      %v1283 = vpop.f32.mrf.mxu0
      %v1284 = vadd.f32 0.0, %v1283
      %1285 = vmatmul.f32.gmra.mxu0 %v1162
      %v1286 = vpop.f32.mrf.mxu0
      %v1287 = vadd.f32 0.0, %v1286
      %1288 = vmatmul.f32.gmra.mxu0 %v1165
      %v1289 = vpop.f32.mrf.mxu0
      %v1290 = vadd.f32 0.0, %v1289
      %1291 = vmatmul.f32.gmra.mxu0 %v1168
      %v1292 = vpop.f32.mrf.mxu0
      %v1293 = vadd.f32 0.0, %v1292
      %1294 = vmatmul.f32.gmra.mxu0 %v1171
      %v1295 = vpop.f32.mrf.mxu0
      %v1296 = vadd.f32 0.0, %v1295
      %1297 = vmatmul.f32.gmra.mxu0 %v1174
      %v1298 = vpop.f32.mrf.mxu0
      %v1299 = vadd.f32 0.0, %v1298
      %1300 = vmatmul.f32.gmra.mxu0 %v1177
      %v1301 = vpop.f32.mrf.mxu0
      %v1302 = vadd.f32 0.0, %v1301
      %1303 = vmatmul.f32.gmra.mxu0 %v1180
      %v1304 = vpop.f32.mrf.mxu0
      %v1305 = vadd.f32 0.0, %v1304
      %1306 = vmatmul.f32.gmra.mxu0 %v1183
      %v1307 = vpop.f32.mrf.mxu0
      %v1308 = vadd.f32 0.0, %v1307
      %1309 = vmatmul.f32.gmra.mxu0 %v1186
      %v1310 = vpop.f32.mrf.mxu0
      %v1311 = vadd.f32 0.0, %v1310
      %1312 = vmatmul.f32.gmra.mxu0 %v1189
      %v1313 = vpop.f32.mrf.mxu0
      %v1314 = vadd.f32 0.0, %v1313
      %1315 = vmatmul.f32.gmra.mxu0 %v1192
      %v1316 = vpop.f32.mrf.mxu0
      %v1317 = vadd.f32 0.0, %v1316
      %1318 = vmatmul.f32.gmra.mxu0 %v1195
      %v1319 = vpop.f32.mrf.mxu0
      %v1320 = vadd.f32 0.0, %v1319
      %1321 = vmatmul.f32.gmra.mxu0 %v1198
      %v1322 = vpop.f32.mrf.mxu0
      %v1323 = vadd.f32 0.0, %v1322
      %1324 = vmatmul.f32.gmra.mxu0 %v1201
      %v1325 = vpop.f32.mrf.mxu0
      %v1326 = vadd.f32 0.0, %v1325
      %1327 = vmatmul.f32.gmra.mxu0 %v1204
      %v1328 = vpop.f32.mrf.mxu0
      %v1329 = vadd.f32 0.0, %v1328
      %1330 = vmatmul.f32.gmra.mxu0 %v1207
      %v1331 = vpop.f32.mrf.mxu0
      %v1332 = vadd.f32 0.0, %v1331
      %1333 = vmatmul.f32.gmra.mxu0 %v1210
      %v1334 = vpop.f32.mrf.mxu0
      %v1335 = vadd.f32 0.0, %v1334
      %1336 = vdwg.mxu0
      %v1337 = vadd.f32 %v1027, %v1230
      %v1338 = vadd.f32 %v1028, %v1233
      %v1339 = vadd.f32 %v1029, %v1236
      %v1340 = vadd.f32 %v1030, %v1239
      %v1341 = vadd.f32 %v1031, %v1242
      %v1342 = vadd.f32 %v1032, %v1245
      %v1343 = vadd.f32 %v1033, %v1248
      %v1344 = vadd.f32 %v1034, %v1251
      %v1345 = vadd.f32 %v1035, %v1254
      %v1346 = vadd.f32 %v1036, %v1257
      %v1347 = vadd.f32 %v1037, %v1260
      %v1348 = vadd.f32 %v1038, %v1263
      %v1349 = vadd.f32 %v1039, %v1266
      %v1350 = vadd.f32 %v1040, %v1269
      %v1351 = vadd.f32 %v1041, %v1272
      %v1352 = vadd.f32 %v1042, %v1275
      %v1353 = vadd.f32 %v1043, %v1278
      %v1354 = vadd.f32 %v1044, %v1281
      %v1355 = vadd.f32 %v1045, %v1284
      %v1356 = vadd.f32 %v1046, %v1287
      %v1357 = vadd.f32 %v1047, %v1290
      %v1358 = vadd.f32 %v1048, %v1293
      %v1359 = vadd.f32 %v1049, %v1296
      %v1360 = vadd.f32 %v1050, %v1299
      %v1361 = vadd.f32 %v1051, %v1302
      %v1362 = vadd.f32 %v1052, %v1305
      %v1363 = vadd.f32 %v1053, %v1308
      %v1364 = vadd.f32 %v1054, %v1311
      %v1365 = vadd.f32 %v1055, %v1314
      %v1366 = vadd.f32 %v1056, %v1317
      %v1367 = vadd.f32 %v1057, %v1320
      %v1368 = vadd.f32 %v1058, %v1323
      %v1369 = vadd.f32 %v1059, %v1326
      %v1370 = vadd.f32 %v1060, %v1329
      %v1371 = vadd.f32 %v1061, %v1332
      %v1372 = vadd.f32 %v1062, %v1335
      %v1373 = vld [vmem:[%s191 + $0x13] sm:$0xff]
      %v1374 = vld [vmem:[%s191 + $0x1b] sm:$0xff]
      %v1375 = vld [vmem:[%s191 + $0x23] sm:$0xff]
      %v1376 = vld [vmem:[%s191 + $0x2b] sm:$0xff]
      %v1377 = vld [vmem:[%s191 + $0x33] sm:$0xff]
      %v1378 = vld [vmem:[%s191 + $0x3b] sm:$0xff]
      %v1379 = vld [vmem:[%s191 + $0x43] sm:$0xff]
      %v1380 = vld [vmem:[%s191 + $0x4b] sm:$0xff]
      %v1381 = vld [vmem:[%s191 + $0x53] sm:$0xff]
      %v1382 = vld [vmem:[%s191 + $0x5b] sm:$0xff]
      %v1383 = vld [vmem:[%s191 + $0x63] sm:$0xff]
      %v1384 = vld [vmem:[%s191 + $0x6b] sm:$0xff]
      %v1385 = vld [vmem:[%s191 + $0x73] sm:$0xff]
      %v1386 = vld [vmem:[%s191 + $0x7b] sm:$0xff]
      %v1387 = vld [vmem:[%s191 + $0x83] sm:$0xff]
      %v1388 = vld [vmem:[%s191 + $0x8b] sm:$0xff]
      %v1389 = vld [vmem:[%s191 + $0x93] sm:$0xff]
      %v1390 = vld [vmem:[%s191 + $0x9b] sm:$0xff]
      %v1391 = vld [vmem:[%s191 + $0xa3] sm:$0xff]
      %v1392 = vld [vmem:[%s191 + $0xab] sm:$0xff]
      %v1393 = vld [vmem:[%s191 + $0xb3] sm:$0xff]
      %v1394 = vld [vmem:[%s191 + $0xbb] sm:$0xff]
      %v1395 = vld [vmem:[%s191 + $0xc3] sm:$0xff]
      %v1396 = vld [vmem:[%s191 + $0xcb] sm:$0xff]
      %v1397 = vld [vmem:[%s191 + $0xd3] sm:$0xff]
      %v1398 = vld [vmem:[%s191 + $0xdb] sm:$0xff]
      %v1399 = vld [vmem:[%s191 + $0xe3] sm:$0xff]
      %v1400 = vld [vmem:[%s191 + $0xeb] sm:$0xff]
      %v1401 = vld [vmem:[%s191 + $0xf3] sm:$0xff]
      %v1402 = vld [vmem:[%s191 + $0xfb] sm:$0xff]
      %v1403 = vld [vmem:[%s191 + $0x103] sm:$0xff]
      %v1404 = vld [vmem:[%s191 + $0x10b] sm:$0xff]
      %v1405 = vld [vmem:[%s191 + $0x113] sm:$0xff]
      %v1406 = vld [vmem:[%s191 + $0x11b] sm:$0xff]
      %v1407 = vld [vmem:[%s191 + $0x123] sm:$0xff]
      %v1408 = vld [vmem:[%s191 + $0x12b] sm:$0xff]
      %s1409 = scalar_lea.vmem %s196, 128
      %v1410 = vld [vmem:[%s1409] sm:$0xff]
      %v1411 = vld [vmem:[%s1409 + $0x8] sm:$0xff]
      %v1412 = vld [vmem:[%s1409 + $0x10] sm:$0xff]
      %v1413 = vld [vmem:[%s1409 + $0x18] sm:$0xff]
      %v1415 = vsel %vm286, %v1373, 0
      %v1418 = vsel %vm286, %v1374, 0
      %v1421 = vsel %vm286, %v1375, 0
      %v1424 = vsel %vm286, %v1376, 0
      %v1427 = vsel %vm286, %v1377, 0
      %v1430 = vsel %vm286, %v1378, 0
      %v1433 = vsel %vm286, %v1379, 0
      %v1436 = vsel %vm286, %v1380, 0
      %v1439 = vsel %vm286, %v1381, 0
      %v1442 = vsel %vm286, %v1382, 0
      %v1445 = vsel %vm286, %v1383, 0
      %v1448 = vsel %vm286, %v1384, 0
      %v1451 = vsel %vm286, %v1385, 0
      %v1454 = vsel %vm286, %v1386, 0
      %v1457 = vsel %vm286, %v1387, 0
      %v1460 = vsel %vm286, %v1388, 0
      %v1463 = vsel %vm286, %v1389, 0
      %v1466 = vsel %vm286, %v1390, 0
      %v1469 = vsel %vm286, %v1391, 0
      %v1472 = vsel %vm286, %v1392, 0
      %v1475 = vsel %vm286, %v1393, 0
      %v1478 = vsel %vm286, %v1394, 0
      %v1481 = vsel %vm286, %v1395, 0
      %v1484 = vsel %vm286, %v1396, 0
      %v1487 = vsel %vm286, %v1397, 0
      %v1490 = vsel %vm286, %v1398, 0
      %v1493 = vsel %vm286, %v1399, 0
      %v1496 = vsel %vm286, %v1400, 0
      %v1499 = vsel %vm286, %v1401, 0
      %v1502 = vsel %vm286, %v1402, 0
      %v1505 = vsel %vm286, %v1403, 0
      %v1508 = vsel %vm286, %v1404, 0
      %v1511 = vsel %vm286, %v1405, 0
      %v1514 = vsel %vm286, %v1406, 0
      %v1517 = vsel %vm286, %v1407, 0
      %v1520 = vsel %vm286, %v1408, 0
      %1522 = vmatpush.msra.mxu0 0.0
      %1523 = vmatpush.msra.mxu0 0.0
      %1524 = vmatpush.msra.mxu0 0.0
      %1525 = vmatpush.msra.mxu0 0.0
      %1526 = vmatpush.msra.mxu0 0.0
      %1527 = vmatpush.msra.mxu0 0.0
      %1528 = vmatpush.msra.mxu0 0.0
      %1529 = vmatpush.msra.mxu0 0.0
      %1530 = vmatpush.msra.mxu0 0.0
      %1531 = vmatpush.msra.mxu0 0.0
      %1532 = vmatpush.msra.mxu0 0.0
      %1533 = vmatpush.msra.mxu0 0.0
      %1534 = vmatpush.msra.mxu0 %v1413
      %1535 = vmatpush.msra.mxu0 %v1412
      %1536 = vmatpush.msra.mxu0 %v1411
      %1537 = vmatpush.msra.mxu0 %v1410
      %1538 = vmatmul.f32.gmra.mxu0 %v1415
      %v1539 = vpop.f32.mrf.mxu0
      %v1540 = vadd.f32 0.0, %v1539
      %1541 = vmatmul.f32.gmra.mxu0 %v1418
      %v1542 = vpop.f32.mrf.mxu0
      %v1543 = vadd.f32 0.0, %v1542
      %1544 = vmatmul.f32.gmra.mxu0 %v1421
      %v1545 = vpop.f32.mrf.mxu0
      %v1546 = vadd.f32 0.0, %v1545
      %1547 = vmatmul.f32.gmra.mxu0 %v1424
      %v1548 = vpop.f32.mrf.mxu0
      %v1549 = vadd.f32 0.0, %v1548
      %1550 = vmatmul.f32.gmra.mxu0 %v1427
      %v1551 = vpop.f32.mrf.mxu0
      %v1552 = vadd.f32 0.0, %v1551
      %1553 = vmatmul.f32.gmra.mxu0 %v1430
      %v1554 = vpop.f32.mrf.mxu0
      %v1555 = vadd.f32 0.0, %v1554
      %1556 = vmatmul.f32.gmra.mxu0 %v1433
      %v1557 = vpop.f32.mrf.mxu0
      %v1558 = vadd.f32 0.0, %v1557
      %1559 = vmatmul.f32.gmra.mxu0 %v1436
      %v1560 = vpop.f32.mrf.mxu0
      %v1561 = vadd.f32 0.0, %v1560
      %1562 = vmatmul.f32.gmra.mxu0 %v1439
      %v1563 = vpop.f32.mrf.mxu0
      %v1564 = vadd.f32 0.0, %v1563
      %1565 = vmatmul.f32.gmra.mxu0 %v1442
      %v1566 = vpop.f32.mrf.mxu0
      %v1567 = vadd.f32 0.0, %v1566
      %1568 = vmatmul.f32.gmra.mxu0 %v1445
      %v1569 = vpop.f32.mrf.mxu0
      %v1570 = vadd.f32 0.0, %v1569
      %1571 = vmatmul.f32.gmra.mxu0 %v1448
      %v1572 = vpop.f32.mrf.mxu0
      %v1573 = vadd.f32 0.0, %v1572
      %1574 = vmatmul.f32.gmra.mxu0 %v1451
      %v1575 = vpop.f32.mrf.mxu0
      %v1576 = vadd.f32 0.0, %v1575
      %1577 = vmatmul.f32.gmra.mxu0 %v1454
      %v1578 = vpop.f32.mrf.mxu0
      %v1579 = vadd.f32 0.0, %v1578
      %1580 = vmatmul.f32.gmra.mxu0 %v1457
      %v1581 = vpop.f32.mrf.mxu0
      %v1582 = vadd.f32 0.0, %v1581
      %1583 = vmatmul.f32.gmra.mxu0 %v1460
      %v1584 = vpop.f32.mrf.mxu0
      %v1585 = vadd.f32 0.0, %v1584
      %1586 = vmatmul.f32.gmra.mxu0 %v1463
      %v1587 = vpop.f32.mrf.mxu0
      %v1588 = vadd.f32 0.0, %v1587
      %1589 = vmatmul.f32.gmra.mxu0 %v1466
      %v1590 = vpop.f32.mrf.mxu0
      %v1591 = vadd.f32 0.0, %v1590
      %1592 = vmatmul.f32.gmra.mxu0 %v1469
      %v1593 = vpop.f32.mrf.mxu0
      %v1594 = vadd.f32 0.0, %v1593
      %1595 = vmatmul.f32.gmra.mxu0 %v1472
      %v1596 = vpop.f32.mrf.mxu0
      %v1597 = vadd.f32 0.0, %v1596
      %1598 = vmatmul.f32.gmra.mxu0 %v1475
      %v1599 = vpop.f32.mrf.mxu0
      %v1600 = vadd.f32 0.0, %v1599
      %1601 = vmatmul.f32.gmra.mxu0 %v1478
      %v1602 = vpop.f32.mrf.mxu0
      %v1603 = vadd.f32 0.0, %v1602
      %1604 = vmatmul.f32.gmra.mxu0 %v1481
      %v1605 = vpop.f32.mrf.mxu0
      %v1606 = vadd.f32 0.0, %v1605
      %1607 = vmatmul.f32.gmra.mxu0 %v1484
      %v1608 = vpop.f32.mrf.mxu0
      %v1609 = vadd.f32 0.0, %v1608
      %1610 = vmatmul.f32.gmra.mxu0 %v1487
      %v1611 = vpop.f32.mrf.mxu0
      %v1612 = vadd.f32 0.0, %v1611
      %1613 = vmatmul.f32.gmra.mxu0 %v1490
      %v1614 = vpop.f32.mrf.mxu0
      %v1615 = vadd.f32 0.0, %v1614
      %1616 = vmatmul.f32.gmra.mxu0 %v1493
      %v1617 = vpop.f32.mrf.mxu0
      %v1618 = vadd.f32 0.0, %v1617
      %1619 = vmatmul.f32.gmra.mxu0 %v1496
      %v1620 = vpop.f32.mrf.mxu0
      %v1621 = vadd.f32 0.0, %v1620
      %1622 = vmatmul.f32.gmra.mxu0 %v1499
      %v1623 = vpop.f32.mrf.mxu0
      %v1624 = vadd.f32 0.0, %v1623
      %1625 = vmatmul.f32.gmra.mxu0 %v1502
      %v1626 = vpop.f32.mrf.mxu0
      %v1627 = vadd.f32 0.0, %v1626
      %1628 = vmatmul.f32.gmra.mxu0 %v1505
      %v1629 = vpop.f32.mrf.mxu0
      %v1630 = vadd.f32 0.0, %v1629
      %1631 = vmatmul.f32.gmra.mxu0 %v1508
      %v1632 = vpop.f32.mrf.mxu0
      %v1633 = vadd.f32 0.0, %v1632
      %1634 = vmatmul.f32.gmra.mxu0 %v1511
      %v1635 = vpop.f32.mrf.mxu0
      %v1636 = vadd.f32 0.0, %v1635
      %1637 = vmatmul.f32.gmra.mxu0 %v1514
      %v1638 = vpop.f32.mrf.mxu0
      %v1639 = vadd.f32 0.0, %v1638
      %1640 = vmatmul.f32.gmra.mxu0 %v1517
      %v1641 = vpop.f32.mrf.mxu0
      %v1642 = vadd.f32 0.0, %v1641
      %1643 = vmatmul.f32.gmra.mxu0 %v1520
      %v1644 = vpop.f32.mrf.mxu0
      %v1645 = vadd.f32 0.0, %v1644
      %1646 = vdwg.mxu0
      %v1647 = vadd.f32 %v1337, %v1540
      %v1648 = vadd.f32 %v1338, %v1543
      %v1649 = vadd.f32 %v1339, %v1546
      %v1650 = vadd.f32 %v1340, %v1549
      %v1651 = vadd.f32 %v1341, %v1552
      %v1652 = vadd.f32 %v1342, %v1555
      %v1653 = vadd.f32 %v1343, %v1558
      %v1654 = vadd.f32 %v1344, %v1561
      %v1655 = vadd.f32 %v1345, %v1564
      %v1656 = vadd.f32 %v1346, %v1567
      %v1657 = vadd.f32 %v1347, %v1570
      %v1658 = vadd.f32 %v1348, %v1573
      %v1659 = vadd.f32 %v1349, %v1576
      %v1660 = vadd.f32 %v1350, %v1579
      %v1661 = vadd.f32 %v1351, %v1582
      %v1662 = vadd.f32 %v1352, %v1585
      %v1663 = vadd.f32 %v1353, %v1588
      %v1664 = vadd.f32 %v1354, %v1591
      %v1665 = vadd.f32 %v1355, %v1594
      %v1666 = vadd.f32 %v1356, %v1597
      %v1667 = vadd.f32 %v1357, %v1600
      %v1668 = vadd.f32 %v1358, %v1603
      %v1669 = vadd.f32 %v1359, %v1606
      %v1670 = vadd.f32 %v1360, %v1609
      %v1671 = vadd.f32 %v1361, %v1612
      %v1672 = vadd.f32 %v1362, %v1615
      %v1673 = vadd.f32 %v1363, %v1618
      %v1674 = vadd.f32 %v1364, %v1621
      %v1675 = vadd.f32 %v1365, %v1624
      %v1676 = vadd.f32 %v1366, %v1627
      %v1677 = vadd.f32 %v1367, %v1630
      %v1678 = vadd.f32 %v1368, %v1633
      %v1679 = vadd.f32 %v1369, %v1636
      %v1680 = vadd.f32 %v1370, %v1639
      %v1681 = vadd.f32 %v1371, %v1642
      %v1682 = vadd.f32 %v1372, %v1645
      %v1683 = vld [vmem:[%s191 + $0x14] sm:$0xff]
      %v1684 = vld [vmem:[%s191 + $0x1c] sm:$0xff]
      %v1685 = vld [vmem:[%s191 + $0x24] sm:$0xff]
      %v1686 = vld [vmem:[%s191 + $0x2c] sm:$0xff]
      %v1687 = vld [vmem:[%s191 + $0x34] sm:$0xff]
      %v1688 = vld [vmem:[%s191 + $0x3c] sm:$0xff]
      %v1689 = vld [vmem:[%s191 + $0x44] sm:$0xff]
      %v1690 = vld [vmem:[%s191 + $0x4c] sm:$0xff]
      %v1691 = vld [vmem:[%s191 + $0x54] sm:$0xff]
      %v1692 = vld [vmem:[%s191 + $0x5c] sm:$0xff]
      %v1693 = vld [vmem:[%s191 + $0x64] sm:$0xff]
      %v1694 = vld [vmem:[%s191 + $0x6c] sm:$0xff]
      %v1695 = vld [vmem:[%s191 + $0x74] sm:$0xff]
      %v1696 = vld [vmem:[%s191 + $0x7c] sm:$0xff]
      %v1697 = vld [vmem:[%s191 + $0x84] sm:$0xff]
      %v1698 = vld [vmem:[%s191 + $0x8c] sm:$0xff]
      %v1699 = vld [vmem:[%s191 + $0x94] sm:$0xff]
      %v1700 = vld [vmem:[%s191 + $0x9c] sm:$0xff]
      %v1701 = vld [vmem:[%s191 + $0xa4] sm:$0xff]
      %v1702 = vld [vmem:[%s191 + $0xac] sm:$0xff]
      %v1703 = vld [vmem:[%s191 + $0xb4] sm:$0xff]
      %v1704 = vld [vmem:[%s191 + $0xbc] sm:$0xff]
      %v1705 = vld [vmem:[%s191 + $0xc4] sm:$0xff]
      %v1706 = vld [vmem:[%s191 + $0xcc] sm:$0xff]
      %v1707 = vld [vmem:[%s191 + $0xd4] sm:$0xff]
      %v1708 = vld [vmem:[%s191 + $0xdc] sm:$0xff]
      %v1709 = vld [vmem:[%s191 + $0xe4] sm:$0xff]
      %v1710 = vld [vmem:[%s191 + $0xec] sm:$0xff]
      %v1711 = vld [vmem:[%s191 + $0xf4] sm:$0xff]
      %v1712 = vld [vmem:[%s191 + $0xfc] sm:$0xff]
      %v1713 = vld [vmem:[%s191 + $0x104] sm:$0xff]
      %v1714 = vld [vmem:[%s191 + $0x10c] sm:$0xff]
      %v1715 = vld [vmem:[%s191 + $0x114] sm:$0xff]
      %v1716 = vld [vmem:[%s191 + $0x11c] sm:$0xff]
      %v1717 = vld [vmem:[%s191 + $0x124] sm:$0xff]
      %v1718 = vld [vmem:[%s191 + $0x12c] sm:$0xff]
      %s1719 = scalar_lea.vmem %s196, 160
      %v1720 = vld [vmem:[%s1719] sm:$0xff]
      %v1721 = vld [vmem:[%s1719 + $0x8] sm:$0xff]
      %v1722 = vld [vmem:[%s1719 + $0x10] sm:$0xff]
      %v1723 = vld [vmem:[%s1719 + $0x18] sm:$0xff]
      %v1725 = vsel %vm286, %v1683, 0
      %v1728 = vsel %vm286, %v1684, 0
      %v1731 = vsel %vm286, %v1685, 0
      %v1734 = vsel %vm286, %v1686, 0
      %v1737 = vsel %vm286, %v1687, 0
      %v1740 = vsel %vm286, %v1688, 0
      %v1743 = vsel %vm286, %v1689, 0
      %v1746 = vsel %vm286, %v1690, 0
      %v1749 = vsel %vm286, %v1691, 0
      %v1752 = vsel %vm286, %v1692, 0
      %v1755 = vsel %vm286, %v1693, 0
      %v1758 = vsel %vm286, %v1694, 0
      %v1761 = vsel %vm286, %v1695, 0
      %v1764 = vsel %vm286, %v1696, 0
      %v1767 = vsel %vm286, %v1697, 0
      %v1770 = vsel %vm286, %v1698, 0
      %v1773 = vsel %vm286, %v1699, 0
      %v1776 = vsel %vm286, %v1700, 0
      %v1779 = vsel %vm286, %v1701, 0
      %v1782 = vsel %vm286, %v1702, 0
      %v1785 = vsel %vm286, %v1703, 0
      %v1788 = vsel %vm286, %v1704, 0
      %v1791 = vsel %vm286, %v1705, 0
      %v1794 = vsel %vm286, %v1706, 0
      %v1797 = vsel %vm286, %v1707, 0
      %v1800 = vsel %vm286, %v1708, 0
      %v1803 = vsel %vm286, %v1709, 0
      %v1806 = vsel %vm286, %v1710, 0
      %v1809 = vsel %vm286, %v1711, 0
      %v1812 = vsel %vm286, %v1712, 0
      %v1815 = vsel %vm286, %v1713, 0
      %v1818 = vsel %vm286, %v1714, 0
      %v1821 = vsel %vm286, %v1715, 0
      %v1824 = vsel %vm286, %v1716, 0
      %v1827 = vsel %vm286, %v1717, 0
      %v1830 = vsel %vm286, %v1718, 0
      %1832 = vmatpush.msra.mxu0 0.0
      %1833 = vmatpush.msra.mxu0 0.0
      %1834 = vmatpush.msra.mxu0 0.0
      %1835 = vmatpush.msra.mxu0 0.0
      %1836 = vmatpush.msra.mxu0 0.0
      %1837 = vmatpush.msra.mxu0 0.0
      %1838 = vmatpush.msra.mxu0 0.0
      %1839 = vmatpush.msra.mxu0 0.0
      %1840 = vmatpush.msra.mxu0 0.0
      %1841 = vmatpush.msra.mxu0 0.0
      %1842 = vmatpush.msra.mxu0 0.0
      %1843 = vmatpush.msra.mxu0 0.0
      %1844 = vmatpush.msra.mxu0 %v1723
      %1845 = vmatpush.msra.mxu0 %v1722
      %1846 = vmatpush.msra.mxu0 %v1721
      %1847 = vmatpush.msra.mxu0 %v1720
      %1848 = vmatmul.f32.gmra.mxu0 %v1725
      %v1849 = vpop.f32.mrf.mxu0
      %v1850 = vadd.f32 0.0, %v1849
      %1851 = vmatmul.f32.gmra.mxu0 %v1728
      %v1852 = vpop.f32.mrf.mxu0
      %v1853 = vadd.f32 0.0, %v1852
      %1854 = vmatmul.f32.gmra.mxu0 %v1731
      %v1855 = vpop.f32.mrf.mxu0
      %v1856 = vadd.f32 0.0, %v1855
      %1857 = vmatmul.f32.gmra.mxu0 %v1734
      %v1858 = vpop.f32.mrf.mxu0
      %v1859 = vadd.f32 0.0, %v1858
      %1860 = vmatmul.f32.gmra.mxu0 %v1737
      %v1861 = vpop.f32.mrf.mxu0
      %v1862 = vadd.f32 0.0, %v1861
      %1863 = vmatmul.f32.gmra.mxu0 %v1740
      %v1864 = vpop.f32.mrf.mxu0
      %v1865 = vadd.f32 0.0, %v1864
      %1866 = vmatmul.f32.gmra.mxu0 %v1743
      %v1867 = vpop.f32.mrf.mxu0
      %v1868 = vadd.f32 0.0, %v1867
      %1869 = vmatmul.f32.gmra.mxu0 %v1746
      %v1870 = vpop.f32.mrf.mxu0
      %v1871 = vadd.f32 0.0, %v1870
      %1872 = vmatmul.f32.gmra.mxu0 %v1749
      %v1873 = vpop.f32.mrf.mxu0
      %v1874 = vadd.f32 0.0, %v1873
      %1875 = vmatmul.f32.gmra.mxu0 %v1752
      %v1876 = vpop.f32.mrf.mxu0
      %v1877 = vadd.f32 0.0, %v1876
      %1878 = vmatmul.f32.gmra.mxu0 %v1755
      %v1879 = vpop.f32.mrf.mxu0
      %v1880 = vadd.f32 0.0, %v1879
      %1881 = vmatmul.f32.gmra.mxu0 %v1758
      %v1882 = vpop.f32.mrf.mxu0
      %v1883 = vadd.f32 0.0, %v1882
      %1884 = vmatmul.f32.gmra.mxu0 %v1761
      %v1885 = vpop.f32.mrf.mxu0
      %v1886 = vadd.f32 0.0, %v1885
      %1887 = vmatmul.f32.gmra.mxu0 %v1764
      %v1888 = vpop.f32.mrf.mxu0
      %v1889 = vadd.f32 0.0, %v1888
      %1890 = vmatmul.f32.gmra.mxu0 %v1767
      %v1891 = vpop.f32.mrf.mxu0
      %v1892 = vadd.f32 0.0, %v1891
      %1893 = vmatmul.f32.gmra.mxu0 %v1770
      %v1894 = vpop.f32.mrf.mxu0
      %v1895 = vadd.f32 0.0, %v1894
      %1896 = vmatmul.f32.gmra.mxu0 %v1773
      %v1897 = vpop.f32.mrf.mxu0
      %v1898 = vadd.f32 0.0, %v1897
      %1899 = vmatmul.f32.gmra.mxu0 %v1776
      %v1900 = vpop.f32.mrf.mxu0
      %v1901 = vadd.f32 0.0, %v1900
      %1902 = vmatmul.f32.gmra.mxu0 %v1779
      %v1903 = vpop.f32.mrf.mxu0
      %v1904 = vadd.f32 0.0, %v1903
      %1905 = vmatmul.f32.gmra.mxu0 %v1782
      %v1906 = vpop.f32.mrf.mxu0
      %v1907 = vadd.f32 0.0, %v1906
      %1908 = vmatmul.f32.gmra.mxu0 %v1785
      %v1909 = vpop.f32.mrf.mxu0
      %v1910 = vadd.f32 0.0, %v1909
      %1911 = vmatmul.f32.gmra.mxu0 %v1788
      %v1912 = vpop.f32.mrf.mxu0
      %v1913 = vadd.f32 0.0, %v1912
      %1914 = vmatmul.f32.gmra.mxu0 %v1791
      %v1915 = vpop.f32.mrf.mxu0
      %v1916 = vadd.f32 0.0, %v1915
      %1917 = vmatmul.f32.gmra.mxu0 %v1794
      %v1918 = vpop.f32.mrf.mxu0
      %v1919 = vadd.f32 0.0, %v1918
      %1920 = vmatmul.f32.gmra.mxu0 %v1797
      %v1921 = vpop.f32.mrf.mxu0
      %v1922 = vadd.f32 0.0, %v1921
      %1923 = vmatmul.f32.gmra.mxu0 %v1800
      %v1924 = vpop.f32.mrf.mxu0
      %v1925 = vadd.f32 0.0, %v1924
      %1926 = vmatmul.f32.gmra.mxu0 %v1803
      %v1927 = vpop.f32.mrf.mxu0
      %v1928 = vadd.f32 0.0, %v1927
      %1929 = vmatmul.f32.gmra.mxu0 %v1806
      %v1930 = vpop.f32.mrf.mxu0
      %v1931 = vadd.f32 0.0, %v1930
      %1932 = vmatmul.f32.gmra.mxu0 %v1809
      %v1933 = vpop.f32.mrf.mxu0
      %v1934 = vadd.f32 0.0, %v1933
      %1935 = vmatmul.f32.gmra.mxu0 %v1812
      %v1936 = vpop.f32.mrf.mxu0
      %v1937 = vadd.f32 0.0, %v1936
      %1938 = vmatmul.f32.gmra.mxu0 %v1815
      %v1939 = vpop.f32.mrf.mxu0
      %v1940 = vadd.f32 0.0, %v1939
      %1941 = vmatmul.f32.gmra.mxu0 %v1818
      %v1942 = vpop.f32.mrf.mxu0
      %v1943 = vadd.f32 0.0, %v1942
      %1944 = vmatmul.f32.gmra.mxu0 %v1821
      %v1945 = vpop.f32.mrf.mxu0
      %v1946 = vadd.f32 0.0, %v1945
      %1947 = vmatmul.f32.gmra.mxu0 %v1824
      %v1948 = vpop.f32.mrf.mxu0
      %v1949 = vadd.f32 0.0, %v1948
      %1950 = vmatmul.f32.gmra.mxu0 %v1827
      %v1951 = vpop.f32.mrf.mxu0
      %v1952 = vadd.f32 0.0, %v1951
      %1953 = vmatmul.f32.gmra.mxu0 %v1830
      %v1954 = vpop.f32.mrf.mxu0
      %v1955 = vadd.f32 0.0, %v1954
      %1956 = vdwg.mxu0
      %v1957 = vadd.f32 %v1647, %v1850
      %v1958 = vadd.f32 %v1648, %v1853
      %v1959 = vadd.f32 %v1649, %v1856
      %v1960 = vadd.f32 %v1650, %v1859
      %v1961 = vadd.f32 %v1651, %v1862
      %v1962 = vadd.f32 %v1652, %v1865
      %v1963 = vadd.f32 %v1653, %v1868
      %v1964 = vadd.f32 %v1654, %v1871
      %v1965 = vadd.f32 %v1655, %v1874
      %v1966 = vadd.f32 %v1656, %v1877
      %v1967 = vadd.f32 %v1657, %v1880
      %v1968 = vadd.f32 %v1658, %v1883
      %v1969 = vadd.f32 %v1659, %v1886
      %v1970 = vadd.f32 %v1660, %v1889
      %v1971 = vadd.f32 %v1661, %v1892
      %v1972 = vadd.f32 %v1662, %v1895
      %v1973 = vadd.f32 %v1663, %v1898
      %v1974 = vadd.f32 %v1664, %v1901
      %v1975 = vadd.f32 %v1665, %v1904
      %v1976 = vadd.f32 %v1666, %v1907
      %v1977 = vadd.f32 %v1667, %v1910
      %v1978 = vadd.f32 %v1668, %v1913
      %v1979 = vadd.f32 %v1669, %v1916
      %v1980 = vadd.f32 %v1670, %v1919
      %v1981 = vadd.f32 %v1671, %v1922
      %v1982 = vadd.f32 %v1672, %v1925
      %v1983 = vadd.f32 %v1673, %v1928
      %v1984 = vadd.f32 %v1674, %v1931
      %v1985 = vadd.f32 %v1675, %v1934
      %v1986 = vadd.f32 %v1676, %v1937
      %v1987 = vadd.f32 %v1677, %v1940
      %v1988 = vadd.f32 %v1678, %v1943
      %v1989 = vadd.f32 %v1679, %v1946
      %v1990 = vadd.f32 %v1680, %v1949
      %v1991 = vadd.f32 %v1681, %v1952
      %v1992 = vadd.f32 %v1682, %v1955
      %v1993 = vld [vmem:[%s191 + $0x24] sm:$0xff]
      %v1994 = vld [vmem:[%s191 + $0x2c] sm:$0xff]
      %v1995 = vld [vmem:[%s191 + $0x34] sm:$0xff]
      %v1996 = vld [vmem:[%s191 + $0x3c] sm:$0xff]
      %v1997 = vld [vmem:[%s191 + $0x44] sm:$0xff]
      %v1998 = vld [vmem:[%s191 + $0x4c] sm:$0xff]
      %v1999 = vld [vmem:[%s191 + $0x54] sm:$0xff]
      %v2000 = vld [vmem:[%s191 + $0x5c] sm:$0xff]
      %v2001 = vld [vmem:[%s191 + $0x64] sm:$0xff]
      %v2002 = vld [vmem:[%s191 + $0x6c] sm:$0xff]
      %v2003 = vld [vmem:[%s191 + $0x74] sm:$0xff]
      %v2004 = vld [vmem:[%s191 + $0x7c] sm:$0xff]
      %v2005 = vld [vmem:[%s191 + $0x84] sm:$0xff]
      %v2006 = vld [vmem:[%s191 + $0x8c] sm:$0xff]
      %v2007 = vld [vmem:[%s191 + $0x94] sm:$0xff]
      %v2008 = vld [vmem:[%s191 + $0x9c] sm:$0xff]
      %v2009 = vld [vmem:[%s191 + $0xa4] sm:$0xff]
      %v2010 = vld [vmem:[%s191 + $0xac] sm:$0xff]
      %v2011 = vld [vmem:[%s191 + $0xb4] sm:$0xff]
      %v2012 = vld [vmem:[%s191 + $0xbc] sm:$0xff]
      %v2013 = vld [vmem:[%s191 + $0xc4] sm:$0xff]
      %v2014 = vld [vmem:[%s191 + $0xcc] sm:$0xff]
      %v2015 = vld [vmem:[%s191 + $0xd4] sm:$0xff]
      %v2016 = vld [vmem:[%s191 + $0xdc] sm:$0xff]
      %v2017 = vld [vmem:[%s191 + $0xe4] sm:$0xff]
      %v2018 = vld [vmem:[%s191 + $0xec] sm:$0xff]
      %v2019 = vld [vmem:[%s191 + $0xf4] sm:$0xff]
      %v2020 = vld [vmem:[%s191 + $0xfc] sm:$0xff]
      %v2021 = vld [vmem:[%s191 + $0x104] sm:$0xff]
      %v2022 = vld [vmem:[%s191 + $0x10c] sm:$0xff]
      %v2023 = vld [vmem:[%s191 + $0x114] sm:$0xff]
      %v2024 = vld [vmem:[%s191 + $0x11c] sm:$0xff]
      %v2025 = vld [vmem:[%s191 + $0x124] sm:$0xff]
      %v2026 = vld [vmem:[%s191 + $0x12c] sm:$0xff]
      %v2027 = vld [vmem:[%s191 + $0x134] sm:$0xff]
      %v2028 = vld [vmem:[%s191 + $0x13c] sm:$0xff]
      %s2029 = scalar_lea.vmem %s196, 192
      %v2030 = vld [vmem:[%s2029] sm:$0xff]
      %v2031 = vld [vmem:[%s2029 + $0x8] sm:$0xff]
      %v2032 = vld [vmem:[%s2029 + $0x10] sm:$0xff]
      %v2033 = vld [vmem:[%s2029 + $0x18] sm:$0xff]
      %v2035 = vsel %vm286, %v1993, 0
      %v2038 = vsel %vm286, %v1994, 0
      %v2041 = vsel %vm286, %v1995, 0
      %v2044 = vsel %vm286, %v1996, 0
      %v2047 = vsel %vm286, %v1997, 0
      %v2050 = vsel %vm286, %v1998, 0
      %v2053 = vsel %vm286, %v1999, 0
      %v2056 = vsel %vm286, %v2000, 0
      %v2059 = vsel %vm286, %v2001, 0
      %v2062 = vsel %vm286, %v2002, 0
      %v2065 = vsel %vm286, %v2003, 0
      %v2068 = vsel %vm286, %v2004, 0
      %v2071 = vsel %vm286, %v2005, 0
      %v2074 = vsel %vm286, %v2006, 0
      %v2077 = vsel %vm286, %v2007, 0
      %v2080 = vsel %vm286, %v2008, 0
      %v2083 = vsel %vm286, %v2009, 0
      %v2086 = vsel %vm286, %v2010, 0
      %v2089 = vsel %vm286, %v2011, 0
      %v2092 = vsel %vm286, %v2012, 0
      %v2095 = vsel %vm286, %v2013, 0
      %v2098 = vsel %vm286, %v2014, 0
      %v2101 = vsel %vm286, %v2015, 0
      %v2104 = vsel %vm286, %v2016, 0
      %v2107 = vsel %vm286, %v2017, 0
      %v2110 = vsel %vm286, %v2018, 0
      %v2113 = vsel %vm286, %v2019, 0
      %v2116 = vsel %vm286, %v2020, 0
      %v2119 = vsel %vm286, %v2021, 0
      %v2122 = vsel %vm286, %v2022, 0
      %v2125 = vsel %vm286, %v2023, 0
      %v2128 = vsel %vm286, %v2024, 0
      %v2131 = vsel %vm286, %v2025, 0
      %v2134 = vsel %vm286, %v2026, 0
      %v2137 = vsel %vm286, %v2027, 0
      %v2140 = vsel %vm286, %v2028, 0
      %2142 = vmatpush.msra.mxu0 0.0
      %2143 = vmatpush.msra.mxu0 0.0
      %2144 = vmatpush.msra.mxu0 0.0
      %2145 = vmatpush.msra.mxu0 0.0
      %2146 = vmatpush.msra.mxu0 0.0
      %2147 = vmatpush.msra.mxu0 0.0
      %2148 = vmatpush.msra.mxu0 0.0
      %2149 = vmatpush.msra.mxu0 0.0
      %2150 = vmatpush.msra.mxu0 0.0
      %2151 = vmatpush.msra.mxu0 0.0
      %2152 = vmatpush.msra.mxu0 0.0
      %2153 = vmatpush.msra.mxu0 0.0
      %2154 = vmatpush.msra.mxu0 %v2033
      %2155 = vmatpush.msra.mxu0 %v2032
      %2156 = vmatpush.msra.mxu0 %v2031
      %2157 = vmatpush.msra.mxu0 %v2030
      %2158 = vmatmul.f32.gmra.mxu0 %v2035
      %v2159 = vpop.f32.mrf.mxu0
      %v2160 = vadd.f32 0.0, %v2159
      %2161 = vmatmul.f32.gmra.mxu0 %v2038
      %v2162 = vpop.f32.mrf.mxu0
      %v2163 = vadd.f32 0.0, %v2162
      %2164 = vmatmul.f32.gmra.mxu0 %v2041
      %v2165 = vpop.f32.mrf.mxu0
      %v2166 = vadd.f32 0.0, %v2165
      %2167 = vmatmul.f32.gmra.mxu0 %v2044
      %v2168 = vpop.f32.mrf.mxu0
      %v2169 = vadd.f32 0.0, %v2168
      %2170 = vmatmul.f32.gmra.mxu0 %v2047
      %v2171 = vpop.f32.mrf.mxu0
      %v2172 = vadd.f32 0.0, %v2171
      %2173 = vmatmul.f32.gmra.mxu0 %v2050
      %v2174 = vpop.f32.mrf.mxu0
      %v2175 = vadd.f32 0.0, %v2174
      %2176 = vmatmul.f32.gmra.mxu0 %v2053
      %v2177 = vpop.f32.mrf.mxu0
      %v2178 = vadd.f32 0.0, %v2177
      %2179 = vmatmul.f32.gmra.mxu0 %v2056
      %v2180 = vpop.f32.mrf.mxu0
      %v2181 = vadd.f32 0.0, %v2180
      %2182 = vmatmul.f32.gmra.mxu0 %v2059
      %v2183 = vpop.f32.mrf.mxu0
      %v2184 = vadd.f32 0.0, %v2183
      %2185 = vmatmul.f32.gmra.mxu0 %v2062
      %v2186 = vpop.f32.mrf.mxu0
      %v2187 = vadd.f32 0.0, %v2186
      %2188 = vmatmul.f32.gmra.mxu0 %v2065
      %v2189 = vpop.f32.mrf.mxu0
      %v2190 = vadd.f32 0.0, %v2189
      %2191 = vmatmul.f32.gmra.mxu0 %v2068
      %v2192 = vpop.f32.mrf.mxu0
      %v2193 = vadd.f32 0.0, %v2192
      %2194 = vmatmul.f32.gmra.mxu0 %v2071
      %v2195 = vpop.f32.mrf.mxu0
      %v2196 = vadd.f32 0.0, %v2195
      %2197 = vmatmul.f32.gmra.mxu0 %v2074
      %v2198 = vpop.f32.mrf.mxu0
      %v2199 = vadd.f32 0.0, %v2198
      %2200 = vmatmul.f32.gmra.mxu0 %v2077
      %v2201 = vpop.f32.mrf.mxu0
      %v2202 = vadd.f32 0.0, %v2201
      %2203 = vmatmul.f32.gmra.mxu0 %v2080
      %v2204 = vpop.f32.mrf.mxu0
      %v2205 = vadd.f32 0.0, %v2204
      %2206 = vmatmul.f32.gmra.mxu0 %v2083
      %v2207 = vpop.f32.mrf.mxu0
      %v2208 = vadd.f32 0.0, %v2207
      %2209 = vmatmul.f32.gmra.mxu0 %v2086
      %v2210 = vpop.f32.mrf.mxu0
      %v2211 = vadd.f32 0.0, %v2210
      %2212 = vmatmul.f32.gmra.mxu0 %v2089
      %v2213 = vpop.f32.mrf.mxu0
      %v2214 = vadd.f32 0.0, %v2213
      %2215 = vmatmul.f32.gmra.mxu0 %v2092
      %v2216 = vpop.f32.mrf.mxu0
      %v2217 = vadd.f32 0.0, %v2216
      %2218 = vmatmul.f32.gmra.mxu0 %v2095
      %v2219 = vpop.f32.mrf.mxu0
      %v2220 = vadd.f32 0.0, %v2219
      %2221 = vmatmul.f32.gmra.mxu0 %v2098
      %v2222 = vpop.f32.mrf.mxu0
      %v2223 = vadd.f32 0.0, %v2222
      %2224 = vmatmul.f32.gmra.mxu0 %v2101
      %v2225 = vpop.f32.mrf.mxu0
      %v2226 = vadd.f32 0.0, %v2225
      %2227 = vmatmul.f32.gmra.mxu0 %v2104
      %v2228 = vpop.f32.mrf.mxu0
      %v2229 = vadd.f32 0.0, %v2228
      %2230 = vmatmul.f32.gmra.mxu0 %v2107
      %v2231 = vpop.f32.mrf.mxu0
      %v2232 = vadd.f32 0.0, %v2231
      %2233 = vmatmul.f32.gmra.mxu0 %v2110
      %v2234 = vpop.f32.mrf.mxu0
      %v2235 = vadd.f32 0.0, %v2234
      %2236 = vmatmul.f32.gmra.mxu0 %v2113
      %v2237 = vpop.f32.mrf.mxu0
      %v2238 = vadd.f32 0.0, %v2237
      %2239 = vmatmul.f32.gmra.mxu0 %v2116
      %v2240 = vpop.f32.mrf.mxu0
      %v2241 = vadd.f32 0.0, %v2240
      %2242 = vmatmul.f32.gmra.mxu0 %v2119
      %v2243 = vpop.f32.mrf.mxu0
      %v2244 = vadd.f32 0.0, %v2243
      %2245 = vmatmul.f32.gmra.mxu0 %v2122
      %v2246 = vpop.f32.mrf.mxu0
      %v2247 = vadd.f32 0.0, %v2246
      %2248 = vmatmul.f32.gmra.mxu0 %v2125
      %v2249 = vpop.f32.mrf.mxu0
      %v2250 = vadd.f32 0.0, %v2249
      %2251 = vmatmul.f32.gmra.mxu0 %v2128
      %v2252 = vpop.f32.mrf.mxu0
      %v2253 = vadd.f32 0.0, %v2252
      %2254 = vmatmul.f32.gmra.mxu0 %v2131
      %v2255 = vpop.f32.mrf.mxu0
      %v2256 = vadd.f32 0.0, %v2255
      %2257 = vmatmul.f32.gmra.mxu0 %v2134
      %v2258 = vpop.f32.mrf.mxu0
      %v2259 = vadd.f32 0.0, %v2258
      %2260 = vmatmul.f32.gmra.mxu0 %v2137
      %v2261 = vpop.f32.mrf.mxu0
      %v2262 = vadd.f32 0.0, %v2261
      %2263 = vmatmul.f32.gmra.mxu0 %v2140
      %v2264 = vpop.f32.mrf.mxu0
      %v2265 = vadd.f32 0.0, %v2264
      %2266 = vdwg.mxu0
      %v2267 = vadd.f32 %v1957, %v2160
      %v2268 = vadd.f32 %v1958, %v2163
      %v2269 = vadd.f32 %v1959, %v2166
      %v2270 = vadd.f32 %v1960, %v2169
      %v2271 = vadd.f32 %v1961, %v2172
      %v2272 = vadd.f32 %v1962, %v2175
      %v2273 = vadd.f32 %v1963, %v2178
      %v2274 = vadd.f32 %v1964, %v2181
      %v2275 = vadd.f32 %v1965, %v2184
      %v2276 = vadd.f32 %v1966, %v2187
      %v2277 = vadd.f32 %v1967, %v2190
      %v2278 = vadd.f32 %v1968, %v2193
      %v2279 = vadd.f32 %v1969, %v2196
      %v2280 = vadd.f32 %v1970, %v2199
      %v2281 = vadd.f32 %v1971, %v2202
      %v2282 = vadd.f32 %v1972, %v2205
      %v2283 = vadd.f32 %v1973, %v2208
      %v2284 = vadd.f32 %v1974, %v2211
      %v2285 = vadd.f32 %v1975, %v2214
      %v2286 = vadd.f32 %v1976, %v2217
      %v2287 = vadd.f32 %v1977, %v2220
      %v2288 = vadd.f32 %v1978, %v2223
      %v2289 = vadd.f32 %v1979, %v2226
      %v2290 = vadd.f32 %v1980, %v2229
      %v2291 = vadd.f32 %v1981, %v2232
      %v2292 = vadd.f32 %v1982, %v2235
      %v2293 = vadd.f32 %v1983, %v2238
      %v2294 = vadd.f32 %v1984, %v2241
      %v2295 = vadd.f32 %v1985, %v2244
      %v2296 = vadd.f32 %v1986, %v2247
      %v2297 = vadd.f32 %v1987, %v2250
      %v2298 = vadd.f32 %v1988, %v2253
      %v2299 = vadd.f32 %v1989, %v2256
      %v2300 = vadd.f32 %v1990, %v2259
      %v2301 = vadd.f32 %v1991, %v2262
      %v2302 = vadd.f32 %v1992, %v2265
      %v2303 = vld [vmem:[%s191 + $0x25] sm:$0xff]
      %v2304 = vld [vmem:[%s191 + $0x2d] sm:$0xff]
      %v2305 = vld [vmem:[%s191 + $0x35] sm:$0xff]
      %v2306 = vld [vmem:[%s191 + $0x3d] sm:$0xff]
      %v2307 = vld [vmem:[%s191 + $0x45] sm:$0xff]
      %v2308 = vld [vmem:[%s191 + $0x4d] sm:$0xff]
      %v2309 = vld [vmem:[%s191 + $0x55] sm:$0xff]
      %v2310 = vld [vmem:[%s191 + $0x5d] sm:$0xff]
      %v2311 = vld [vmem:[%s191 + $0x65] sm:$0xff]
      %v2312 = vld [vmem:[%s191 + $0x6d] sm:$0xff]
      %v2313 = vld [vmem:[%s191 + $0x75] sm:$0xff]
      %v2314 = vld [vmem:[%s191 + $0x7d] sm:$0xff]
      %v2315 = vld [vmem:[%s191 + $0x85] sm:$0xff]
      %v2316 = vld [vmem:[%s191 + $0x8d] sm:$0xff]
      %v2317 = vld [vmem:[%s191 + $0x95] sm:$0xff]
      %v2318 = vld [vmem:[%s191 + $0x9d] sm:$0xff]
      %v2319 = vld [vmem:[%s191 + $0xa5] sm:$0xff]
      %v2320 = vld [vmem:[%s191 + $0xad] sm:$0xff]
      %v2321 = vld [vmem:[%s191 + $0xb5] sm:$0xff]
      %v2322 = vld [vmem:[%s191 + $0xbd] sm:$0xff]
      %v2323 = vld [vmem:[%s191 + $0xc5] sm:$0xff]
      %v2324 = vld [vmem:[%s191 + $0xcd] sm:$0xff]
      %v2325 = vld [vmem:[%s191 + $0xd5] sm:$0xff]
      %v2326 = vld [vmem:[%s191 + $0xdd] sm:$0xff]
      %v2327 = vld [vmem:[%s191 + $0xe5] sm:$0xff]
      %v2328 = vld [vmem:[%s191 + $0xed] sm:$0xff]
      %v2329 = vld [vmem:[%s191 + $0xf5] sm:$0xff]
      %v2330 = vld [vmem:[%s191 + $0xfd] sm:$0xff]
      %v2331 = vld [vmem:[%s191 + $0x105] sm:$0xff]
      %v2332 = vld [vmem:[%s191 + $0x10d] sm:$0xff]
      %v2333 = vld [vmem:[%s191 + $0x115] sm:$0xff]
      %v2334 = vld [vmem:[%s191 + $0x11d] sm:$0xff]
      %v2335 = vld [vmem:[%s191 + $0x125] sm:$0xff]
      %v2336 = vld [vmem:[%s191 + $0x12d] sm:$0xff]
      %v2337 = vld [vmem:[%s191 + $0x135] sm:$0xff]
      %v2338 = vld [vmem:[%s191 + $0x13d] sm:$0xff]
      %s2339 = scalar_lea.vmem %s196, 224
      %v2340 = vld [vmem:[%s2339] sm:$0xff]
      %v2341 = vld [vmem:[%s2339 + $0x8] sm:$0xff]
      %v2342 = vld [vmem:[%s2339 + $0x10] sm:$0xff]
      %v2343 = vld [vmem:[%s2339 + $0x18] sm:$0xff]
      %v2345 = vsel %vm286, %v2303, 0
      %v2348 = vsel %vm286, %v2304, 0
      %v2351 = vsel %vm286, %v2305, 0
      %v2354 = vsel %vm286, %v2306, 0
      %v2357 = vsel %vm286, %v2307, 0
      %v2360 = vsel %vm286, %v2308, 0
      %v2363 = vsel %vm286, %v2309, 0
      %v2366 = vsel %vm286, %v2310, 0
      %v2369 = vsel %vm286, %v2311, 0
      %v2372 = vsel %vm286, %v2312, 0
      %v2375 = vsel %vm286, %v2313, 0
      %v2378 = vsel %vm286, %v2314, 0
      %v2381 = vsel %vm286, %v2315, 0
      %v2384 = vsel %vm286, %v2316, 0
      %v2387 = vsel %vm286, %v2317, 0
      %v2390 = vsel %vm286, %v2318, 0
      %v2393 = vsel %vm286, %v2319, 0
      %v2396 = vsel %vm286, %v2320, 0
      %v2399 = vsel %vm286, %v2321, 0
      %v2402 = vsel %vm286, %v2322, 0
      %v2405 = vsel %vm286, %v2323, 0
      %v2408 = vsel %vm286, %v2324, 0
      %v2411 = vsel %vm286, %v2325, 0
      %v2414 = vsel %vm286, %v2326, 0
      %v2417 = vsel %vm286, %v2327, 0
      %v2420 = vsel %vm286, %v2328, 0
      %v2423 = vsel %vm286, %v2329, 0
      %v2426 = vsel %vm286, %v2330, 0
      %v2429 = vsel %vm286, %v2331, 0
      %v2432 = vsel %vm286, %v2332, 0
      %v2435 = vsel %vm286, %v2333, 0
      %v2438 = vsel %vm286, %v2334, 0
      %v2441 = vsel %vm286, %v2335, 0
      %v2444 = vsel %vm286, %v2336, 0
      %v2447 = vsel %vm286, %v2337, 0
      %v2450 = vsel %vm286, %v2338, 0
      %2452 = vmatpush.msra.mxu0 0.0
      %2453 = vmatpush.msra.mxu0 0.0
      %2454 = vmatpush.msra.mxu0 0.0
      %2455 = vmatpush.msra.mxu0 0.0
      %2456 = vmatpush.msra.mxu0 0.0
      %2457 = vmatpush.msra.mxu0 0.0
      %2458 = vmatpush.msra.mxu0 0.0
      %2459 = vmatpush.msra.mxu0 0.0
      %2460 = vmatpush.msra.mxu0 0.0
      %2461 = vmatpush.msra.mxu0 0.0
      %2462 = vmatpush.msra.mxu0 0.0
      %2463 = vmatpush.msra.mxu0 0.0
      %2464 = vmatpush.msra.mxu0 %v2343
      %2465 = vmatpush.msra.mxu0 %v2342
      %2466 = vmatpush.msra.mxu0 %v2341
      %2467 = vmatpush.msra.mxu0 %v2340
      %2468 = vmatmul.f32.gmra.mxu0 %v2345
      %v2469 = vpop.f32.mrf.mxu0
      %v2470 = vadd.f32 0.0, %v2469
      %2471 = vmatmul.f32.gmra.mxu0 %v2348
      %v2472 = vpop.f32.mrf.mxu0
      %v2473 = vadd.f32 0.0, %v2472
      %2474 = vmatmul.f32.gmra.mxu0 %v2351
      %v2475 = vpop.f32.mrf.mxu0
      %v2476 = vadd.f32 0.0, %v2475
      %2477 = vmatmul.f32.gmra.mxu0 %v2354
      %v2478 = vpop.f32.mrf.mxu0
      %v2479 = vadd.f32 0.0, %v2478
      %2480 = vmatmul.f32.gmra.mxu0 %v2357
      %v2481 = vpop.f32.mrf.mxu0
      %v2482 = vadd.f32 0.0, %v2481
      %2483 = vmatmul.f32.gmra.mxu0 %v2360
      %v2484 = vpop.f32.mrf.mxu0
      %v2485 = vadd.f32 0.0, %v2484
      %2486 = vmatmul.f32.gmra.mxu0 %v2363
      %v2487 = vpop.f32.mrf.mxu0
      %v2488 = vadd.f32 0.0, %v2487
      %2489 = vmatmul.f32.gmra.mxu0 %v2366
      %v2490 = vpop.f32.mrf.mxu0
      %v2491 = vadd.f32 0.0, %v2490
      %2492 = vmatmul.f32.gmra.mxu0 %v2369
      %v2493 = vpop.f32.mrf.mxu0
      %v2494 = vadd.f32 0.0, %v2493
      %2495 = vmatmul.f32.gmra.mxu0 %v2372
      %v2496 = vpop.f32.mrf.mxu0
      %v2497 = vadd.f32 0.0, %v2496
      %2498 = vmatmul.f32.gmra.mxu0 %v2375
      %v2499 = vpop.f32.mrf.mxu0
      %v2500 = vadd.f32 0.0, %v2499
      %2501 = vmatmul.f32.gmra.mxu0 %v2378
      %v2502 = vpop.f32.mrf.mxu0
      %v2503 = vadd.f32 0.0, %v2502
      %2504 = vmatmul.f32.gmra.mxu0 %v2381
      %v2505 = vpop.f32.mrf.mxu0
      %v2506 = vadd.f32 0.0, %v2505
      %2507 = vmatmul.f32.gmra.mxu0 %v2384
      %v2508 = vpop.f32.mrf.mxu0
      %v2509 = vadd.f32 0.0, %v2508
      %2510 = vmatmul.f32.gmra.mxu0 %v2387
      %v2511 = vpop.f32.mrf.mxu0
      %v2512 = vadd.f32 0.0, %v2511
      %2513 = vmatmul.f32.gmra.mxu0 %v2390
      %v2514 = vpop.f32.mrf.mxu0
      %v2515 = vadd.f32 0.0, %v2514
      %2516 = vmatmul.f32.gmra.mxu0 %v2393
      %v2517 = vpop.f32.mrf.mxu0
      %v2518 = vadd.f32 0.0, %v2517
      %2519 = vmatmul.f32.gmra.mxu0 %v2396
      %v2520 = vpop.f32.mrf.mxu0
      %v2521 = vadd.f32 0.0, %v2520
      %2522 = vmatmul.f32.gmra.mxu0 %v2399
      %v2523 = vpop.f32.mrf.mxu0
      %v2524 = vadd.f32 0.0, %v2523
      %2525 = vmatmul.f32.gmra.mxu0 %v2402
      %v2526 = vpop.f32.mrf.mxu0
      %v2527 = vadd.f32 0.0, %v2526
      %2528 = vmatmul.f32.gmra.mxu0 %v2405
      %v2529 = vpop.f32.mrf.mxu0
      %v2530 = vadd.f32 0.0, %v2529
      %2531 = vmatmul.f32.gmra.mxu0 %v2408
      %v2532 = vpop.f32.mrf.mxu0
      %v2533 = vadd.f32 0.0, %v2532
      %2534 = vmatmul.f32.gmra.mxu0 %v2411
      %v2535 = vpop.f32.mrf.mxu0
      %v2536 = vadd.f32 0.0, %v2535
      %2537 = vmatmul.f32.gmra.mxu0 %v2414
      %v2538 = vpop.f32.mrf.mxu0
      %v2539 = vadd.f32 0.0, %v2538
      %2540 = vmatmul.f32.gmra.mxu0 %v2417
      %v2541 = vpop.f32.mrf.mxu0
      %v2542 = vadd.f32 0.0, %v2541
      %2543 = vmatmul.f32.gmra.mxu0 %v2420
      %v2544 = vpop.f32.mrf.mxu0
      %v2545 = vadd.f32 0.0, %v2544
      %2546 = vmatmul.f32.gmra.mxu0 %v2423
      %v2547 = vpop.f32.mrf.mxu0
      %v2548 = vadd.f32 0.0, %v2547
      %2549 = vmatmul.f32.gmra.mxu0 %v2426
      %v2550 = vpop.f32.mrf.mxu0
      %v2551 = vadd.f32 0.0, %v2550
      %2552 = vmatmul.f32.gmra.mxu0 %v2429
      %v2553 = vpop.f32.mrf.mxu0
      %v2554 = vadd.f32 0.0, %v2553
      %2555 = vmatmul.f32.gmra.mxu0 %v2432
      %v2556 = vpop.f32.mrf.mxu0
      %v2557 = vadd.f32 0.0, %v2556
      %2558 = vmatmul.f32.gmra.mxu0 %v2435
      %v2559 = vpop.f32.mrf.mxu0
      %v2560 = vadd.f32 0.0, %v2559
      %2561 = vmatmul.f32.gmra.mxu0 %v2438
      %v2562 = vpop.f32.mrf.mxu0
      %v2563 = vadd.f32 0.0, %v2562
      %2564 = vmatmul.f32.gmra.mxu0 %v2441
      %v2565 = vpop.f32.mrf.mxu0
      %v2566 = vadd.f32 0.0, %v2565
      %2567 = vmatmul.f32.gmra.mxu0 %v2444
      %v2568 = vpop.f32.mrf.mxu0
      %v2569 = vadd.f32 0.0, %v2568
      %2570 = vmatmul.f32.gmra.mxu0 %v2447
      %v2571 = vpop.f32.mrf.mxu0
      %v2572 = vadd.f32 0.0, %v2571
      %2573 = vmatmul.f32.gmra.mxu0 %v2450
      %v2574 = vpop.f32.mrf.mxu0
      %v2575 = vadd.f32 0.0, %v2574
      %2576 = vdwg.mxu0
      %v2577 = vadd.f32 %v2267, %v2470
      %v2578 = vadd.f32 %v2268, %v2473
      %v2579 = vadd.f32 %v2269, %v2476
      %v2580 = vadd.f32 %v2270, %v2479
      %v2581 = vadd.f32 %v2271, %v2482
      %v2582 = vadd.f32 %v2272, %v2485
      %v2583 = vadd.f32 %v2273, %v2488
      %v2584 = vadd.f32 %v2274, %v2491
      %v2585 = vadd.f32 %v2275, %v2494
      %v2586 = vadd.f32 %v2276, %v2497
      %v2587 = vadd.f32 %v2277, %v2500
      %v2588 = vadd.f32 %v2278, %v2503
      %v2589 = vadd.f32 %v2279, %v2506
      %v2590 = vadd.f32 %v2280, %v2509
      %v2591 = vadd.f32 %v2281, %v2512
      %v2592 = vadd.f32 %v2282, %v2515
      %v2593 = vadd.f32 %v2283, %v2518
      %v2594 = vadd.f32 %v2284, %v2521
      %v2595 = vadd.f32 %v2285, %v2524
      %v2596 = vadd.f32 %v2286, %v2527
      %v2597 = vadd.f32 %v2287, %v2530
      %v2598 = vadd.f32 %v2288, %v2533
      %v2599 = vadd.f32 %v2289, %v2536
      %v2600 = vadd.f32 %v2290, %v2539
      %v2601 = vadd.f32 %v2291, %v2542
      %v2602 = vadd.f32 %v2292, %v2545
      %v2603 = vadd.f32 %v2293, %v2548
      %v2604 = vadd.f32 %v2294, %v2551
      %v2605 = vadd.f32 %v2295, %v2554
      %v2606 = vadd.f32 %v2296, %v2557
      %v2607 = vadd.f32 %v2297, %v2560
      %v2608 = vadd.f32 %v2298, %v2563
      %v2609 = vadd.f32 %v2299, %v2566
      %v2610 = vadd.f32 %v2300, %v2569
      %v2611 = vadd.f32 %v2301, %v2572
      %v2612 = vadd.f32 %v2302, %v2575
      %v2613 = vld [vmem:[%s191 + $0x26] sm:$0xff]
      %v2614 = vld [vmem:[%s191 + $0x2e] sm:$0xff]
      %v2615 = vld [vmem:[%s191 + $0x36] sm:$0xff]
      %v2616 = vld [vmem:[%s191 + $0x3e] sm:$0xff]
      %v2617 = vld [vmem:[%s191 + $0x46] sm:$0xff]
      %v2618 = vld [vmem:[%s191 + $0x4e] sm:$0xff]
      %v2619 = vld [vmem:[%s191 + $0x56] sm:$0xff]
      %v2620 = vld [vmem:[%s191 + $0x5e] sm:$0xff]
      %v2621 = vld [vmem:[%s191 + $0x66] sm:$0xff]
      %v2622 = vld [vmem:[%s191 + $0x6e] sm:$0xff]
      %v2623 = vld [vmem:[%s191 + $0x76] sm:$0xff]
      %v2624 = vld [vmem:[%s191 + $0x7e] sm:$0xff]
      %v2625 = vld [vmem:[%s191 + $0x86] sm:$0xff]
      %v2626 = vld [vmem:[%s191 + $0x8e] sm:$0xff]
      %v2627 = vld [vmem:[%s191 + $0x96] sm:$0xff]
      %v2628 = vld [vmem:[%s191 + $0x9e] sm:$0xff]
      %v2629 = vld [vmem:[%s191 + $0xa6] sm:$0xff]
      %v2630 = vld [vmem:[%s191 + $0xae] sm:$0xff]
      %v2631 = vld [vmem:[%s191 + $0xb6] sm:$0xff]
      %v2632 = vld [vmem:[%s191 + $0xbe] sm:$0xff]
      %v2633 = vld [vmem:[%s191 + $0xc6] sm:$0xff]
      %v2634 = vld [vmem:[%s191 + $0xce] sm:$0xff]
      %v2635 = vld [vmem:[%s191 + $0xd6] sm:$0xff]
      %v2636 = vld [vmem:[%s191 + $0xde] sm:$0xff]
      %v2637 = vld [vmem:[%s191 + $0xe6] sm:$0xff]
      %v2638 = vld [vmem:[%s191 + $0xee] sm:$0xff]
      %v2639 = vld [vmem:[%s191 + $0xf6] sm:$0xff]
      %v2640 = vld [vmem:[%s191 + $0xfe] sm:$0xff]
      %v2641 = vld [vmem:[%s191 + $0x106] sm:$0xff]
      %v2642 = vld [vmem:[%s191 + $0x10e] sm:$0xff]
      %v2643 = vld [vmem:[%s191 + $0x116] sm:$0xff]
      %v2644 = vld [vmem:[%s191 + $0x11e] sm:$0xff]
      %v2645 = vld [vmem:[%s191 + $0x126] sm:$0xff]
      %v2646 = vld [vmem:[%s191 + $0x12e] sm:$0xff]
      %v2647 = vld [vmem:[%s191 + $0x136] sm:$0xff]
      %v2648 = vld [vmem:[%s191 + $0x13e] sm:$0xff]
      %s2649 = scalar_lea.vmem %s196, 256
      %v2650 = vld [vmem:[%s2649] sm:$0xff]
      %v2651 = vld [vmem:[%s2649 + $0x8] sm:$0xff]
      %v2652 = vld [vmem:[%s2649 + $0x10] sm:$0xff]
      %v2653 = vld [vmem:[%s2649 + $0x18] sm:$0xff]
      %v2655 = vsel %vm286, %v2613, 0
      %v2658 = vsel %vm286, %v2614, 0
      %v2661 = vsel %vm286, %v2615, 0
      %v2664 = vsel %vm286, %v2616, 0
      %v2667 = vsel %vm286, %v2617, 0
      %v2670 = vsel %vm286, %v2618, 0
      %v2673 = vsel %vm286, %v2619, 0
      %v2676 = vsel %vm286, %v2620, 0
      %v2679 = vsel %vm286, %v2621, 0
      %v2682 = vsel %vm286, %v2622, 0
      %v2685 = vsel %vm286, %v2623, 0
      %v2688 = vsel %vm286, %v2624, 0
      %v2691 = vsel %vm286, %v2625, 0
      %v2694 = vsel %vm286, %v2626, 0
      %v2697 = vsel %vm286, %v2627, 0
      %v2700 = vsel %vm286, %v2628, 0
      %v2703 = vsel %vm286, %v2629, 0
      %v2706 = vsel %vm286, %v2630, 0
      %v2709 = vsel %vm286, %v2631, 0
      %v2712 = vsel %vm286, %v2632, 0
      %v2715 = vsel %vm286, %v2633, 0
      %v2718 = vsel %vm286, %v2634, 0
      %v2721 = vsel %vm286, %v2635, 0
      %v2724 = vsel %vm286, %v2636, 0
      %v2727 = vsel %vm286, %v2637, 0
      %v2730 = vsel %vm286, %v2638, 0
      %v2733 = vsel %vm286, %v2639, 0
      %v2736 = vsel %vm286, %v2640, 0
      %v2739 = vsel %vm286, %v2641, 0
      %v2742 = vsel %vm286, %v2642, 0
      %v2745 = vsel %vm286, %v2643, 0
      %v2748 = vsel %vm286, %v2644, 0
      %v2751 = vsel %vm286, %v2645, 0
      %v2754 = vsel %vm286, %v2646, 0
      %v2757 = vsel %vm286, %v2647, 0
      %v2760 = vsel %vm286, %v2648, 0
      %2762 = vmatpush.msra.mxu0 0.0
      %2763 = vmatpush.msra.mxu0 0.0
      %2764 = vmatpush.msra.mxu0 0.0
      %2765 = vmatpush.msra.mxu0 0.0
      %2766 = vmatpush.msra.mxu0 0.0
      %2767 = vmatpush.msra.mxu0 0.0
      %2768 = vmatpush.msra.mxu0 0.0
      %2769 = vmatpush.msra.mxu0 0.0
      %2770 = vmatpush.msra.mxu0 0.0
      %2771 = vmatpush.msra.mxu0 0.0
      %2772 = vmatpush.msra.mxu0 0.0
      %2773 = vmatpush.msra.mxu0 0.0
      %2774 = vmatpush.msra.mxu0 %v2653
      %2775 = vmatpush.msra.mxu0 %v2652
      %2776 = vmatpush.msra.mxu0 %v2651
      %2777 = vmatpush.msra.mxu0 %v2650
      %2778 = vmatmul.f32.gmra.mxu0 %v2655
      %v2779 = vpop.f32.mrf.mxu0
      %v2780 = vadd.f32 0.0, %v2779
      %2781 = vmatmul.f32.gmra.mxu0 %v2658
      %v2782 = vpop.f32.mrf.mxu0
      %v2783 = vadd.f32 0.0, %v2782
      %2784 = vmatmul.f32.gmra.mxu0 %v2661
      %v2785 = vpop.f32.mrf.mxu0
      %v2786 = vadd.f32 0.0, %v2785
      %2787 = vmatmul.f32.gmra.mxu0 %v2664
      %v2788 = vpop.f32.mrf.mxu0
      %v2789 = vadd.f32 0.0, %v2788
      %2790 = vmatmul.f32.gmra.mxu0 %v2667
      %v2791 = vpop.f32.mrf.mxu0
      %v2792 = vadd.f32 0.0, %v2791
      %2793 = vmatmul.f32.gmra.mxu0 %v2670
      %v2794 = vpop.f32.mrf.mxu0
      %v2795 = vadd.f32 0.0, %v2794
      %2796 = vmatmul.f32.gmra.mxu0 %v2673
      %v2797 = vpop.f32.mrf.mxu0
      %v2798 = vadd.f32 0.0, %v2797
      %2799 = vmatmul.f32.gmra.mxu0 %v2676
      %v2800 = vpop.f32.mrf.mxu0
      %v2801 = vadd.f32 0.0, %v2800
      %2802 = vmatmul.f32.gmra.mxu0 %v2679
      %v2803 = vpop.f32.mrf.mxu0
      %v2804 = vadd.f32 0.0, %v2803
      %2805 = vmatmul.f32.gmra.mxu0 %v2682
      %v2806 = vpop.f32.mrf.mxu0
      %v2807 = vadd.f32 0.0, %v2806
      %2808 = vmatmul.f32.gmra.mxu0 %v2685
      %v2809 = vpop.f32.mrf.mxu0
      %v2810 = vadd.f32 0.0, %v2809
      %2811 = vmatmul.f32.gmra.mxu0 %v2688
      %v2812 = vpop.f32.mrf.mxu0
      %v2813 = vadd.f32 0.0, %v2812
      %2814 = vmatmul.f32.gmra.mxu0 %v2691
      %v2815 = vpop.f32.mrf.mxu0
      %v2816 = vadd.f32 0.0, %v2815
      %2817 = vmatmul.f32.gmra.mxu0 %v2694
      %v2818 = vpop.f32.mrf.mxu0
      %v2819 = vadd.f32 0.0, %v2818
      %2820 = vmatmul.f32.gmra.mxu0 %v2697
      %v2821 = vpop.f32.mrf.mxu0
      %v2822 = vadd.f32 0.0, %v2821
      %2823 = vmatmul.f32.gmra.mxu0 %v2700
      %v2824 = vpop.f32.mrf.mxu0
      %v2825 = vadd.f32 0.0, %v2824
      %2826 = vmatmul.f32.gmra.mxu0 %v2703
      %v2827 = vpop.f32.mrf.mxu0
      %v2828 = vadd.f32 0.0, %v2827
      %2829 = vmatmul.f32.gmra.mxu0 %v2706
      %v2830 = vpop.f32.mrf.mxu0
      %v2831 = vadd.f32 0.0, %v2830
      %2832 = vmatmul.f32.gmra.mxu0 %v2709
      %v2833 = vpop.f32.mrf.mxu0
      %v2834 = vadd.f32 0.0, %v2833
      %2835 = vmatmul.f32.gmra.mxu0 %v2712
      %v2836 = vpop.f32.mrf.mxu0
      %v2837 = vadd.f32 0.0, %v2836
      %2838 = vmatmul.f32.gmra.mxu0 %v2715
      %v2839 = vpop.f32.mrf.mxu0
      %v2840 = vadd.f32 0.0, %v2839
      %2841 = vmatmul.f32.gmra.mxu0 %v2718
      %v2842 = vpop.f32.mrf.mxu0
      %v2843 = vadd.f32 0.0, %v2842
      %2844 = vmatmul.f32.gmra.mxu0 %v2721
      %v2845 = vpop.f32.mrf.mxu0
      %v2846 = vadd.f32 0.0, %v2845
      %2847 = vmatmul.f32.gmra.mxu0 %v2724
      %v2848 = vpop.f32.mrf.mxu0
      %v2849 = vadd.f32 0.0, %v2848
      %2850 = vmatmul.f32.gmra.mxu0 %v2727
      %v2851 = vpop.f32.mrf.mxu0
      %v2852 = vadd.f32 0.0, %v2851
      %2853 = vmatmul.f32.gmra.mxu0 %v2730
      %v2854 = vpop.f32.mrf.mxu0
      %v2855 = vadd.f32 0.0, %v2854
      %2856 = vmatmul.f32.gmra.mxu0 %v2733
      %v2857 = vpop.f32.mrf.mxu0
      %v2858 = vadd.f32 0.0, %v2857
      %2859 = vmatmul.f32.gmra.mxu0 %v2736
      %v2860 = vpop.f32.mrf.mxu0
      %v2861 = vadd.f32 0.0, %v2860
      %2862 = vmatmul.f32.gmra.mxu0 %v2739
      %v2863 = vpop.f32.mrf.mxu0
      %v2864 = vadd.f32 0.0, %v2863
      %2865 = vmatmul.f32.gmra.mxu0 %v2742
      %v2866 = vpop.f32.mrf.mxu0
      %v2867 = vadd.f32 0.0, %v2866
      %2868 = vmatmul.f32.gmra.mxu0 %v2745
      %v2869 = vpop.f32.mrf.mxu0
      %v2870 = vadd.f32 0.0, %v2869
      %2871 = vmatmul.f32.gmra.mxu0 %v2748
      %v2872 = vpop.f32.mrf.mxu0
      %v2873 = vadd.f32 0.0, %v2872
      %2874 = vmatmul.f32.gmra.mxu0 %v2751
      %v2875 = vpop.f32.mrf.mxu0
      %v2876 = vadd.f32 0.0, %v2875
      %2877 = vmatmul.f32.gmra.mxu0 %v2754
      %v2878 = vpop.f32.mrf.mxu0
      %v2879 = vadd.f32 0.0, %v2878
      %2880 = vmatmul.f32.gmra.mxu0 %v2757
      %v2881 = vpop.f32.mrf.mxu0
      %v2882 = vadd.f32 0.0, %v2881
      %2883 = vmatmul.f32.gmra.mxu0 %v2760
      %v2884 = vpop.f32.mrf.mxu0
      %v2885 = vadd.f32 0.0, %v2884
      %2886 = vdwg.mxu0
      %v2887 = vadd.f32 %v2577, %v2780
      %v2888 = vadd.f32 %v2578, %v2783
      %v2889 = vadd.f32 %v2579, %v2786
      %v2890 = vadd.f32 %v2580, %v2789
      %v2891 = vadd.f32 %v2581, %v2792
      %v2892 = vadd.f32 %v2582, %v2795
      %v2893 = vadd.f32 %v2583, %v2798
      %v2894 = vadd.f32 %v2584, %v2801
      %v2895 = vadd.f32 %v2585, %v2804
      %v2896 = vadd.f32 %v2586, %v2807
      %v2897 = vadd.f32 %v2587, %v2810
      %v2898 = vadd.f32 %v2588, %v2813
      %v2899 = vadd.f32 %v2589, %v2816
      %v2900 = vadd.f32 %v2590, %v2819
      %v2901 = vadd.f32 %v2591, %v2822
      %v2902 = vadd.f32 %v2592, %v2825
      %v2903 = vadd.f32 %v2593, %v2828
      %v2904 = vadd.f32 %v2594, %v2831
      %v2905 = vadd.f32 %v2595, %v2834
      %v2906 = vadd.f32 %v2596, %v2837
      %v2907 = vadd.f32 %v2597, %v2840
      %v2908 = vadd.f32 %v2598, %v2843
      %v2909 = vadd.f32 %v2599, %v2846
      %v2910 = vadd.f32 %v2600, %v2849
      %v2911 = vadd.f32 %v2601, %v2852
      %v2912 = vadd.f32 %v2602, %v2855
      %v2913 = vadd.f32 %v2603, %v2858
      %v2914 = vadd.f32 %v2604, %v2861
      %v2915 = vadd.f32 %v2605, %v2864
      %v2916 = vadd.f32 %v2606, %v2867
      %v2917 = vadd.f32 %v2607, %v2870
      %v2918 = vadd.f32 %v2608, %v2873
      %v2919 = vadd.f32 %v2609, %v2876
      %v2920 = vadd.f32 %v2610, %v2879
      %v2921 = vadd.f32 %v2611, %v2882
      %v2922 = vadd.f32 %v2612, %v2885
      %v2923 = vld [vmem:[%s199] sm:$0x1]
      %v2925 = vperm.slane %v2923, 0
      %v2927 = vadd.f32 %v2887, %v2925
      %v2928 = vadd.f32 %v2888, %v2925
      %v2929 = vadd.f32 %v2889, %v2925
      %v2930 = vadd.f32 %v2890, %v2925
      %v2931 = vadd.f32 %v2891, %v2925
      %v2932 = vadd.f32 %v2892, %v2925
      %v2933 = vadd.f32 %v2893, %v2925
      %v2934 = vadd.f32 %v2894, %v2925
      %v2935 = vadd.f32 %v2895, %v2925
      %v2936 = vadd.f32 %v2896, %v2925
      %v2937 = vadd.f32 %v2897, %v2925
      %v2938 = vadd.f32 %v2898, %v2925
      %v2939 = vadd.f32 %v2899, %v2925
      %v2940 = vadd.f32 %v2900, %v2925
      %v2941 = vadd.f32 %v2901, %v2925
      %v2942 = vadd.f32 %v2902, %v2925
      %v2943 = vadd.f32 %v2903, %v2925
      %v2944 = vadd.f32 %v2904, %v2925
      %v2945 = vadd.f32 %v2905, %v2925
      %v2946 = vadd.f32 %v2906, %v2925
      %v2947 = vadd.f32 %v2907, %v2925
      %v2948 = vadd.f32 %v2908, %v2925
      %v2949 = vadd.f32 %v2909, %v2925
      %v2950 = vadd.f32 %v2910, %v2925
      %v2951 = vadd.f32 %v2911, %v2925
      %v2952 = vadd.f32 %v2912, %v2925
      %v2953 = vadd.f32 %v2913, %v2925
      %v2954 = vadd.f32 %v2914, %v2925
      %v2955 = vadd.f32 %v2915, %v2925
      %v2956 = vadd.f32 %v2916, %v2925
      %v2957 = vadd.f32 %v2917, %v2925
      %v2958 = vadd.f32 %v2918, %v2925
      %v2959 = vadd.f32 %v2919, %v2925
      %v2960 = vadd.f32 %v2920, %v2925
      %v2961 = vadd.f32 %v2921, %v2925
      %v2962 = vadd.f32 %v2922, %v2925
      %v2963 = vxor.u32 %v2927, 2147483648
      %v2964 = vxor.u32 %v2928, 2147483648
      %v2965 = vxor.u32 %v2929, 2147483648
      %v2966 = vxor.u32 %v2930, 2147483648
      %v2967 = vxor.u32 %v2931, 2147483648
      %v2968 = vxor.u32 %v2932, 2147483648
      %v2969 = vxor.u32 %v2933, 2147483648
      %v2970 = vxor.u32 %v2934, 2147483648
      %v2971 = vxor.u32 %v2935, 2147483648
      %v2972 = vxor.u32 %v2936, 2147483648
      %v2973 = vxor.u32 %v2937, 2147483648
      %v2974 = vxor.u32 %v2938, 2147483648
      %v2975 = vxor.u32 %v2939, 2147483648
      %v2976 = vxor.u32 %v2940, 2147483648
      %v2977 = vxor.u32 %v2941, 2147483648
      %v2978 = vxor.u32 %v2942, 2147483648
      %v2979 = vxor.u32 %v2943, 2147483648
      %v2980 = vxor.u32 %v2944, 2147483648
      %v2981 = vxor.u32 %v2945, 2147483648
      %v2982 = vxor.u32 %v2946, 2147483648
      %v2983 = vxor.u32 %v2947, 2147483648
      %v2984 = vxor.u32 %v2948, 2147483648
      %v2985 = vxor.u32 %v2949, 2147483648
      %v2986 = vxor.u32 %v2950, 2147483648
      %v2987 = vxor.u32 %v2951, 2147483648
      %v2988 = vxor.u32 %v2952, 2147483648
      %v2989 = vxor.u32 %v2953, 2147483648
      %v2990 = vxor.u32 %v2954, 2147483648
      %v2991 = vxor.u32 %v2955, 2147483648
      %v2992 = vxor.u32 %v2956, 2147483648
      %v2993 = vxor.u32 %v2957, 2147483648
      %v2994 = vxor.u32 %v2958, 2147483648
      %v2995 = vxor.u32 %v2959, 2147483648
      %v2996 = vxor.u32 %v2960, 2147483648
      %v2997 = vxor.u32 %v2961, 2147483648
      %v2998 = vxor.u32 %v2962, 2147483648
      %v2999 = vmul.f32 %v2963, 1.442695
      %v3000 = vpow.pop %v2999
      %v3001 = vmul.f32 %v2964, 1.442695
      %v3002 = vpow.pop %v3001
      %v3003 = vmul.f32 %v2965, 1.442695
      %v3004 = vpow.pop %v3003
      %v3005 = vmul.f32 %v2966, 1.442695
      %v3006 = vpow.pop %v3005
      %v3007 = vmul.f32 %v2967, 1.442695
      %v3008 = vpow.pop %v3007
      %v3009 = vmul.f32 %v2968, 1.442695
      %v3010 = vpow.pop %v3009
      %v3011 = vmul.f32 %v2969, 1.442695
      %v3012 = vpow.pop %v3011
      %v3013 = vmul.f32 %v2970, 1.442695
      %v3014 = vpow.pop %v3013
      %v3015 = vmul.f32 %v2971, 1.442695
      %v3016 = vpow.pop %v3015
      %v3017 = vmul.f32 %v2972, 1.442695
      %v3018 = vpow.pop %v3017
      %v3019 = vmul.f32 %v2973, 1.442695
      %v3020 = vpow.pop %v3019
      %v3021 = vmul.f32 %v2974, 1.442695
      %v3022 = vpow.pop %v3021
      %v3023 = vmul.f32 %v2975, 1.442695
      %v3024 = vpow.pop %v3023
      %v3025 = vmul.f32 %v2976, 1.442695
      %v3026 = vpow.pop %v3025
      %v3027 = vmul.f32 %v2977, 1.442695
      %v3028 = vpow.pop %v3027
      %v3029 = vmul.f32 %v2978, 1.442695
      %v3030 = vpow.pop %v3029
      %v3031 = vmul.f32 %v2979, 1.442695
      %v3032 = vpow.pop %v3031
      %v3033 = vmul.f32 %v2980, 1.442695
      %v3034 = vpow.pop %v3033
      %v3035 = vmul.f32 %v2981, 1.442695
      %v3036 = vpow.pop %v3035
      %v3037 = vmul.f32 %v2982, 1.442695
      %v3038 = vpow.pop %v3037
      %v3039 = vmul.f32 %v2983, 1.442695
      %v3040 = vpow.pop %v3039
      %v3041 = vmul.f32 %v2984, 1.442695
      %v3042 = vpow.pop %v3041
      %v3043 = vmul.f32 %v2985, 1.442695
      %v3044 = vpow.pop %v3043
      %v3045 = vmul.f32 %v2986, 1.442695
      %v3046 = vpow.pop %v3045
      %v3047 = vmul.f32 %v2987, 1.442695
      %v3048 = vpow.pop %v3047
      %v3049 = vmul.f32 %v2988, 1.442695
      %v3050 = vpow.pop %v3049
      %v3051 = vmul.f32 %v2989, 1.442695
      %v3052 = vpow.pop %v3051
      %v3053 = vmul.f32 %v2990, 1.442695
      %v3054 = vpow.pop %v3053
      %v3055 = vmul.f32 %v2991, 1.442695
      %v3056 = vpow.pop %v3055
      %v3057 = vmul.f32 %v2992, 1.442695
      %v3058 = vpow.pop %v3057
      %v3059 = vmul.f32 %v2993, 1.442695
      %v3060 = vpow.pop %v3059
      %v3061 = vmul.f32 %v2994, 1.442695
      %v3062 = vpow.pop %v3061
      %v3063 = vmul.f32 %v2995, 1.442695
      %v3064 = vpow.pop %v3063
      %v3065 = vmul.f32 %v2996, 1.442695
      %v3066 = vpow.pop %v3065
      %v3067 = vmul.f32 %v2997, 1.442695
      %v3068 = vpow.pop %v3067
      %v3069 = vmul.f32 %v2998, 1.442695
      %v3070 = vpow.pop %v3069
      %v3071 = vadd.f32 %v3000, 1.0
      %v3072 = vadd.f32 %v3002, 1.0
      %v3073 = vadd.f32 %v3004, 1.0
      %v3074 = vadd.f32 %v3006, 1.0
      %v3075 = vadd.f32 %v3008, 1.0
      %v3076 = vadd.f32 %v3010, 1.0
      %v3077 = vadd.f32 %v3012, 1.0
      %v3078 = vadd.f32 %v3014, 1.0
      %v3079 = vadd.f32 %v3016, 1.0
      %v3080 = vadd.f32 %v3018, 1.0
      %v3081 = vadd.f32 %v3020, 1.0
      %v3082 = vadd.f32 %v3022, 1.0
      %v3083 = vadd.f32 %v3024, 1.0
      %v3084 = vadd.f32 %v3026, 1.0
      %v3085 = vadd.f32 %v3028, 1.0
      %v3086 = vadd.f32 %v3030, 1.0
      %v3087 = vadd.f32 %v3032, 1.0
      %v3088 = vadd.f32 %v3034, 1.0
      %v3089 = vadd.f32 %v3036, 1.0
      %v3090 = vadd.f32 %v3038, 1.0
      %v3091 = vadd.f32 %v3040, 1.0
      %v3092 = vadd.f32 %v3042, 1.0
      %v3093 = vadd.f32 %v3044, 1.0
      %v3094 = vadd.f32 %v3046, 1.0
      %v3095 = vadd.f32 %v3048, 1.0
      %v3096 = vadd.f32 %v3050, 1.0
      %v3097 = vadd.f32 %v3052, 1.0
      %v3098 = vadd.f32 %v3054, 1.0
      %v3099 = vadd.f32 %v3056, 1.0
      %v3100 = vadd.f32 %v3058, 1.0
      %v3101 = vadd.f32 %v3060, 1.0
      %v3102 = vadd.f32 %v3062, 1.0
      %v3103 = vadd.f32 %v3064, 1.0
      %v3104 = vadd.f32 %v3066, 1.0
      %v3105 = vadd.f32 %v3068, 1.0
      %v3106 = vadd.f32 %v3070, 1.0
      %v3107 = vrcp.pop %v3071
      %v3108 = vmul.f32 %v3071, %v3107
      %v3109 = vsub.f32 1.0, %v3108
      %v3110 = vmul.f32 %v3107, %v3109
      %v3111 = vadd.f32 %v3107, %v3110
      %vm3112 = vweird.f32 %v3071
      %vm3113 = vweird.f32 %v3107
      %vm3114 = vmor %vm3112, %vm3113
      %v3115 = vsel %vm3114, %v3107, %v3111
      %v3116 = vand.u32 2147483647, %v3071
      %vm3117 = vcmp.eq.f32.partialorder %v3116, 8.507059e+37
      %v3118 = vand.u32 %v3071, 2147483648
      %v3119 = vor.u32 1.1754944e-38, %v3118
      %v3120 = vsel %vm3117, %v3119, %v3115
      %v3121 = vmul.f32 1.0, %v3120
      %v3122 = vrcp.pop %v3072
      %v3123 = vmul.f32 %v3072, %v3122
      %v3124 = vsub.f32 1.0, %v3123
      %v3125 = vmul.f32 %v3122, %v3124
      %v3126 = vadd.f32 %v3122, %v3125
      %vm3127 = vweird.f32 %v3072
      %vm3128 = vweird.f32 %v3122
      %vm3129 = vmor %vm3127, %vm3128
      %v3130 = vsel %vm3129, %v3122, %v3126
      %v3131 = vand.u32 2147483647, %v3072
      %vm3132 = vcmp.eq.f32.partialorder %v3131, 8.507059e+37
      %v3133 = vand.u32 %v3072, 2147483648
      %v3134 = vor.u32 1.1754944e-38, %v3133
      %v3135 = vsel %vm3132, %v3134, %v3130
      %v3136 = vmul.f32 1.0, %v3135
      %v3137 = vrcp.pop %v3073
      %v3138 = vmul.f32 %v3073, %v3137
      %v3139 = vsub.f32 1.0, %v3138
      %v3140 = vmul.f32 %v3137, %v3139
      %v3141 = vadd.f32 %v3137, %v3140
      %vm3142 = vweird.f32 %v3073
      %vm3143 = vweird.f32 %v3137
      %vm3144 = vmor %vm3142, %vm3143
      %v3145 = vsel %vm3144, %v3137, %v3141
      %v3146 = vand.u32 2147483647, %v3073
      %vm3147 = vcmp.eq.f32.partialorder %v3146, 8.507059e+37
      %v3148 = vand.u32 %v3073, 2147483648
      %v3149 = vor.u32 1.1754944e-38, %v3148
      %v3150 = vsel %vm3147, %v3149, %v3145
      %v3151 = vmul.f32 1.0, %v3150
      %v3152 = vrcp.pop %v3074
      %v3153 = vmul.f32 %v3074, %v3152
      %v3154 = vsub.f32 1.0, %v3153
      %v3155 = vmul.f32 %v3152, %v3154
      %v3156 = vadd.f32 %v3152, %v3155
      %vm3157 = vweird.f32 %v3074
      %vm3158 = vweird.f32 %v3152
      %vm3159 = vmor %vm3157, %vm3158
      %v3160 = vsel %vm3159, %v3152, %v3156
      %v3161 = vand.u32 2147483647, %v3074
      %vm3162 = vcmp.eq.f32.partialorder %v3161, 8.507059e+37
      %v3163 = vand.u32 %v3074, 2147483648
      %v3164 = vor.u32 1.1754944e-38, %v3163
      %v3165 = vsel %vm3162, %v3164, %v3160
      %v3166 = vmul.f32 1.0, %v3165
      %v3167 = vrcp.pop %v3075
      %v3168 = vmul.f32 %v3075, %v3167
      %v3169 = vsub.f32 1.0, %v3168
      %v3170 = vmul.f32 %v3167, %v3169
      %v3171 = vadd.f32 %v3167, %v3170
      %vm3172 = vweird.f32 %v3075
      %vm3173 = vweird.f32 %v3167
      %vm3174 = vmor %vm3172, %vm3173
      %v3175 = vsel %vm3174, %v3167, %v3171
      %v3176 = vand.u32 2147483647, %v3075
      %vm3177 = vcmp.eq.f32.partialorder %v3176, 8.507059e+37
      %v3178 = vand.u32 %v3075, 2147483648
      %v3179 = vor.u32 1.1754944e-38, %v3178
      %v3180 = vsel %vm3177, %v3179, %v3175
      %v3181 = vmul.f32 1.0, %v3180
      %v3182 = vrcp.pop %v3076
      %v3183 = vmul.f32 %v3076, %v3182
      %v3184 = vsub.f32 1.0, %v3183
      %v3185 = vmul.f32 %v3182, %v3184
      %v3186 = vadd.f32 %v3182, %v3185
      %vm3187 = vweird.f32 %v3076
      %vm3188 = vweird.f32 %v3182
      %vm3189 = vmor %vm3187, %vm3188
      %v3190 = vsel %vm3189, %v3182, %v3186
      %v3191 = vand.u32 2147483647, %v3076
      %vm3192 = vcmp.eq.f32.partialorder %v3191, 8.507059e+37
      %v3193 = vand.u32 %v3076, 2147483648
      %v3194 = vor.u32 1.1754944e-38, %v3193
      %v3195 = vsel %vm3192, %v3194, %v3190
      %v3196 = vmul.f32 1.0, %v3195
      %v3197 = vrcp.pop %v3077
      %v3198 = vmul.f32 %v3077, %v3197
      %v3199 = vsub.f32 1.0, %v3198
      %v3200 = vmul.f32 %v3197, %v3199
      %v3201 = vadd.f32 %v3197, %v3200
      %vm3202 = vweird.f32 %v3077
      %vm3203 = vweird.f32 %v3197
      %vm3204 = vmor %vm3202, %vm3203
      %v3205 = vsel %vm3204, %v3197, %v3201
      %v3206 = vand.u32 2147483647, %v3077
      %vm3207 = vcmp.eq.f32.partialorder %v3206, 8.507059e+37
      %v3208 = vand.u32 %v3077, 2147483648
      %v3209 = vor.u32 1.1754944e-38, %v3208
      %v3210 = vsel %vm3207, %v3209, %v3205
      %v3211 = vmul.f32 1.0, %v3210
      %v3212 = vrcp.pop %v3078
      %v3213 = vmul.f32 %v3078, %v3212
      %v3214 = vsub.f32 1.0, %v3213
      %v3215 = vmul.f32 %v3212, %v3214
      %v3216 = vadd.f32 %v3212, %v3215
      %vm3217 = vweird.f32 %v3078
      %vm3218 = vweird.f32 %v3212
      %vm3219 = vmor %vm3217, %vm3218
      %v3220 = vsel %vm3219, %v3212, %v3216
      %v3221 = vand.u32 2147483647, %v3078
      %vm3222 = vcmp.eq.f32.partialorder %v3221, 8.507059e+37
      %v3223 = vand.u32 %v3078, 2147483648
      %v3224 = vor.u32 1.1754944e-38, %v3223
      %v3225 = vsel %vm3222, %v3224, %v3220
      %v3226 = vmul.f32 1.0, %v3225
      %v3227 = vrcp.pop %v3079
      %v3228 = vmul.f32 %v3079, %v3227
      %v3229 = vsub.f32 1.0, %v3228
      %v3230 = vmul.f32 %v3227, %v3229
      %v3231 = vadd.f32 %v3227, %v3230
      %vm3232 = vweird.f32 %v3079
      %vm3233 = vweird.f32 %v3227
      %vm3234 = vmor %vm3232, %vm3233
      %v3235 = vsel %vm3234, %v3227, %v3231
      %v3236 = vand.u32 2147483647, %v3079
      %vm3237 = vcmp.eq.f32.partialorder %v3236, 8.507059e+37
      %v3238 = vand.u32 %v3079, 2147483648
      %v3239 = vor.u32 1.1754944e-38, %v3238
      %v3240 = vsel %vm3237, %v3239, %v3235
      %v3241 = vmul.f32 1.0, %v3240
      %v3242 = vrcp.pop %v3080
      %v3243 = vmul.f32 %v3080, %v3242
      %v3244 = vsub.f32 1.0, %v3243
      %v3245 = vmul.f32 %v3242, %v3244
      %v3246 = vadd.f32 %v3242, %v3245
      %vm3247 = vweird.f32 %v3080
      %vm3248 = vweird.f32 %v3242
      %vm3249 = vmor %vm3247, %vm3248
      %v3250 = vsel %vm3249, %v3242, %v3246
      %v3251 = vand.u32 2147483647, %v3080
      %vm3252 = vcmp.eq.f32.partialorder %v3251, 8.507059e+37
      %v3253 = vand.u32 %v3080, 2147483648
      %v3254 = vor.u32 1.1754944e-38, %v3253
      %v3255 = vsel %vm3252, %v3254, %v3250
      %v3256 = vmul.f32 1.0, %v3255
      %v3257 = vrcp.pop %v3081
      %v3258 = vmul.f32 %v3081, %v3257
      %v3259 = vsub.f32 1.0, %v3258
      %v3260 = vmul.f32 %v3257, %v3259
      %v3261 = vadd.f32 %v3257, %v3260
      %vm3262 = vweird.f32 %v3081
      %vm3263 = vweird.f32 %v3257
      %vm3264 = vmor %vm3262, %vm3263
      %v3265 = vsel %vm3264, %v3257, %v3261
      %v3266 = vand.u32 2147483647, %v3081
      %vm3267 = vcmp.eq.f32.partialorder %v3266, 8.507059e+37
      %v3268 = vand.u32 %v3081, 2147483648
      %v3269 = vor.u32 1.1754944e-38, %v3268
      %v3270 = vsel %vm3267, %v3269, %v3265
      %v3271 = vmul.f32 1.0, %v3270
      %v3272 = vrcp.pop %v3082
      %v3273 = vmul.f32 %v3082, %v3272
      %v3274 = vsub.f32 1.0, %v3273
      %v3275 = vmul.f32 %v3272, %v3274
      %v3276 = vadd.f32 %v3272, %v3275
      %vm3277 = vweird.f32 %v3082
      %vm3278 = vweird.f32 %v3272
      %vm3279 = vmor %vm3277, %vm3278
      %v3280 = vsel %vm3279, %v3272, %v3276
      %v3281 = vand.u32 2147483647, %v3082
      %vm3282 = vcmp.eq.f32.partialorder %v3281, 8.507059e+37
      %v3283 = vand.u32 %v3082, 2147483648
      %v3284 = vor.u32 1.1754944e-38, %v3283
      %v3285 = vsel %vm3282, %v3284, %v3280
      %v3286 = vmul.f32 1.0, %v3285
      %v3287 = vrcp.pop %v3083
      %v3288 = vmul.f32 %v3083, %v3287
      %v3289 = vsub.f32 1.0, %v3288
      %v3290 = vmul.f32 %v3287, %v3289
      %v3291 = vadd.f32 %v3287, %v3290
      %vm3292 = vweird.f32 %v3083
      %vm3293 = vweird.f32 %v3287
      %vm3294 = vmor %vm3292, %vm3293
      %v3295 = vsel %vm3294, %v3287, %v3291
      %v3296 = vand.u32 2147483647, %v3083
      %vm3297 = vcmp.eq.f32.partialorder %v3296, 8.507059e+37
      %v3298 = vand.u32 %v3083, 2147483648
      %v3299 = vor.u32 1.1754944e-38, %v3298
      %v3300 = vsel %vm3297, %v3299, %v3295
      %v3301 = vmul.f32 1.0, %v3300
      %v3302 = vrcp.pop %v3084
      %v3303 = vmul.f32 %v3084, %v3302
      %v3304 = vsub.f32 1.0, %v3303
      %v3305 = vmul.f32 %v3302, %v3304
      %v3306 = vadd.f32 %v3302, %v3305
      %vm3307 = vweird.f32 %v3084
      %vm3308 = vweird.f32 %v3302
      %vm3309 = vmor %vm3307, %vm3308
      %v3310 = vsel %vm3309, %v3302, %v3306
      %v3311 = vand.u32 2147483647, %v3084
      %vm3312 = vcmp.eq.f32.partialorder %v3311, 8.507059e+37
      %v3313 = vand.u32 %v3084, 2147483648
      %v3314 = vor.u32 1.1754944e-38, %v3313
      %v3315 = vsel %vm3312, %v3314, %v3310
      %v3316 = vmul.f32 1.0, %v3315
      %v3317 = vrcp.pop %v3085
      %v3318 = vmul.f32 %v3085, %v3317
      %v3319 = vsub.f32 1.0, %v3318
      %v3320 = vmul.f32 %v3317, %v3319
      %v3321 = vadd.f32 %v3317, %v3320
      %vm3322 = vweird.f32 %v3085
      %vm3323 = vweird.f32 %v3317
      %vm3324 = vmor %vm3322, %vm3323
      %v3325 = vsel %vm3324, %v3317, %v3321
      %v3326 = vand.u32 2147483647, %v3085
      %vm3327 = vcmp.eq.f32.partialorder %v3326, 8.507059e+37
      %v3328 = vand.u32 %v3085, 2147483648
      %v3329 = vor.u32 1.1754944e-38, %v3328
      %v3330 = vsel %vm3327, %v3329, %v3325
      %v3331 = vmul.f32 1.0, %v3330
      %v3332 = vrcp.pop %v3086
      %v3333 = vmul.f32 %v3086, %v3332
      %v3334 = vsub.f32 1.0, %v3333
      %v3335 = vmul.f32 %v3332, %v3334
      %v3336 = vadd.f32 %v3332, %v3335
      %vm3337 = vweird.f32 %v3086
      %vm3338 = vweird.f32 %v3332
      %vm3339 = vmor %vm3337, %vm3338
      %v3340 = vsel %vm3339, %v3332, %v3336
      %v3341 = vand.u32 2147483647, %v3086
      %vm3342 = vcmp.eq.f32.partialorder %v3341, 8.507059e+37
      %v3343 = vand.u32 %v3086, 2147483648
      %v3344 = vor.u32 1.1754944e-38, %v3343
      %v3345 = vsel %vm3342, %v3344, %v3340
      %v3346 = vmul.f32 1.0, %v3345
      %v3347 = vrcp.pop %v3087
      %v3348 = vmul.f32 %v3087, %v3347
      %v3349 = vsub.f32 1.0, %v3348
      %v3350 = vmul.f32 %v3347, %v3349
      %v3351 = vadd.f32 %v3347, %v3350
      %vm3352 = vweird.f32 %v3087
      %vm3353 = vweird.f32 %v3347
      %vm3354 = vmor %vm3352, %vm3353
      %v3355 = vsel %vm3354, %v3347, %v3351
      %v3356 = vand.u32 2147483647, %v3087
      %vm3357 = vcmp.eq.f32.partialorder %v3356, 8.507059e+37
      %v3358 = vand.u32 %v3087, 2147483648
      %v3359 = vor.u32 1.1754944e-38, %v3358
      %v3360 = vsel %vm3357, %v3359, %v3355
      %v3361 = vmul.f32 1.0, %v3360
      %v3362 = vrcp.pop %v3088
      %v3363 = vmul.f32 %v3088, %v3362
      %v3364 = vsub.f32 1.0, %v3363
      %v3365 = vmul.f32 %v3362, %v3364
      %v3366 = vadd.f32 %v3362, %v3365
      %vm3367 = vweird.f32 %v3088
      %vm3368 = vweird.f32 %v3362
      %vm3369 = vmor %vm3367, %vm3368
      %v3370 = vsel %vm3369, %v3362, %v3366
      %v3371 = vand.u32 2147483647, %v3088
      %vm3372 = vcmp.eq.f32.partialorder %v3371, 8.507059e+37
      %v3373 = vand.u32 %v3088, 2147483648
      %v3374 = vor.u32 1.1754944e-38, %v3373
      %v3375 = vsel %vm3372, %v3374, %v3370
      %v3376 = vmul.f32 1.0, %v3375
      %v3377 = vrcp.pop %v3089
      %v3378 = vmul.f32 %v3089, %v3377
      %v3379 = vsub.f32 1.0, %v3378
      %v3380 = vmul.f32 %v3377, %v3379
      %v3381 = vadd.f32 %v3377, %v3380
      %vm3382 = vweird.f32 %v3089
      %vm3383 = vweird.f32 %v3377
      %vm3384 = vmor %vm3382, %vm3383
      %v3385 = vsel %vm3384, %v3377, %v3381
      %v3386 = vand.u32 2147483647, %v3089
      %vm3387 = vcmp.eq.f32.partialorder %v3386, 8.507059e+37
      %v3388 = vand.u32 %v3089, 2147483648
      %v3389 = vor.u32 1.1754944e-38, %v3388
      %v3390 = vsel %vm3387, %v3389, %v3385
      %v3391 = vmul.f32 1.0, %v3390
      %v3392 = vrcp.pop %v3090
      %v3393 = vmul.f32 %v3090, %v3392
      %v3394 = vsub.f32 1.0, %v3393
      %v3395 = vmul.f32 %v3392, %v3394
      %v3396 = vadd.f32 %v3392, %v3395
      %vm3397 = vweird.f32 %v3090
      %vm3398 = vweird.f32 %v3392
      %vm3399 = vmor %vm3397, %vm3398
      %v3400 = vsel %vm3399, %v3392, %v3396
      %v3401 = vand.u32 2147483647, %v3090
      %vm3402 = vcmp.eq.f32.partialorder %v3401, 8.507059e+37
      %v3403 = vand.u32 %v3090, 2147483648
      %v3404 = vor.u32 1.1754944e-38, %v3403
      %v3405 = vsel %vm3402, %v3404, %v3400
      %v3406 = vmul.f32 1.0, %v3405
      %v3407 = vrcp.pop %v3091
      %v3408 = vmul.f32 %v3091, %v3407
      %v3409 = vsub.f32 1.0, %v3408
      %v3410 = vmul.f32 %v3407, %v3409
      %v3411 = vadd.f32 %v3407, %v3410
      %vm3412 = vweird.f32 %v3091
      %vm3413 = vweird.f32 %v3407
      %vm3414 = vmor %vm3412, %vm3413
      %v3415 = vsel %vm3414, %v3407, %v3411
      %v3416 = vand.u32 2147483647, %v3091
      %vm3417 = vcmp.eq.f32.partialorder %v3416, 8.507059e+37
      %v3418 = vand.u32 %v3091, 2147483648
      %v3419 = vor.u32 1.1754944e-38, %v3418
      %v3420 = vsel %vm3417, %v3419, %v3415
      %v3421 = vmul.f32 1.0, %v3420
      %v3422 = vrcp.pop %v3092
      %v3423 = vmul.f32 %v3092, %v3422
      %v3424 = vsub.f32 1.0, %v3423
      %v3425 = vmul.f32 %v3422, %v3424
      %v3426 = vadd.f32 %v3422, %v3425
      %vm3427 = vweird.f32 %v3092
      %vm3428 = vweird.f32 %v3422
      %vm3429 = vmor %vm3427, %vm3428
      %v3430 = vsel %vm3429, %v3422, %v3426
      %v3431 = vand.u32 2147483647, %v3092
      %vm3432 = vcmp.eq.f32.partialorder %v3431, 8.507059e+37
      %v3433 = vand.u32 %v3092, 2147483648
      %v3434 = vor.u32 1.1754944e-38, %v3433
      %v3435 = vsel %vm3432, %v3434, %v3430
      %v3436 = vmul.f32 1.0, %v3435
      %v3437 = vrcp.pop %v3093
      %v3438 = vmul.f32 %v3093, %v3437
      %v3439 = vsub.f32 1.0, %v3438
      %v3440 = vmul.f32 %v3437, %v3439
      %v3441 = vadd.f32 %v3437, %v3440
      %vm3442 = vweird.f32 %v3093
      %vm3443 = vweird.f32 %v3437
      %vm3444 = vmor %vm3442, %vm3443
      %v3445 = vsel %vm3444, %v3437, %v3441
      %v3446 = vand.u32 2147483647, %v3093
      %vm3447 = vcmp.eq.f32.partialorder %v3446, 8.507059e+37
      %v3448 = vand.u32 %v3093, 2147483648
      %v3449 = vor.u32 1.1754944e-38, %v3448
      %v3450 = vsel %vm3447, %v3449, %v3445
      %v3451 = vmul.f32 1.0, %v3450
      %v3452 = vrcp.pop %v3094
      %v3453 = vmul.f32 %v3094, %v3452
      %v3454 = vsub.f32 1.0, %v3453
      %v3455 = vmul.f32 %v3452, %v3454
      %v3456 = vadd.f32 %v3452, %v3455
      %vm3457 = vweird.f32 %v3094
      %vm3458 = vweird.f32 %v3452
      %vm3459 = vmor %vm3457, %vm3458
      %v3460 = vsel %vm3459, %v3452, %v3456
      %v3461 = vand.u32 2147483647, %v3094
      %vm3462 = vcmp.eq.f32.partialorder %v3461, 8.507059e+37
      %v3463 = vand.u32 %v3094, 2147483648
      %v3464 = vor.u32 1.1754944e-38, %v3463
      %v3465 = vsel %vm3462, %v3464, %v3460
      %v3466 = vmul.f32 1.0, %v3465
      %v3467 = vrcp.pop %v3095
      %v3468 = vmul.f32 %v3095, %v3467
      %v3469 = vsub.f32 1.0, %v3468
      %v3470 = vmul.f32 %v3467, %v3469
      %v3471 = vadd.f32 %v3467, %v3470
      %vm3472 = vweird.f32 %v3095
      %vm3473 = vweird.f32 %v3467
      %vm3474 = vmor %vm3472, %vm3473
      %v3475 = vsel %vm3474, %v3467, %v3471
      %v3476 = vand.u32 2147483647, %v3095
      %vm3477 = vcmp.eq.f32.partialorder %v3476, 8.507059e+37
      %v3478 = vand.u32 %v3095, 2147483648
      %v3479 = vor.u32 1.1754944e-38, %v3478
      %v3480 = vsel %vm3477, %v3479, %v3475
      %v3481 = vmul.f32 1.0, %v3480
      %v3482 = vrcp.pop %v3096
      %v3483 = vmul.f32 %v3096, %v3482
      %v3484 = vsub.f32 1.0, %v3483
      %v3485 = vmul.f32 %v3482, %v3484
      %v3486 = vadd.f32 %v3482, %v3485
      %vm3487 = vweird.f32 %v3096
      %vm3488 = vweird.f32 %v3482
      %vm3489 = vmor %vm3487, %vm3488
      %v3490 = vsel %vm3489, %v3482, %v3486
      %v3491 = vand.u32 2147483647, %v3096
      %vm3492 = vcmp.eq.f32.partialorder %v3491, 8.507059e+37
      %v3493 = vand.u32 %v3096, 2147483648
      %v3494 = vor.u32 1.1754944e-38, %v3493
      %v3495 = vsel %vm3492, %v3494, %v3490
      %v3496 = vmul.f32 1.0, %v3495
      %v3497 = vrcp.pop %v3097
      %v3498 = vmul.f32 %v3097, %v3497
      %v3499 = vsub.f32 1.0, %v3498
      %v3500 = vmul.f32 %v3497, %v3499
      %v3501 = vadd.f32 %v3497, %v3500
      %vm3502 = vweird.f32 %v3097
      %vm3503 = vweird.f32 %v3497
      %vm3504 = vmor %vm3502, %vm3503
      %v3505 = vsel %vm3504, %v3497, %v3501
      %v3506 = vand.u32 2147483647, %v3097
      %vm3507 = vcmp.eq.f32.partialorder %v3506, 8.507059e+37
      %v3508 = vand.u32 %v3097, 2147483648
      %v3509 = vor.u32 1.1754944e-38, %v3508
      %v3510 = vsel %vm3507, %v3509, %v3505
      %v3511 = vmul.f32 1.0, %v3510
      %v3512 = vrcp.pop %v3098
      %v3513 = vmul.f32 %v3098, %v3512
      %v3514 = vsub.f32 1.0, %v3513
      %v3515 = vmul.f32 %v3512, %v3514
      %v3516 = vadd.f32 %v3512, %v3515
      %vm3517 = vweird.f32 %v3098
      %vm3518 = vweird.f32 %v3512
      %vm3519 = vmor %vm3517, %vm3518
      %v3520 = vsel %vm3519, %v3512, %v3516
      %v3521 = vand.u32 2147483647, %v3098
      %vm3522 = vcmp.eq.f32.partialorder %v3521, 8.507059e+37
      %v3523 = vand.u32 %v3098, 2147483648
      %v3524 = vor.u32 1.1754944e-38, %v3523
      %v3525 = vsel %vm3522, %v3524, %v3520
      %v3526 = vmul.f32 1.0, %v3525
      %v3527 = vrcp.pop %v3099
      %v3528 = vmul.f32 %v3099, %v3527
      %v3529 = vsub.f32 1.0, %v3528
      %v3530 = vmul.f32 %v3527, %v3529
      %v3531 = vadd.f32 %v3527, %v3530
      %vm3532 = vweird.f32 %v3099
      %vm3533 = vweird.f32 %v3527
      %vm3534 = vmor %vm3532, %vm3533
      %v3535 = vsel %vm3534, %v3527, %v3531
      %v3536 = vand.u32 2147483647, %v3099
      %vm3537 = vcmp.eq.f32.partialorder %v3536, 8.507059e+37
      %v3538 = vand.u32 %v3099, 2147483648
      %v3539 = vor.u32 1.1754944e-38, %v3538
      %v3540 = vsel %vm3537, %v3539, %v3535
      %v3541 = vmul.f32 1.0, %v3540
      %v3542 = vrcp.pop %v3100
      %v3543 = vmul.f32 %v3100, %v3542
      %v3544 = vsub.f32 1.0, %v3543
      %v3545 = vmul.f32 %v3542, %v3544
      %v3546 = vadd.f32 %v3542, %v3545
      %vm3547 = vweird.f32 %v3100
      %vm3548 = vweird.f32 %v3542
      %vm3549 = vmor %vm3547, %vm3548
      %v3550 = vsel %vm3549, %v3542, %v3546
      %v3551 = vand.u32 2147483647, %v3100
      %vm3552 = vcmp.eq.f32.partialorder %v3551, 8.507059e+37
      %v3553 = vand.u32 %v3100, 2147483648
      %v3554 = vor.u32 1.1754944e-38, %v3553
      %v3555 = vsel %vm3552, %v3554, %v3550
      %v3556 = vmul.f32 1.0, %v3555
      %v3557 = vrcp.pop %v3101
      %v3558 = vmul.f32 %v3101, %v3557
      %v3559 = vsub.f32 1.0, %v3558
      %v3560 = vmul.f32 %v3557, %v3559
      %v3561 = vadd.f32 %v3557, %v3560
      %vm3562 = vweird.f32 %v3101
      %vm3563 = vweird.f32 %v3557
      %vm3564 = vmor %vm3562, %vm3563
      %v3565 = vsel %vm3564, %v3557, %v3561
      %v3566 = vand.u32 2147483647, %v3101
      %vm3567 = vcmp.eq.f32.partialorder %v3566, 8.507059e+37
      %v3568 = vand.u32 %v3101, 2147483648
      %v3569 = vor.u32 1.1754944e-38, %v3568
      %v3570 = vsel %vm3567, %v3569, %v3565
      %v3571 = vmul.f32 1.0, %v3570
      %v3572 = vrcp.pop %v3102
      %v3573 = vmul.f32 %v3102, %v3572
      %v3574 = vsub.f32 1.0, %v3573
      %v3575 = vmul.f32 %v3572, %v3574
      %v3576 = vadd.f32 %v3572, %v3575
      %vm3577 = vweird.f32 %v3102
      %vm3578 = vweird.f32 %v3572
      %vm3579 = vmor %vm3577, %vm3578
      %v3580 = vsel %vm3579, %v3572, %v3576
      %v3581 = vand.u32 2147483647, %v3102
      %vm3582 = vcmp.eq.f32.partialorder %v3581, 8.507059e+37
      %v3583 = vand.u32 %v3102, 2147483648
      %v3584 = vor.u32 1.1754944e-38, %v3583
      %v3585 = vsel %vm3582, %v3584, %v3580
      %v3586 = vmul.f32 1.0, %v3585
      %v3587 = vrcp.pop %v3103
      %v3588 = vmul.f32 %v3103, %v3587
      %v3589 = vsub.f32 1.0, %v3588
      %v3590 = vmul.f32 %v3587, %v3589
      %v3591 = vadd.f32 %v3587, %v3590
      %vm3592 = vweird.f32 %v3103
      %vm3593 = vweird.f32 %v3587
      %vm3594 = vmor %vm3592, %vm3593
      %v3595 = vsel %vm3594, %v3587, %v3591
      %v3596 = vand.u32 2147483647, %v3103
      %vm3597 = vcmp.eq.f32.partialorder %v3596, 8.507059e+37
      %v3598 = vand.u32 %v3103, 2147483648
      %v3599 = vor.u32 1.1754944e-38, %v3598
      %v3600 = vsel %vm3597, %v3599, %v3595
      %v3601 = vmul.f32 1.0, %v3600
      %v3602 = vrcp.pop %v3104
      %v3603 = vmul.f32 %v3104, %v3602
      %v3604 = vsub.f32 1.0, %v3603
      %v3605 = vmul.f32 %v3602, %v3604
      %v3606 = vadd.f32 %v3602, %v3605
      %vm3607 = vweird.f32 %v3104
      %vm3608 = vweird.f32 %v3602
      %vm3609 = vmor %vm3607, %vm3608
      %v3610 = vsel %vm3609, %v3602, %v3606
      %v3611 = vand.u32 2147483647, %v3104
      %vm3612 = vcmp.eq.f32.partialorder %v3611, 8.507059e+37
      %v3613 = vand.u32 %v3104, 2147483648
      %v3614 = vor.u32 1.1754944e-38, %v3613
      %v3615 = vsel %vm3612, %v3614, %v3610
      %v3616 = vmul.f32 1.0, %v3615
      %v3617 = vrcp.pop %v3105
      %v3618 = vmul.f32 %v3105, %v3617
      %v3619 = vsub.f32 1.0, %v3618
      %v3620 = vmul.f32 %v3617, %v3619
      %v3621 = vadd.f32 %v3617, %v3620
      %vm3622 = vweird.f32 %v3105
      %vm3623 = vweird.f32 %v3617
      %vm3624 = vmor %vm3622, %vm3623
      %v3625 = vsel %vm3624, %v3617, %v3621
      %v3626 = vand.u32 2147483647, %v3105
      %vm3627 = vcmp.eq.f32.partialorder %v3626, 8.507059e+37
      %v3628 = vand.u32 %v3105, 2147483648
      %v3629 = vor.u32 1.1754944e-38, %v3628
      %v3630 = vsel %vm3627, %v3629, %v3625
      %v3631 = vmul.f32 1.0, %v3630
      %v3632 = vrcp.pop %v3106
      %v3633 = vmul.f32 %v3106, %v3632
      %v3634 = vsub.f32 1.0, %v3633
      %v3635 = vmul.f32 %v3632, %v3634
      %v3636 = vadd.f32 %v3632, %v3635
      %vm3637 = vweird.f32 %v3106
      %vm3638 = vweird.f32 %v3632
      %vm3639 = vmor %vm3637, %vm3638
      %v3640 = vsel %vm3639, %v3632, %v3636
      %v3641 = vand.u32 2147483647, %v3106
      %vm3642 = vcmp.eq.f32.partialorder %v3641, 8.507059e+37
      %v3643 = vand.u32 %v3106, 2147483648
      %v3644 = vor.u32 1.1754944e-38, %v3643
      %v3645 = vsel %vm3642, %v3644, %v3640
      %v3646 = vmul.f32 1.0, %v3645
      %v3647 = vmul.f32 %v2927, %v3121
      %v3648 = vmul.f32 %v2928, %v3136
      %v3649 = vmul.f32 %v2929, %v3151
      %v3650 = vmul.f32 %v2930, %v3166
      %v3651 = vmul.f32 %v2931, %v3181
      %v3652 = vmul.f32 %v2932, %v3196
      %v3653 = vmul.f32 %v2933, %v3211
      %v3654 = vmul.f32 %v2934, %v3226
      %v3655 = vmul.f32 %v2935, %v3241
      %v3656 = vmul.f32 %v2936, %v3256
      %v3657 = vmul.f32 %v2937, %v3271
      %v3658 = vmul.f32 %v2938, %v3286
      %v3659 = vmul.f32 %v2939, %v3301
      %v3660 = vmul.f32 %v2940, %v3316
      %v3661 = vmul.f32 %v2941, %v3331
      %v3662 = vmul.f32 %v2942, %v3346
      %v3663 = vmul.f32 %v2943, %v3361
      %v3664 = vmul.f32 %v2944, %v3376
      %v3665 = vmul.f32 %v2945, %v3391
      %v3666 = vmul.f32 %v2946, %v3406
      %v3667 = vmul.f32 %v2947, %v3421
      %v3668 = vmul.f32 %v2948, %v3436
      %v3669 = vmul.f32 %v2949, %v3451
      %v3670 = vmul.f32 %v2950, %v3466
      %v3671 = vmul.f32 %v2951, %v3481
      %v3672 = vmul.f32 %v2952, %v3496
      %v3673 = vmul.f32 %v2953, %v3511
      %v3674 = vmul.f32 %v2954, %v3526
      %v3675 = vmul.f32 %v2955, %v3541
      %v3676 = vmul.f32 %v2956, %v3556
      %v3677 = vmul.f32 %v2957, %v3571
      %v3678 = vmul.f32 %v2958, %v3586
      %v3679 = vmul.f32 %v2959, %v3601
      %v3680 = vmul.f32 %v2960, %v3616
      %v3681 = vmul.f32 %v2961, %v3631
      %v3682 = vmul.f32 %v2962, %v3646
      %3683 = vst.msk [vmem:[%s204] sm:$0xff] %vm286, %v3647
      %3684 = vst.msk [vmem:[%s204 + $0x8] sm:$0xff] %vm286, %v3648
      %3685 = vst.msk [vmem:[%s204 + $0x10] sm:$0xff] %vm286, %v3649
      %3686 = vst.msk [vmem:[%s204 + $0x18] sm:$0xff] %vm286, %v3650
      %3687 = vst.msk [vmem:[%s204 + $0x20] sm:$0xff] %vm286, %v3651
      %3688 = vst.msk [vmem:[%s204 + $0x28] sm:$0xff] %vm286, %v3652
      %3689 = vst.msk [vmem:[%s204 + $0x30] sm:$0xff] %vm286, %v3653
      %3690 = vst.msk [vmem:[%s204 + $0x38] sm:$0xff] %vm286, %v3654
      %3691 = vst.msk [vmem:[%s204 + $0x40] sm:$0xff] %vm286, %v3655
      %3692 = vst.msk [vmem:[%s204 + $0x48] sm:$0xff] %vm286, %v3656
      %3693 = vst.msk [vmem:[%s204 + $0x50] sm:$0xff] %vm286, %v3657
      %3694 = vst.msk [vmem:[%s204 + $0x58] sm:$0xff] %vm286, %v3658
      %3695 = vst.msk [vmem:[%s204 + $0x60] sm:$0xff] %vm286, %v3659
      %3696 = vst.msk [vmem:[%s204 + $0x68] sm:$0xff] %vm286, %v3660
      %3697 = vst.msk [vmem:[%s204 + $0x70] sm:$0xff] %vm286, %v3661
      %3698 = vst.msk [vmem:[%s204 + $0x78] sm:$0xff] %vm286, %v3662
      %3699 = vst.msk [vmem:[%s204 + $0x80] sm:$0xff] %vm286, %v3663
      %3700 = vst.msk [vmem:[%s204 + $0x88] sm:$0xff] %vm286, %v3664
      %3701 = vst.msk [vmem:[%s204 + $0x90] sm:$0xff] %vm286, %v3665
      %3702 = vst.msk [vmem:[%s204 + $0x98] sm:$0xff] %vm286, %v3666
      %3703 = vst.msk [vmem:[%s204 + $0xa0] sm:$0xff] %vm286, %v3667
      %3704 = vst.msk [vmem:[%s204 + $0xa8] sm:$0xff] %vm286, %v3668
      %3705 = vst.msk [vmem:[%s204 + $0xb0] sm:$0xff] %vm286, %v3669
      %3706 = vst.msk [vmem:[%s204 + $0xb8] sm:$0xff] %vm286, %v3670
      %3707 = vst.msk [vmem:[%s204 + $0xc0] sm:$0xff] %vm286, %v3671
      %3708 = vst.msk [vmem:[%s204 + $0xc8] sm:$0xff] %vm286, %v3672
      %3709 = vst.msk [vmem:[%s204 + $0xd0] sm:$0xff] %vm286, %v3673
      %3710 = vst.msk [vmem:[%s204 + $0xd8] sm:$0xff] %vm286, %v3674
      %3711 = vst.msk [vmem:[%s204 + $0xe0] sm:$0xff] %vm286, %v3675
      %3712 = vst.msk [vmem:[%s204 + $0xe8] sm:$0xff] %vm286, %v3676
      %3713 = vst.msk [vmem:[%s204 + $0xf0] sm:$0xff] %vm286, %v3677
      %3714 = vst.msk [vmem:[%s204 + $0xf8] sm:$0xff] %vm286, %v3678
      %3715 = vst.msk [vmem:[%s204 + $0x100] sm:$0xff] %vm286, %v3679
      %3716 = vst.msk [vmem:[%s204 + $0x108] sm:$0xff] %vm286, %v3680
      %3717 = vst.msk [vmem:[%s204 + $0x110] sm:$0xff] %vm286, %v3681
      %3718 = vst.msk [vmem:[%s204 + $0x118] sm:$0xff] %vm286, %v3682
      %p3719 = scmp.lt.s32.totalorder %s14, 1
      %s3720 = scalar_select %p3719, %s14, 1
      %s3721 = smul.addr %s3720, 36
      %s3722 = smul.addr %s3721, 8
      %s3723 = scalar_lea.vmem %s3, %s3722
      // Predicated region
      $region33: #{_lambda_.5} parent=31 // pred_check
        %p3724 = pneg %p110
      $region34: #{_lambda_.5} parent=31 // pred_check_branch
        %3726 = sbr.rel (%p3724) target = $region36
      $region35: #{_lambda_.5} parent=31 // pred_region
        _
      $region36: #{_lambda_.5} parent=31 // pred_fallthru
        _
    $region32: #{_lambda_.5} parent=5 // pred_fallthru
      _
    %p3727 = scmp.le.s32.totalorder 2, %s9
    // Predicated region
    $region37: #{_lambda_.5} parent=5 // pred_check
      %p3728 = pneg %p3727
    $region38: #{_lambda_.5} parent=5 // pred_check_branch
      %3730 = sbr.rel (%p3728) target = $region40
    $region39: #{_lambda_.5} parent=5 // pred_region
      %s3731 = ssub.s32 %s9, 2
      // Predicated region
      $region41: #{_lambda_.5} parent=39 // pred_check
        %p3732 = pneg %p116
      $region42: #{_lambda_.5} parent=39 // pred_check_branch
        %3734 = sbr.rel (%p3732) target = $region44
      $region43: #{_lambda_.5} parent=39 // pred_region
        %p3735 = scmp.lt.s32.totalorder %s15, 1
        %s3736 = scalar_select %p3735, %s15, 1
        %s3737 = smul.addr %s3736, 36
        %s3738 = smul.addr %s3737, 8
        %s3739 = scalar_lea.vmem %s3, %s3738
      $region44: #{_lambda_.5} parent=39 // pred_fallthru
        _
    $region40: #{_lambda_.5} parent=5 // pred_fallthru
      _
  $region6: #{_lambda_.5} parent=0 // loop_footer
    %s13 = sadd.s32 1, %s9
  $region7: #{_lambda_.5} parent=0 // loop_footer_branch
    %8 = sbr.rel target = $region3
  $region8: #{_lambda_.5} parent=0 // loop_exit
    _

// kernel: _lambda_.7
$region0: #{_lambda_.7}
  #allocation0 [shape = 'u32[]', space=smem, size = 0x4, offset = 0x4, fixed_abs, tag = 'smem constant byte address 0x4 - core index']
  #allocation1 [shape = 'u32[72,128]{1,0:T(1,128)}', space=vmem, size = 0x9000, scoped, tag = 'internal scratch']
  %s0 = inlined_call_operand.vmem [shape: f32[2,256,64], index: 0, kind: input, shape index: {}]
  %s1 = inlined_call_operand.vmem [shape: f32[2,256,32], index: 1, kind: input, shape index: {}]
  %s2 = inlined_call_operand.vmem [shape: f32[2,96,64], index: 2, kind: input, shape index: {}]
  %s3 = inlined_call_operand.vmem [shape: f32[2,1,64], index: 3, kind: input, shape index: {}]
  %s4 = inlined_call_operand.hbm [shape: f32[2,256,64], index: 4, kind: output, shape index: {}]
  %s5 = sld [smem:[#allocation0]]
  $region49: #{_lambda_.7} parent=0
    _
  %s7 = ssub.s32 1, %s5
  %s8 = scalar_select 0, %s7, %s5
  $region1: #{_lambda_.7} parent=0
    #allocation2 [shape = 'u8[262144]{0}', space=vmem, size = 0x40000, scoped, tag = 'output window, operand 0']
    #allocation3 [shape = 's32[2]{0}', space=sflag, size = 0x8, scoped, tag = 'scoped memory for _lambda_.7']
    %9 = vsyncpa [#allocation3], 0
    %s10 = scalar_lea.sflag [#allocation3], 1
    %11 = vsyncpa %s10, 0
    loop: start=0, step=1, limit=4
    $region2: #{_lambda_.7} parent=1 // loop_pre_header
      _
    $region3: #{_lambda_.7} parent=1 // loop_header
      %s13 = sphi 0, %s17
      %p14 = scmp.ge.s32.totalorder %s13, 4
      %s20 = sphi 0, %s32
      %s21 = sphi 0, %s28
      %s22 = sphi 0, %s20
      %s23 = sphi 0, %s21
      %s24 = sphi 0, %s22
      %s25 = sphi 0, %s23
      %s37 = sphi 0, %s39
      %s40 = sphi 0, %s37
      %s41 = sphi 0, %s40
      %s57 = sphi 0, %s41
      %s65 = sphi 0, %s67
      %s68 = sphi 0, %s65
      %s69 = sphi 0, %s68
      %s85 = sphi 0, %s69
      %s91 = sphi 0, %s93
      %s94 = sphi 0, %s91
      %s95 = sphi 0, %s94
      %s111 = sphi 0, %s95
      %s117 = sphi 0, %s119
      %s120 = sphi 0, %s117
      %s121 = sphi 0, %s120
      %s137 = sphi 0, %s121
      %s145 = sphi 0, %s147
      %s148 = sphi 0, %s145
      %s149 = sphi 0, %s148
      %s165 = sphi 0, %s149
    $region4: #{_lambda_.7} parent=1 // loop_header_branch
      %16 = sbr.rel (%p14) target = $region8
    $region5: #{_lambda_.7} parent=1 // loop_body
      %s18 = ssub.s32 %s13, 1
      %s19 = ssub.s32 %s13, 2
      %s26 = sadd.s32 1, %s21
      %p27 = scmp.ge.s32.totalorder %s26, 1
      %s28 = scalar_select %p27, 0, %s26
      %s29 = sadd.s32 1, %s20
      %s30 = scalar_select %p27, %s29, %s20
      %p31 = scmp.ge.s32.totalorder %s30, 2
      %s32 = scalar_select %p31, 0, %s30
      %s33 = ssub.s32 %s20, %s32
      %s34 = ssub.s32 %s21, %s28
      %s35 = sor.u32 %s33, %s34
      %p36 = scmp.eq.s32.totalorder %s35, 0
      %s38 = sadd.s32 %s37, 1
      %s39 = scalar_select %p36, %s37, %s38
      %p42 = pneg %p36
      %p43 = scmp.eq.s32.totalorder %s13, 1
      %p44 = por %p42, %p43
      %p45 = scmp.ne.s32.totalorder %s37, %s40
      %p46 = scmp.eq.s32.totalorder %s13, 0
      %p47 = por %p45, %p46
      %p48 = scmp.ne.s32.totalorder %s37, %s40
      %p49 = scmp.eq.s32.totalorder %s18, 1
      %p50 = por %p48, %p49
      %p51 = scmp.ne.s32.totalorder %s40, %s41
      %p52 = scmp.eq.s32.totalorder %s18, 0
      %p53 = por %p51, %p52
      %p54 = scmp.ne.s32.totalorder %s40, %s41
      %p55 = scmp.eq.s32.totalorder %s19, 1
      %p56 = por %p54, %p55
      %p58 = scmp.ne.s32.totalorder %s41, %s57
      %p59 = scmp.eq.s32.totalorder %s19, 0
      %p60 = por %p58, %p59
      %s61 = ssub.s32 %s20, %s32
      %s62 = ssub.s32 %s21, %s28
      %s63 = sor.u32 %s61, %s62
      %p64 = scmp.eq.s32.totalorder %s63, 0
      %s66 = sadd.s32 %s65, 1
      %s67 = scalar_select %p64, %s65, %s66
      %p70 = pneg %p64
      %p71 = scmp.eq.s32.totalorder %s13, 1
      %p72 = por %p70, %p71
      %p73 = scmp.ne.s32.totalorder %s65, %s68
      %p74 = scmp.eq.s32.totalorder %s13, 0
      %p75 = por %p73, %p74
      %p76 = scmp.ne.s32.totalorder %s65, %s68
      %p77 = scmp.eq.s32.totalorder %s18, 1
      %p78 = por %p76, %p77
      %p79 = scmp.ne.s32.totalorder %s68, %s69
      %p80 = scmp.eq.s32.totalorder %s18, 0
      %p81 = por %p79, %p80
      %p82 = scmp.ne.s32.totalorder %s68, %s69
      %p83 = scmp.eq.s32.totalorder %s19, 1
      %p84 = por %p82, %p83
      %p86 = scmp.ne.s32.totalorder %s69, %s85
      %p87 = scmp.eq.s32.totalorder %s19, 0
      %p88 = por %p86, %p87
      %s89 = ssub.s32 %s20, %s32
      %p90 = scmp.eq.s32.totalorder %s89, 0
      %s92 = sadd.s32 %s91, 1
      %s93 = scalar_select %p90, %s91, %s92
      %p96 = pneg %p90
      %p97 = scmp.eq.s32.totalorder %s13, 1
      %p98 = por %p96, %p97
      %p99 = scmp.ne.s32.totalorder %s91, %s94
      %p100 = scmp.eq.s32.totalorder %s13, 0
      %p101 = por %p99, %p100
      %p102 = scmp.ne.s32.totalorder %s91, %s94
      %p103 = scmp.eq.s32.totalorder %s18, 1
      %p104 = por %p102, %p103
      %p105 = scmp.ne.s32.totalorder %s94, %s95
      %p106 = scmp.eq.s32.totalorder %s18, 0
      %p107 = por %p105, %p106
      %p108 = scmp.ne.s32.totalorder %s94, %s95
      %p109 = scmp.eq.s32.totalorder %s19, 1
      %p110 = por %p108, %p109
      %p112 = scmp.ne.s32.totalorder %s95, %s111
      %p113 = scmp.eq.s32.totalorder %s19, 0
      %p114 = por %p112, %p113
      %s115 = ssub.s32 %s20, %s32
      %p116 = scmp.eq.s32.totalorder %s115, 0
      %s118 = sadd.s32 %s117, 1
      %s119 = scalar_select %p116, %s117, %s118
      %p122 = pneg %p116
      %p123 = scmp.eq.s32.totalorder %s13, 1
      %p124 = por %p122, %p123
      %p125 = scmp.ne.s32.totalorder %s117, %s120
      %p126 = scmp.eq.s32.totalorder %s13, 0
      %p127 = por %p125, %p126
      %p128 = scmp.ne.s32.totalorder %s117, %s120
      %p129 = scmp.eq.s32.totalorder %s18, 1
      %p130 = por %p128, %p129
      %p131 = scmp.ne.s32.totalorder %s120, %s121
      %p132 = scmp.eq.s32.totalorder %s18, 0
      %p133 = por %p131, %p132
      %p134 = scmp.ne.s32.totalorder %s120, %s121
      %p135 = scmp.eq.s32.totalorder %s19, 1
      %p136 = por %p134, %p135
      %p138 = scmp.ne.s32.totalorder %s121, %s137
      %p139 = scmp.eq.s32.totalorder %s19, 0
      %p140 = por %p138, %p139
      %s141 = ssub.s32 %s20, %s32
      %s142 = ssub.s32 %s21, %s28
      %s143 = sor.u32 %s141, %s142
      %p144 = scmp.eq.s32.totalorder %s143, 0
      %s146 = sadd.s32 %s145, 1
      %s147 = scalar_select %p144, %s145, %s146
      %p150 = pneg %p144
      %p151 = scmp.eq.s32.totalorder %s13, 1
      %p152 = por %p150, %p151
      %p153 = scmp.ne.s32.totalorder %s145, %s148
      %p154 = scmp.eq.s32.totalorder %s13, 0
      %p155 = por %p153, %p154
      %p156 = scmp.ne.s32.totalorder %s145, %s148
      %p157 = scmp.eq.s32.totalorder %s18, 1
      %p158 = por %p156, %p157
      %p159 = scmp.ne.s32.totalorder %s148, %s149
      %p160 = scmp.eq.s32.totalorder %s18, 0
      %p161 = por %p159, %p160
      %p162 = scmp.ne.s32.totalorder %s148, %s149
      %p163 = scmp.eq.s32.totalorder %s19, 1
      %p164 = por %p162, %p163
      %p166 = scmp.ne.s32.totalorder %s149, %s165
      %p167 = scmp.eq.s32.totalorder %s19, 0
      %p168 = por %p166, %p167
      %p169 = scmp.le.s32.totalorder 1, %s13
      %p170 = scmp.lt.s32.totalorder %s13, 3
      %p171 = pnand %p169, %p170
      %p172 = pneg %p171
      // Predicated region
      $region9: #{_lambda_.7} parent=5 // pred_check
        _
      $region10: #{_lambda_.7} parent=5 // pred_check_branch
        %174 = sbr.rel (%p171) target = $region12
      $region11: #{_lambda_.7} parent=5 // pred_region
        %s175 = ssub.s32 %s13, 1
      $region12: #{_lambda_.7} parent=5 // pred_fallthru
        _
      %p176 = scmp.lt.s32.totalorder %s13, 2
      // Predicated region
      $region13: #{_lambda_.7} parent=5 // pred_check
        %p177 = pneg %p176
      $region14: #{_lambda_.7} parent=5 // pred_check_branch
        %179 = sbr.rel (%p177) target = $region16
      $region15: #{_lambda_.7} parent=5 // pred_region
        // Predicated region
        $region17: #{_lambda_.7} parent=15 // pred_check
          %p180 = pneg %p47
        $region18: #{_lambda_.7} parent=15 // pred_check_branch
          %182 = sbr.rel (%p180) target = $region20
        $region19: #{_lambda_.7} parent=15 // pred_region
          %s183 = smul.u32 32, %s21
          %p184 = scmp.lt.s32.totalorder %s20, 1
          %s185 = scalar_select %p184, %s20, 1
          %p186 = scmp.lt.s32.totalorder %s183, 31
          %s187 = scalar_select %p186, %s183, 31
          %s188 = smul.addr %s185, 32
          %s189 = sadd.s32 %s187, %s188
          %s190 = smul.addr %s189, 8
          %s191 = scalar_lea.vmem %s0, %s190
          %s192 = smul.u32 32, %s21
        $region20: #{_lambda_.7} parent=15 // pred_fallthru
          _
        // Predicated region
        $region21: #{_lambda_.7} parent=15 // pred_check
          %p193 = pneg %p75
        $region22: #{_lambda_.7} parent=15 // pred_check_branch
          %195 = sbr.rel (%p193) target = $region24
        $region23: #{_lambda_.7} parent=15 // pred_region
          %s196 = smul.u32 32, %s21
          %p197 = scmp.lt.s32.totalorder %s20, 1
          %s198 = scalar_select %p197, %s20, 1
          %p199 = scmp.lt.s32.totalorder %s196, 31
          %s200 = scalar_select %p199, %s196, 31
          %s201 = smul.addr %s198, 32
          %s202 = sadd.s32 %s200, %s201
          %s203 = smul.addr %s202, 8
          %s204 = scalar_lea.vmem %s1, %s203
          %s205 = smul.u32 32, %s21
        $region24: #{_lambda_.7} parent=15 // pred_fallthru
          _
        // Predicated region
        $region25: #{_lambda_.7} parent=15 // pred_check
          %p206 = pneg %p101
        $region26: #{_lambda_.7} parent=15 // pred_check_branch
          %208 = sbr.rel (%p206) target = $region28
        $region27: #{_lambda_.7} parent=15 // pred_region
          %p209 = scmp.lt.s32.totalorder %s20, 1
          %s210 = scalar_select %p209, %s20, 1
          %s211 = smul.addr %s210, 12
          %s212 = smul.addr %s211, 8
          %s213 = scalar_lea.vmem %s2, %s212
        $region28: #{_lambda_.7} parent=15 // pred_fallthru
          _
        // Predicated region
        $region29: #{_lambda_.7} parent=15 // pred_check
          %p214 = pneg %p127
        $region30: #{_lambda_.7} parent=15 // pred_check_branch
          %216 = sbr.rel (%p214) target = $region32
        $region31: #{_lambda_.7} parent=15 // pred_region
          %p217 = scmp.lt.s32.totalorder %s20, 1
          %s218 = scalar_select %p217, %s20, 1
          %s219 = scalar_lea.vmem %s3, %s218
        $region32: #{_lambda_.7} parent=15 // pred_fallthru
          _
      $region16: #{_lambda_.7} parent=5 // pred_fallthru
        _
      %p220 = scmp.le.s32.totalorder 1, %s13
      %p221 = scmp.lt.s32.totalorder %s13, 3
      %p222 = pnand %p220, %p221
      %p223 = pneg %p222
      // Predicated region
      $region33: #{_lambda_.7} parent=5 // pred_check
        _
      $region34: #{_lambda_.7} parent=5 // pred_check_branch
        %225 = sbr.rel (%p222) target = $region36
      $region35: #{_lambda_.7} parent=5 // pred_region
        %s226 = ssub.s32 %s13, 1
        %s227 = smul.u32 32, %s23
        %p228 = scmp.lt.s32.totalorder %s22, 1
        %s229 = scalar_select %p228, %s22, 1
        %p230 = scmp.lt.s32.totalorder %s227, 31
        %s231 = scalar_select %p230, %s227, 31
        %s232 = smul.addr %s229, 32
        %s233 = sadd.s32 %s231, %s232
        %s234 = smul.addr %s233, 8
        %s235 = scalar_lea.vmem %s0, %s234
        %p236 = pneg %p53
        %p237 = pneg %p50
        %s238 = smul.u32 32, %s23
        %p239 = scmp.lt.s32.totalorder %s22, 1
        %s240 = scalar_select %p239, %s22, 1
        %p241 = scmp.lt.s32.totalorder %s238, 31
        %s242 = scalar_select %p241, %s238, 31
        %s243 = smul.addr %s240, 32
        %s244 = sadd.s32 %s242, %s243
        %s245 = smul.addr %s244, 8
        %s246 = scalar_lea.vmem %s1, %s245
        %p247 = pneg %p81
        %p248 = pneg %p78
        %p249 = scmp.lt.s32.totalorder %s22, 1
        %s250 = scalar_select %p249, %s22, 1
        %s251 = smul.addr %s250, 12
        %s252 = smul.addr %s251, 8
        %s253 = scalar_lea.vmem %s2, %s252
        %p254 = pneg %p107
        %p255 = pneg %p104
        %p256 = scmp.lt.s32.totalorder %s22, 1
        %s257 = scalar_select %p256, %s22, 1
        %s258 = scalar_lea.vmem %s3, %s257
        %p259 = pneg %p133
        %p260 = pneg %p130
        %p261 = pneg %p161
        %p262 = pneg %p158
        %s263 = sand.u32 %s148, 1
        %s264 = scalar_lea.sflag [#allocation3], %s263
        %s265 = sand.u32 %s148, 1
        %s266 = smul.addr %s265, 256
        %s267 = scalar_lea.vmem [#allocation2], %s266
        %s268 = smul.u32 32, %s23
        %p269 = scmp.lt.s32.totalorder %s22, 1
        %s270 = scalar_select %p269, %s22, 1
        %p271 = scmp.lt.s32.totalorder %s268, 31
        %s272 = scalar_select %p271, %s268, 31
        %s273 = smul.addr %s270, 32
        %s274 = sadd.s32 %s272, %s273
        %s275 = smul.addr %s274, 8
        %s276 = scalar_lea.vmem %s0, %s275
        %s277 = smul.u32 32, %s23
        %s278 = smul.u32 32, %s23
        %p279 = scmp.lt.s32.totalorder %s22, 1
        %s280 = scalar_select %p279, %s22, 1
        %p281 = scmp.lt.s32.totalorder %s278, 31
        %s282 = scalar_select %p281, %s278, 31
        %s283 = smul.addr %s280, 32
        %s284 = sadd.s32 %s282, %s283
        %s285 = smul.addr %s284, 8
        %s286 = scalar_lea.vmem %s1, %s285
        %s287 = smul.u32 32, %s23
        %p288 = scmp.lt.s32.totalorder %s22, 1
        %s289 = scalar_select %p288, %s22, 1
        %s290 = smul.addr %s289, 12
        %s291 = smul.addr %s290, 8
        %s292 = scalar_lea.vmem %s2, %s291
        %p293 = scmp.lt.s32.totalorder %s22, 1
        %s294 = scalar_select %p293, %s22, 1
        %s295 = scalar_lea.vmem %s3, %s294
        %s296 = smul.u32 32, %s23
        %v297 = vld [vmem:[%s276] sm:$0xff]
        %v298 = vld [vmem:[%s276 + $0x8] sm:$0xff]
        %v299 = vld [vmem:[%s276 + $0x10] sm:$0xff]
        %v300 = vld [vmem:[%s276 + $0x18] sm:$0xff]
        %v301 = vld [vmem:[%s276 + $0x20] sm:$0xff]
        %v302 = vld [vmem:[%s276 + $0x28] sm:$0xff]
        %v303 = vld [vmem:[%s276 + $0x30] sm:$0xff]
        %v304 = vld [vmem:[%s276 + $0x38] sm:$0xff]
        %v305 = vld [vmem:[%s276 + $0x40] sm:$0xff]
        %v306 = vld [vmem:[%s276 + $0x48] sm:$0xff]
        %v307 = vld [vmem:[%s276 + $0x50] sm:$0xff]
        %v308 = vld [vmem:[%s276 + $0x58] sm:$0xff]
        %v309 = vld [vmem:[%s276 + $0x60] sm:$0xff]
        %v310 = vld [vmem:[%s276 + $0x68] sm:$0xff]
        %v311 = vld [vmem:[%s276 + $0x70] sm:$0xff]
        %v312 = vld [vmem:[%s276 + $0x78] sm:$0xff]
        %v313 = vld [vmem:[%s276 + $0x80] sm:$0xff]
        %v314 = vld [vmem:[%s276 + $0x88] sm:$0xff]
        %v315 = vld [vmem:[%s276 + $0x90] sm:$0xff]
        %v316 = vld [vmem:[%s276 + $0x98] sm:$0xff]
        %v317 = vld [vmem:[%s276 + $0xa0] sm:$0xff]
        %v318 = vld [vmem:[%s276 + $0xa8] sm:$0xff]
        %v319 = vld [vmem:[%s276 + $0xb0] sm:$0xff]
        %v320 = vld [vmem:[%s276 + $0xb8] sm:$0xff]
        %v321 = vld [vmem:[%s276 + $0xc0] sm:$0xff]
        %v322 = vld [vmem:[%s276 + $0xc8] sm:$0xff]
        %v323 = vld [vmem:[%s276 + $0xd0] sm:$0xff]
        %v324 = vld [vmem:[%s276 + $0xd8] sm:$0xff]
        %v325 = vld [vmem:[%s276 + $0xe0] sm:$0xff]
        %v326 = vld [vmem:[%s276 + $0xe8] sm:$0xff]
        %v327 = vld [vmem:[%s276 + $0xf0] sm:$0xff]
        %v328 = vld [vmem:[%s276 + $0xf8] sm:$0xff]
        %v329 = vld [vmem:[%s292] sm:$0xff]
        %v330 = vld [vmem:[%s292 + $0x8] sm:$0xff]
        %v331 = vld [vmem:[%s292 + $0x10] sm:$0xff]
        %v332 = vld [vmem:[%s292 + $0x18] sm:$0xff]
        %v333 = vld [vmem:[%s292 + $0x20] sm:$0xff]
        %v334 = vld [vmem:[%s292 + $0x28] sm:$0xff]
        %v335 = vld [vmem:[%s292 + $0x30] sm:$0xff]
        %v336 = vld [vmem:[%s292 + $0x38] sm:$0xff]
        %v337 = vld [vmem:[%s286] sm:$0xff]
        %v338 = vld [vmem:[%s286 + $0x8] sm:$0xff]
        %v339 = vld [vmem:[%s286 + $0x10] sm:$0xff]
        %v340 = vld [vmem:[%s286 + $0x18] sm:$0xff]
        %v341 = vld [vmem:[%s286 + $0x20] sm:$0xff]
        %v342 = vld [vmem:[%s286 + $0x28] sm:$0xff]
        %v343 = vld [vmem:[%s286 + $0x30] sm:$0xff]
        %v344 = vld [vmem:[%s286 + $0x38] sm:$0xff]
        %v345 = vld [vmem:[%s286 + $0x40] sm:$0xff]
        %v346 = vld [vmem:[%s286 + $0x48] sm:$0xff]
        %v347 = vld [vmem:[%s286 + $0x50] sm:$0xff]
        %v348 = vld [vmem:[%s286 + $0x58] sm:$0xff]
        %v349 = vld [vmem:[%s286 + $0x60] sm:$0xff]
        %v350 = vld [vmem:[%s286 + $0x68] sm:$0xff]
        %v351 = vld [vmem:[%s286 + $0x70] sm:$0xff]
        %v352 = vld [vmem:[%s286 + $0x78] sm:$0xff]
        %v353 = vld [vmem:[%s286 + $0x80] sm:$0xff]
        %v354 = vld [vmem:[%s286 + $0x88] sm:$0xff]
        %v355 = vld [vmem:[%s286 + $0x90] sm:$0xff]
        %v356 = vld [vmem:[%s286 + $0x98] sm:$0xff]
        %v357 = vld [vmem:[%s286 + $0xa0] sm:$0xff]
        %v358 = vld [vmem:[%s286 + $0xa8] sm:$0xff]
        %v359 = vld [vmem:[%s286 + $0xb0] sm:$0xff]
        %v360 = vld [vmem:[%s286 + $0xb8] sm:$0xff]
        %v361 = vld [vmem:[%s286 + $0xc0] sm:$0xff]
        %v362 = vld [vmem:[%s286 + $0xc8] sm:$0xff]
        %v363 = vld [vmem:[%s286 + $0xd0] sm:$0xff]
        %v364 = vld [vmem:[%s286 + $0xd8] sm:$0xff]
        %v365 = vld [vmem:[%s286 + $0xe0] sm:$0xff]
        %v366 = vld [vmem:[%s286 + $0xe8] sm:$0xff]
        %v367 = vld [vmem:[%s286 + $0xf0] sm:$0xff]
        %v368 = vld [vmem:[%s286 + $0xf8] sm:$0xff]
        %v369 = vld [vmem:[%s292 + $0x40] sm:$0xff]
        %v370 = vld [vmem:[%s292 + $0x48] sm:$0xff]
        %v371 = vld [vmem:[%s292 + $0x50] sm:$0xff]
        %v372 = vld [vmem:[%s292 + $0x58] sm:$0xff]
        %vm373 = vcmask 261120
        %v375 = vsel %vm373, %v337, 0
        %v378 = vsel %vm373, %v338, 0
        %v381 = vsel %vm373, %v339, 0
        %v384 = vsel %vm373, %v340, 0
        %v387 = vsel %vm373, %v341, 0
        %v390 = vsel %vm373, %v342, 0
        %v393 = vsel %vm373, %v343, 0
        %v396 = vsel %vm373, %v344, 0
        %v399 = vsel %vm373, %v345, 0
        %v402 = vsel %vm373, %v346, 0
        %v405 = vsel %vm373, %v347, 0
        %v408 = vsel %vm373, %v348, 0
        %v411 = vsel %vm373, %v349, 0
        %v414 = vsel %vm373, %v350, 0
        %v417 = vsel %vm373, %v351, 0
        %v420 = vsel %vm373, %v352, 0
        %v423 = vsel %vm373, %v353, 0
        %v426 = vsel %vm373, %v354, 0
        %v429 = vsel %vm373, %v355, 0
        %v432 = vsel %vm373, %v356, 0
        %v435 = vsel %vm373, %v357, 0
        %v438 = vsel %vm373, %v358, 0
        %v441 = vsel %vm373, %v359, 0
        %v444 = vsel %vm373, %v360, 0
        %v447 = vsel %vm373, %v361, 0
        %v450 = vsel %vm373, %v362, 0
        %v453 = vsel %vm373, %v363, 0
        %v456 = vsel %vm373, %v364, 0
        %v459 = vsel %vm373, %v365, 0
        %v462 = vsel %vm373, %v366, 0
        %v465 = vsel %vm373, %v367, 0
        %v468 = vsel %vm373, %v368, 0
        %470 = vmatpush.msra.mxu0 0.0
        %471 = vmatpush.msra.mxu0 0.0
        %472 = vmatpush.msra.mxu0 0.0
        %473 = vmatpush.msra.mxu0 0.0
        %474 = vmatpush.msra.mxu0 0.0
        %475 = vmatpush.msra.mxu0 0.0
        %476 = vmatpush.msra.mxu0 0.0
        %477 = vmatpush.msra.mxu0 0.0
        %478 = vmatpush.msra.mxu0 0.0
        %479 = vmatpush.msra.mxu0 0.0
        %480 = vmatpush.msra.mxu0 0.0
        %481 = vmatpush.msra.mxu0 0.0
        %482 = vmatpush.msra.mxu0 %v372
        %483 = vmatpush.msra.mxu0 %v371
        %484 = vmatpush.msra.mxu0 %v370
        %485 = vmatpush.msra.mxu0 %v369
        %486 = vmatmul.f32.gmra.mxu0 %v375
        %v487 = vpop.f32.mrf.mxu0
        %v488 = vadd.f32 0.0, %v487
        %489 = vmatmul.f32.gmra.mxu0 %v378
        %v490 = vpop.f32.mrf.mxu0
        %v491 = vadd.f32 0.0, %v490
        %492 = vmatmul.f32.gmra.mxu0 %v381
        %v493 = vpop.f32.mrf.mxu0
        %v494 = vadd.f32 0.0, %v493
        %495 = vmatmul.f32.gmra.mxu0 %v384
        %v496 = vpop.f32.mrf.mxu0
        %v497 = vadd.f32 0.0, %v496
        %498 = vmatmul.f32.gmra.mxu0 %v387
        %v499 = vpop.f32.mrf.mxu0
        %v500 = vadd.f32 0.0, %v499
        %501 = vmatmul.f32.gmra.mxu0 %v390
        %v502 = vpop.f32.mrf.mxu0
        %v503 = vadd.f32 0.0, %v502
        %504 = vmatmul.f32.gmra.mxu0 %v393
        %v505 = vpop.f32.mrf.mxu0
        %v506 = vadd.f32 0.0, %v505
        %507 = vmatmul.f32.gmra.mxu0 %v396
        %v508 = vpop.f32.mrf.mxu0
        %v509 = vadd.f32 0.0, %v508
        %510 = vmatmul.f32.gmra.mxu0 %v399
        %v511 = vpop.f32.mrf.mxu0
        %v512 = vadd.f32 0.0, %v511
        %513 = vmatmul.f32.gmra.mxu0 %v402
        %v514 = vpop.f32.mrf.mxu0
        %v515 = vadd.f32 0.0, %v514
        %516 = vmatmul.f32.gmra.mxu0 %v405
        %v517 = vpop.f32.mrf.mxu0
        %v518 = vadd.f32 0.0, %v517
        %519 = vmatmul.f32.gmra.mxu0 %v408
        %v520 = vpop.f32.mrf.mxu0
        %v521 = vadd.f32 0.0, %v520
        %522 = vmatmul.f32.gmra.mxu0 %v411
        %v523 = vpop.f32.mrf.mxu0
        %v524 = vadd.f32 0.0, %v523
        %525 = vmatmul.f32.gmra.mxu0 %v414
        %v526 = vpop.f32.mrf.mxu0
        %v527 = vadd.f32 0.0, %v526
        %528 = vmatmul.f32.gmra.mxu0 %v417
        %v529 = vpop.f32.mrf.mxu0
        %v530 = vadd.f32 0.0, %v529
        %531 = vmatmul.f32.gmra.mxu0 %v420
        %v532 = vpop.f32.mrf.mxu0
        %v533 = vadd.f32 0.0, %v532
        %534 = vmatmul.f32.gmra.mxu0 %v423
        %v535 = vpop.f32.mrf.mxu0
        %v536 = vadd.f32 0.0, %v535
        %537 = vmatmul.f32.gmra.mxu0 %v426
        %v538 = vpop.f32.mrf.mxu0
        %v539 = vadd.f32 0.0, %v538
        %540 = vmatmul.f32.gmra.mxu0 %v429
        %v541 = vpop.f32.mrf.mxu0
        %v542 = vadd.f32 0.0, %v541
        %543 = vmatmul.f32.gmra.mxu0 %v432
        %v544 = vpop.f32.mrf.mxu0
        %v545 = vadd.f32 0.0, %v544
        %546 = vmatmul.f32.gmra.mxu0 %v435
        %v547 = vpop.f32.mrf.mxu0
        %v548 = vadd.f32 0.0, %v547
        %549 = vmatmul.f32.gmra.mxu0 %v438
        %v550 = vpop.f32.mrf.mxu0
        %v551 = vadd.f32 0.0, %v550
        %552 = vmatmul.f32.gmra.mxu0 %v441
        %v553 = vpop.f32.mrf.mxu0
        %v554 = vadd.f32 0.0, %v553
        %555 = vmatmul.f32.gmra.mxu0 %v444
        %v556 = vpop.f32.mrf.mxu0
        %v557 = vadd.f32 0.0, %v556
        %558 = vmatmul.f32.gmra.mxu0 %v447
        %v559 = vpop.f32.mrf.mxu0
        %v560 = vadd.f32 0.0, %v559
        %561 = vmatmul.f32.gmra.mxu0 %v450
        %v562 = vpop.f32.mrf.mxu0
        %v563 = vadd.f32 0.0, %v562
        %564 = vmatmul.f32.gmra.mxu0 %v453
        %v565 = vpop.f32.mrf.mxu0
        %v566 = vadd.f32 0.0, %v565
        %567 = vmatmul.f32.gmra.mxu0 %v456
        %v568 = vpop.f32.mrf.mxu0
        %v569 = vadd.f32 0.0, %v568
        %570 = vmatmul.f32.gmra.mxu0 %v459
        %v571 = vpop.f32.mrf.mxu0
        %v572 = vadd.f32 0.0, %v571
        %573 = vmatmul.f32.gmra.mxu0 %v462
        %v574 = vpop.f32.mrf.mxu0
        %v575 = vadd.f32 0.0, %v574
        %576 = vmatmul.f32.gmra.mxu0 %v465
        %v577 = vpop.f32.mrf.mxu0
        %v578 = vadd.f32 0.0, %v577
        %579 = vmatmul.f32.gmra.mxu0 %v468
        %v580 = vpop.f32.mrf.mxu0
        %v581 = vadd.f32 0.0, %v580
        %582 = vdwg.mxu0
        %vm583 = vcmask 523264
        %v585 = vsel %vm583, %v297, 0
        %v588 = vsel %vm583, %v298, 0
        %v591 = vsel %vm583, %v299, 0
        %v594 = vsel %vm583, %v300, 0
        %v597 = vsel %vm583, %v301, 0
        %v600 = vsel %vm583, %v302, 0
        %v603 = vsel %vm583, %v303, 0
        %v606 = vsel %vm583, %v304, 0
        %v609 = vsel %vm583, %v305, 0
        %v612 = vsel %vm583, %v306, 0
        %v615 = vsel %vm583, %v307, 0
        %v618 = vsel %vm583, %v308, 0
        %v621 = vsel %vm583, %v309, 0
        %v624 = vsel %vm583, %v310, 0
        %v627 = vsel %vm583, %v311, 0
        %v630 = vsel %vm583, %v312, 0
        %v633 = vsel %vm583, %v313, 0
        %v636 = vsel %vm583, %v314, 0
        %v639 = vsel %vm583, %v315, 0
        %v642 = vsel %vm583, %v316, 0
        %v645 = vsel %vm583, %v317, 0
        %v648 = vsel %vm583, %v318, 0
        %v651 = vsel %vm583, %v319, 0
        %v654 = vsel %vm583, %v320, 0
        %v657 = vsel %vm583, %v321, 0
        %v660 = vsel %vm583, %v322, 0
        %v663 = vsel %vm583, %v323, 0
        %v666 = vsel %vm583, %v324, 0
        %v669 = vsel %vm583, %v325, 0
        %v672 = vsel %vm583, %v326, 0
        %v675 = vsel %vm583, %v327, 0
        %v678 = vsel %vm583, %v328, 0
        %680 = vmatpush.msra.mxu0 0.0
        %681 = vmatpush.msra.mxu0 0.0
        %682 = vmatpush.msra.mxu0 0.0
        %683 = vmatpush.msra.mxu0 0.0
        %684 = vmatpush.msra.mxu0 0.0
        %685 = vmatpush.msra.mxu0 0.0
        %686 = vmatpush.msra.mxu0 0.0
        %687 = vmatpush.msra.mxu0 0.0
        %688 = vmatpush.msra.mxu0 %v336
        %689 = vmatpush.msra.mxu0 %v335
        %690 = vmatpush.msra.mxu0 %v334
        %691 = vmatpush.msra.mxu0 %v333
        %692 = vmatpush.msra.mxu0 %v332
        %693 = vmatpush.msra.mxu0 %v331
        %694 = vmatpush.msra.mxu0 %v330
        %695 = vmatpush.msra.mxu0 %v329
        %696 = vmatmul.f32.gmra.mxu0 %v585
        %v697 = vpop.f32.mrf.mxu0
        %v698 = vadd.f32 %v488, %v697
        %699 = vmatmul.f32.gmra.mxu0 %v588
        %v700 = vpop.f32.mrf.mxu0
        %v701 = vadd.f32 %v491, %v700
        %702 = vmatmul.f32.gmra.mxu0 %v591
        %v703 = vpop.f32.mrf.mxu0
        %v704 = vadd.f32 %v494, %v703
        %705 = vmatmul.f32.gmra.mxu0 %v594
        %v706 = vpop.f32.mrf.mxu0
        %v707 = vadd.f32 %v497, %v706
        %708 = vmatmul.f32.gmra.mxu0 %v597
        %v709 = vpop.f32.mrf.mxu0
        %v710 = vadd.f32 %v500, %v709
        %711 = vmatmul.f32.gmra.mxu0 %v600
        %v712 = vpop.f32.mrf.mxu0
        %v713 = vadd.f32 %v503, %v712
        %714 = vmatmul.f32.gmra.mxu0 %v603
        %v715 = vpop.f32.mrf.mxu0
        %v716 = vadd.f32 %v506, %v715
        %717 = vmatmul.f32.gmra.mxu0 %v606
        %v718 = vpop.f32.mrf.mxu0
        %v719 = vadd.f32 %v509, %v718
        %720 = vmatmul.f32.gmra.mxu0 %v609
        %v721 = vpop.f32.mrf.mxu0
        %v722 = vadd.f32 %v512, %v721
        %723 = vmatmul.f32.gmra.mxu0 %v612
        %v724 = vpop.f32.mrf.mxu0
        %v725 = vadd.f32 %v515, %v724
        %726 = vmatmul.f32.gmra.mxu0 %v615
        %v727 = vpop.f32.mrf.mxu0
        %v728 = vadd.f32 %v518, %v727
        %729 = vmatmul.f32.gmra.mxu0 %v618
        %v730 = vpop.f32.mrf.mxu0
        %v731 = vadd.f32 %v521, %v730
        %732 = vmatmul.f32.gmra.mxu0 %v621
        %v733 = vpop.f32.mrf.mxu0
        %v734 = vadd.f32 %v524, %v733
        %735 = vmatmul.f32.gmra.mxu0 %v624
        %v736 = vpop.f32.mrf.mxu0
        %v737 = vadd.f32 %v527, %v736
        %738 = vmatmul.f32.gmra.mxu0 %v627
        %v739 = vpop.f32.mrf.mxu0
        %v740 = vadd.f32 %v530, %v739
        %741 = vmatmul.f32.gmra.mxu0 %v630
        %v742 = vpop.f32.mrf.mxu0
        %v743 = vadd.f32 %v533, %v742
        %744 = vmatmul.f32.gmra.mxu0 %v633
        %v745 = vpop.f32.mrf.mxu0
        %v746 = vadd.f32 %v536, %v745
        %747 = vmatmul.f32.gmra.mxu0 %v636
        %v748 = vpop.f32.mrf.mxu0
        %v749 = vadd.f32 %v539, %v748
        %750 = vmatmul.f32.gmra.mxu0 %v639
        %v751 = vpop.f32.mrf.mxu0
        %v752 = vadd.f32 %v542, %v751
        %753 = vmatmul.f32.gmra.mxu0 %v642
        %v754 = vpop.f32.mrf.mxu0
        %v755 = vadd.f32 %v545, %v754
        %756 = vmatmul.f32.gmra.mxu0 %v645
        %v757 = vpop.f32.mrf.mxu0
        %v758 = vadd.f32 %v548, %v757
        %759 = vmatmul.f32.gmra.mxu0 %v648
        %v760 = vpop.f32.mrf.mxu0
        %v761 = vadd.f32 %v551, %v760
        %762 = vmatmul.f32.gmra.mxu0 %v651
        %v763 = vpop.f32.mrf.mxu0
        %v764 = vadd.f32 %v554, %v763
        %765 = vmatmul.f32.gmra.mxu0 %v654
        %v766 = vpop.f32.mrf.mxu0
        %v767 = vadd.f32 %v557, %v766
        %768 = vmatmul.f32.gmra.mxu0 %v657
        %v769 = vpop.f32.mrf.mxu0
        %v770 = vadd.f32 %v560, %v769
        %771 = vmatmul.f32.gmra.mxu0 %v660
        %v772 = vpop.f32.mrf.mxu0
        %v773 = vadd.f32 %v563, %v772
        %774 = vmatmul.f32.gmra.mxu0 %v663
        %v775 = vpop.f32.mrf.mxu0
        %v776 = vadd.f32 %v566, %v775
        %777 = vmatmul.f32.gmra.mxu0 %v666
        %v778 = vpop.f32.mrf.mxu0
        %v779 = vadd.f32 %v569, %v778
        %780 = vmatmul.f32.gmra.mxu0 %v669
        %v781 = vpop.f32.mrf.mxu0
        %v782 = vadd.f32 %v572, %v781
        %783 = vmatmul.f32.gmra.mxu0 %v672
        %v784 = vpop.f32.mrf.mxu0
        %v785 = vadd.f32 %v575, %v784
        %786 = vmatmul.f32.gmra.mxu0 %v675
        %v787 = vpop.f32.mrf.mxu0
        %v788 = vadd.f32 %v578, %v787
        %789 = vmatmul.f32.gmra.mxu0 %v678
        %v790 = vpop.f32.mrf.mxu0
        %v791 = vadd.f32 %v581, %v790
        %792 = vdwg.mxu0
        %v793 = vld [vmem:[%s295] sm:$0x1]
        %v795 = vperm.slane %v793, 0
        %v797 = vadd.f32 %v698, %v795
        %v798 = vadd.f32 %v701, %v795
        %v799 = vadd.f32 %v704, %v795
        %v800 = vadd.f32 %v707, %v795
        %v801 = vadd.f32 %v710, %v795
        %v802 = vadd.f32 %v713, %v795
        %v803 = vadd.f32 %v716, %v795
        %v804 = vadd.f32 %v719, %v795
        %v805 = vadd.f32 %v722, %v795
        %v806 = vadd.f32 %v725, %v795
        %v807 = vadd.f32 %v728, %v795
        %v808 = vadd.f32 %v731, %v795
        %v809 = vadd.f32 %v734, %v795
        %v810 = vadd.f32 %v737, %v795
        %v811 = vadd.f32 %v740, %v795
        %v812 = vadd.f32 %v743, %v795
        %v813 = vadd.f32 %v746, %v795
        %v814 = vadd.f32 %v749, %v795
        %v815 = vadd.f32 %v752, %v795
        %v816 = vadd.f32 %v755, %v795
        %v817 = vadd.f32 %v758, %v795
        %v818 = vadd.f32 %v761, %v795
        %v819 = vadd.f32 %v764, %v795
        %v820 = vadd.f32 %v767, %v795
        %v821 = vadd.f32 %v770, %v795
        %v822 = vadd.f32 %v773, %v795
        %v823 = vadd.f32 %v776, %v795
        %v824 = vadd.f32 %v779, %v795
        %v825 = vadd.f32 %v782, %v795
        %v826 = vadd.f32 %v785, %v795
        %v827 = vadd.f32 %v788, %v795
        %v828 = vadd.f32 %v791, %v795
        %v829 = vxor.u32 %v797, 2147483648
        %v830 = vxor.u32 %v798, 2147483648
        %v831 = vxor.u32 %v799, 2147483648
        %v832 = vxor.u32 %v800, 2147483648
        %v833 = vxor.u32 %v801, 2147483648
        %v834 = vxor.u32 %v802, 2147483648
        %v835 = vxor.u32 %v803, 2147483648
        %v836 = vxor.u32 %v804, 2147483648
        %v837 = vxor.u32 %v805, 2147483648
        %v838 = vxor.u32 %v806, 2147483648
        %v839 = vxor.u32 %v807, 2147483648
        %v840 = vxor.u32 %v808, 2147483648
        %v841 = vxor.u32 %v809, 2147483648
        %v842 = vxor.u32 %v810, 2147483648
        %v843 = vxor.u32 %v811, 2147483648
        %v844 = vxor.u32 %v812, 2147483648
        %v845 = vxor.u32 %v813, 2147483648
        %v846 = vxor.u32 %v814, 2147483648
        %v847 = vxor.u32 %v815, 2147483648
        %v848 = vxor.u32 %v816, 2147483648
        %v849 = vxor.u32 %v817, 2147483648
        %v850 = vxor.u32 %v818, 2147483648
        %v851 = vxor.u32 %v819, 2147483648
        %v852 = vxor.u32 %v820, 2147483648
        %v853 = vxor.u32 %v821, 2147483648
        %v854 = vxor.u32 %v822, 2147483648
        %v855 = vxor.u32 %v823, 2147483648
        %v856 = vxor.u32 %v824, 2147483648
        %v857 = vxor.u32 %v825, 2147483648
        %v858 = vxor.u32 %v826, 2147483648
        %v859 = vxor.u32 %v827, 2147483648
        %v860 = vxor.u32 %v828, 2147483648
        %v861 = vmul.f32 %v829, 1.442695
        %v862 = vpow.pop %v861
        %v863 = vmul.f32 %v830, 1.442695
        %v864 = vpow.pop %v863
        %v865 = vmul.f32 %v831, 1.442695
        %v866 = vpow.pop %v865
        %v867 = vmul.f32 %v832, 1.442695
        %v868 = vpow.pop %v867
        %v869 = vmul.f32 %v833, 1.442695
        %v870 = vpow.pop %v869
        %v871 = vmul.f32 %v834, 1.442695
        %v872 = vpow.pop %v871
        %v873 = vmul.f32 %v835, 1.442695
        %v874 = vpow.pop %v873
        %v875 = vmul.f32 %v836, 1.442695
        %v876 = vpow.pop %v875
        %v877 = vmul.f32 %v837, 1.442695
        %v878 = vpow.pop %v877
        %v879 = vmul.f32 %v838, 1.442695
        %v880 = vpow.pop %v879
        %v881 = vmul.f32 %v839, 1.442695
        %v882 = vpow.pop %v881
        %v883 = vmul.f32 %v840, 1.442695
        %v884 = vpow.pop %v883
        %v885 = vmul.f32 %v841, 1.442695
        %v886 = vpow.pop %v885
        %v887 = vmul.f32 %v842, 1.442695
        %v888 = vpow.pop %v887
        %v889 = vmul.f32 %v843, 1.442695
        %v890 = vpow.pop %v889
        %v891 = vmul.f32 %v844, 1.442695
        %v892 = vpow.pop %v891
        %v893 = vmul.f32 %v845, 1.442695
        %v894 = vpow.pop %v893
        %v895 = vmul.f32 %v846, 1.442695
        %v896 = vpow.pop %v895
        %v897 = vmul.f32 %v847, 1.442695
        %v898 = vpow.pop %v897
        %v899 = vmul.f32 %v848, 1.442695
        %v900 = vpow.pop %v899
        %v901 = vmul.f32 %v849, 1.442695
        %v902 = vpow.pop %v901
        %v903 = vmul.f32 %v850, 1.442695
        %v904 = vpow.pop %v903
        %v905 = vmul.f32 %v851, 1.442695
        %v906 = vpow.pop %v905
        %v907 = vmul.f32 %v852, 1.442695
        %v908 = vpow.pop %v907
        %v909 = vmul.f32 %v853, 1.442695
        %v910 = vpow.pop %v909
        %v911 = vmul.f32 %v854, 1.442695
        %v912 = vpow.pop %v911
        %v913 = vmul.f32 %v855, 1.442695
        %v914 = vpow.pop %v913
        %v915 = vmul.f32 %v856, 1.442695
        %v916 = vpow.pop %v915
        %v917 = vmul.f32 %v857, 1.442695
        %v918 = vpow.pop %v917
        %v919 = vmul.f32 %v858, 1.442695
        %v920 = vpow.pop %v919
        %v921 = vmul.f32 %v859, 1.442695
        %v922 = vpow.pop %v921
        %v923 = vmul.f32 %v860, 1.442695
        %v924 = vpow.pop %v923
        %v925 = vadd.f32 %v862, 1.0
        %v926 = vadd.f32 %v864, 1.0
        %v927 = vadd.f32 %v866, 1.0
        %v928 = vadd.f32 %v868, 1.0
        %v929 = vadd.f32 %v870, 1.0
        %v930 = vadd.f32 %v872, 1.0
        %v931 = vadd.f32 %v874, 1.0
        %v932 = vadd.f32 %v876, 1.0
        %v933 = vadd.f32 %v878, 1.0
        %v934 = vadd.f32 %v880, 1.0
        %v935 = vadd.f32 %v882, 1.0
        %v936 = vadd.f32 %v884, 1.0
        %v937 = vadd.f32 %v886, 1.0
        %v938 = vadd.f32 %v888, 1.0
        %v939 = vadd.f32 %v890, 1.0
        %v940 = vadd.f32 %v892, 1.0
        %v941 = vadd.f32 %v894, 1.0
        %v942 = vadd.f32 %v896, 1.0
        %v943 = vadd.f32 %v898, 1.0
        %v944 = vadd.f32 %v900, 1.0
        %v945 = vadd.f32 %v902, 1.0
        %v946 = vadd.f32 %v904, 1.0
        %v947 = vadd.f32 %v906, 1.0
        %v948 = vadd.f32 %v908, 1.0
        %v949 = vadd.f32 %v910, 1.0
        %v950 = vadd.f32 %v912, 1.0
        %v951 = vadd.f32 %v914, 1.0
        %v952 = vadd.f32 %v916, 1.0
        %v953 = vadd.f32 %v918, 1.0
        %v954 = vadd.f32 %v920, 1.0
        %v955 = vadd.f32 %v922, 1.0
        %v956 = vadd.f32 %v924, 1.0
        %v957 = vrcp.pop %v925
        %v958 = vmul.f32 %v925, %v957
        %v959 = vsub.f32 1.0, %v958
        %v960 = vmul.f32 %v957, %v959
        %v961 = vadd.f32 %v957, %v960
        %vm962 = vweird.f32 %v925
        %vm963 = vweird.f32 %v957
        %vm964 = vmor %vm962, %vm963
        %v965 = vsel %vm964, %v957, %v961
        %v966 = vand.u32 2147483647, %v925
        %vm967 = vcmp.eq.f32.partialorder %v966, 8.507059e+37
        %v968 = vand.u32 %v925, 2147483648
        %v969 = vor.u32 1.1754944e-38, %v968
        %v970 = vsel %vm967, %v969, %v965
        %v971 = vmul.f32 1.0, %v970
        %v972 = vrcp.pop %v926
        %v973 = vmul.f32 %v926, %v972
        %v974 = vsub.f32 1.0, %v973
        %v975 = vmul.f32 %v972, %v974
        %v976 = vadd.f32 %v972, %v975
        %vm977 = vweird.f32 %v926
        %vm978 = vweird.f32 %v972
        %vm979 = vmor %vm977, %vm978
        %v980 = vsel %vm979, %v972, %v976
        %v981 = vand.u32 2147483647, %v926
        %vm982 = vcmp.eq.f32.partialorder %v981, 8.507059e+37
        %v983 = vand.u32 %v926, 2147483648
        %v984 = vor.u32 1.1754944e-38, %v983
        %v985 = vsel %vm982, %v984, %v980
        %v986 = vmul.f32 1.0, %v985
        %v987 = vrcp.pop %v927
        %v988 = vmul.f32 %v927, %v987
        %v989 = vsub.f32 1.0, %v988
        %v990 = vmul.f32 %v987, %v989
        %v991 = vadd.f32 %v987, %v990
        %vm992 = vweird.f32 %v927
        %vm993 = vweird.f32 %v987
        %vm994 = vmor %vm992, %vm993
        %v995 = vsel %vm994, %v987, %v991
        %v996 = vand.u32 2147483647, %v927
        %vm997 = vcmp.eq.f32.partialorder %v996, 8.507059e+37
        %v998 = vand.u32 %v927, 2147483648
        %v999 = vor.u32 1.1754944e-38, %v998
        %v1000 = vsel %vm997, %v999, %v995
        %v1001 = vmul.f32 1.0, %v1000
        %v1002 = vrcp.pop %v928
        %v1003 = vmul.f32 %v928, %v1002
        %v1004 = vsub.f32 1.0, %v1003
        %v1005 = vmul.f32 %v1002, %v1004
        %v1006 = vadd.f32 %v1002, %v1005
        %vm1007 = vweird.f32 %v928
        %vm1008 = vweird.f32 %v1002
        %vm1009 = vmor %vm1007, %vm1008
        %v1010 = vsel %vm1009, %v1002, %v1006
        %v1011 = vand.u32 2147483647, %v928
        %vm1012 = vcmp.eq.f32.partialorder %v1011, 8.507059e+37
        %v1013 = vand.u32 %v928, 2147483648
        %v1014 = vor.u32 1.1754944e-38, %v1013
        %v1015 = vsel %vm1012, %v1014, %v1010
        %v1016 = vmul.f32 1.0, %v1015
        %v1017 = vrcp.pop %v929
        %v1018 = vmul.f32 %v929, %v1017
        %v1019 = vsub.f32 1.0, %v1018
        %v1020 = vmul.f32 %v1017, %v1019
        %v1021 = vadd.f32 %v1017, %v1020
        %vm1022 = vweird.f32 %v929
        %vm1023 = vweird.f32 %v1017
        %vm1024 = vmor %vm1022, %vm1023
        %v1025 = vsel %vm1024, %v1017, %v1021
        %v1026 = vand.u32 2147483647, %v929
        %vm1027 = vcmp.eq.f32.partialorder %v1026, 8.507059e+37
        %v1028 = vand.u32 %v929, 2147483648
        %v1029 = vor.u32 1.1754944e-38, %v1028
        %v1030 = vsel %vm1027, %v1029, %v1025
        %v1031 = vmul.f32 1.0, %v1030
        %v1032 = vrcp.pop %v930
        %v1033 = vmul.f32 %v930, %v1032
        %v1034 = vsub.f32 1.0, %v1033
        %v1035 = vmul.f32 %v1032, %v1034
        %v1036 = vadd.f32 %v1032, %v1035
        %vm1037 = vweird.f32 %v930
        %vm1038 = vweird.f32 %v1032
        %vm1039 = vmor %vm1037, %vm1038
        %v1040 = vsel %vm1039, %v1032, %v1036
        %v1041 = vand.u32 2147483647, %v930
        %vm1042 = vcmp.eq.f32.partialorder %v1041, 8.507059e+37
        %v1043 = vand.u32 %v930, 2147483648
        %v1044 = vor.u32 1.1754944e-38, %v1043
        %v1045 = vsel %vm1042, %v1044, %v1040
        %v1046 = vmul.f32 1.0, %v1045
        %v1047 = vrcp.pop %v931
        %v1048 = vmul.f32 %v931, %v1047
        %v1049 = vsub.f32 1.0, %v1048
        %v1050 = vmul.f32 %v1047, %v1049
        %v1051 = vadd.f32 %v1047, %v1050
        %vm1052 = vweird.f32 %v931
        %vm1053 = vweird.f32 %v1047
        %vm1054 = vmor %vm1052, %vm1053
        %v1055 = vsel %vm1054, %v1047, %v1051
        %v1056 = vand.u32 2147483647, %v931
        %vm1057 = vcmp.eq.f32.partialorder %v1056, 8.507059e+37
        %v1058 = vand.u32 %v931, 2147483648
        %v1059 = vor.u32 1.1754944e-38, %v1058
        %v1060 = vsel %vm1057, %v1059, %v1055
        %v1061 = vmul.f32 1.0, %v1060
        %v1062 = vrcp.pop %v932
        %v1063 = vmul.f32 %v932, %v1062
        %v1064 = vsub.f32 1.0, %v1063
        %v1065 = vmul.f32 %v1062, %v1064
        %v1066 = vadd.f32 %v1062, %v1065
        %vm1067 = vweird.f32 %v932
        %vm1068 = vweird.f32 %v1062
        %vm1069 = vmor %vm1067, %vm1068
        %v1070 = vsel %vm1069, %v1062, %v1066
        %v1071 = vand.u32 2147483647, %v932
        %vm1072 = vcmp.eq.f32.partialorder %v1071, 8.507059e+37
        %v1073 = vand.u32 %v932, 2147483648
        %v1074 = vor.u32 1.1754944e-38, %v1073
        %v1075 = vsel %vm1072, %v1074, %v1070
        %v1076 = vmul.f32 1.0, %v1075
        %v1077 = vrcp.pop %v933
        %v1078 = vmul.f32 %v933, %v1077
        %v1079 = vsub.f32 1.0, %v1078
        %v1080 = vmul.f32 %v1077, %v1079
        %v1081 = vadd.f32 %v1077, %v1080
        %vm1082 = vweird.f32 %v933
        %vm1083 = vweird.f32 %v1077
        %vm1084 = vmor %vm1082, %vm1083
        %v1085 = vsel %vm1084, %v1077, %v1081
        %v1086 = vand.u32 2147483647, %v933
        %vm1087 = vcmp.eq.f32.partialorder %v1086, 8.507059e+37
        %v1088 = vand.u32 %v933, 2147483648
        %v1089 = vor.u32 1.1754944e-38, %v1088
        %v1090 = vsel %vm1087, %v1089, %v1085
        %v1091 = vmul.f32 1.0, %v1090
        %v1092 = vrcp.pop %v934
        %v1093 = vmul.f32 %v934, %v1092
        %v1094 = vsub.f32 1.0, %v1093
        %v1095 = vmul.f32 %v1092, %v1094
        %v1096 = vadd.f32 %v1092, %v1095
        %vm1097 = vweird.f32 %v934
        %vm1098 = vweird.f32 %v1092
        %vm1099 = vmor %vm1097, %vm1098
        %v1100 = vsel %vm1099, %v1092, %v1096
        %v1101 = vand.u32 2147483647, %v934
        %vm1102 = vcmp.eq.f32.partialorder %v1101, 8.507059e+37
        %v1103 = vand.u32 %v934, 2147483648
        %v1104 = vor.u32 1.1754944e-38, %v1103
        %v1105 = vsel %vm1102, %v1104, %v1100
        %v1106 = vmul.f32 1.0, %v1105
        %v1107 = vrcp.pop %v935
        %v1108 = vmul.f32 %v935, %v1107
        %v1109 = vsub.f32 1.0, %v1108
        %v1110 = vmul.f32 %v1107, %v1109
        %v1111 = vadd.f32 %v1107, %v1110
        %vm1112 = vweird.f32 %v935
        %vm1113 = vweird.f32 %v1107
        %vm1114 = vmor %vm1112, %vm1113
        %v1115 = vsel %vm1114, %v1107, %v1111
        %v1116 = vand.u32 2147483647, %v935
        %vm1117 = vcmp.eq.f32.partialorder %v1116, 8.507059e+37
        %v1118 = vand.u32 %v935, 2147483648
        %v1119 = vor.u32 1.1754944e-38, %v1118
        %v1120 = vsel %vm1117, %v1119, %v1115
        %v1121 = vmul.f32 1.0, %v1120
        %v1122 = vrcp.pop %v936
        %v1123 = vmul.f32 %v936, %v1122
        %v1124 = vsub.f32 1.0, %v1123
        %v1125 = vmul.f32 %v1122, %v1124
        %v1126 = vadd.f32 %v1122, %v1125
        %vm1127 = vweird.f32 %v936
        %vm1128 = vweird.f32 %v1122
        %vm1129 = vmor %vm1127, %vm1128
        %v1130 = vsel %vm1129, %v1122, %v1126
        %v1131 = vand.u32 2147483647, %v936
        %vm1132 = vcmp.eq.f32.partialorder %v1131, 8.507059e+37
        %v1133 = vand.u32 %v936, 2147483648
        %v1134 = vor.u32 1.1754944e-38, %v1133
        %v1135 = vsel %vm1132, %v1134, %v1130
        %v1136 = vmul.f32 1.0, %v1135
        %v1137 = vrcp.pop %v937
        %v1138 = vmul.f32 %v937, %v1137
        %v1139 = vsub.f32 1.0, %v1138
        %v1140 = vmul.f32 %v1137, %v1139
        %v1141 = vadd.f32 %v1137, %v1140
        %vm1142 = vweird.f32 %v937
        %vm1143 = vweird.f32 %v1137
        %vm1144 = vmor %vm1142, %vm1143
        %v1145 = vsel %vm1144, %v1137, %v1141
        %v1146 = vand.u32 2147483647, %v937
        %vm1147 = vcmp.eq.f32.partialorder %v1146, 8.507059e+37
        %v1148 = vand.u32 %v937, 2147483648
        %v1149 = vor.u32 1.1754944e-38, %v1148
        %v1150 = vsel %vm1147, %v1149, %v1145
        %v1151 = vmul.f32 1.0, %v1150
        %v1152 = vrcp.pop %v938
        %v1153 = vmul.f32 %v938, %v1152
        %v1154 = vsub.f32 1.0, %v1153
        %v1155 = vmul.f32 %v1152, %v1154
        %v1156 = vadd.f32 %v1152, %v1155
        %vm1157 = vweird.f32 %v938
        %vm1158 = vweird.f32 %v1152
        %vm1159 = vmor %vm1157, %vm1158
        %v1160 = vsel %vm1159, %v1152, %v1156
        %v1161 = vand.u32 2147483647, %v938
        %vm1162 = vcmp.eq.f32.partialorder %v1161, 8.507059e+37
        %v1163 = vand.u32 %v938, 2147483648
        %v1164 = vor.u32 1.1754944e-38, %v1163
        %v1165 = vsel %vm1162, %v1164, %v1160
        %v1166 = vmul.f32 1.0, %v1165
        %v1167 = vrcp.pop %v939
        %v1168 = vmul.f32 %v939, %v1167
        %v1169 = vsub.f32 1.0, %v1168
        %v1170 = vmul.f32 %v1167, %v1169
        %v1171 = vadd.f32 %v1167, %v1170
        %vm1172 = vweird.f32 %v939
        %vm1173 = vweird.f32 %v1167
        %vm1174 = vmor %vm1172, %vm1173
        %v1175 = vsel %vm1174, %v1167, %v1171
        %v1176 = vand.u32 2147483647, %v939
        %vm1177 = vcmp.eq.f32.partialorder %v1176, 8.507059e+37
        %v1178 = vand.u32 %v939, 2147483648
        %v1179 = vor.u32 1.1754944e-38, %v1178
        %v1180 = vsel %vm1177, %v1179, %v1175
        %v1181 = vmul.f32 1.0, %v1180
        %v1182 = vrcp.pop %v940
        %v1183 = vmul.f32 %v940, %v1182
        %v1184 = vsub.f32 1.0, %v1183
        %v1185 = vmul.f32 %v1182, %v1184
        %v1186 = vadd.f32 %v1182, %v1185
        %vm1187 = vweird.f32 %v940
        %vm1188 = vweird.f32 %v1182
        %vm1189 = vmor %vm1187, %vm1188
        %v1190 = vsel %vm1189, %v1182, %v1186
        %v1191 = vand.u32 2147483647, %v940
        %vm1192 = vcmp.eq.f32.partialorder %v1191, 8.507059e+37
        %v1193 = vand.u32 %v940, 2147483648
        %v1194 = vor.u32 1.1754944e-38, %v1193
        %v1195 = vsel %vm1192, %v1194, %v1190
        %v1196 = vmul.f32 1.0, %v1195
        %v1197 = vrcp.pop %v941
        %v1198 = vmul.f32 %v941, %v1197
        %v1199 = vsub.f32 1.0, %v1198
        %v1200 = vmul.f32 %v1197, %v1199
        %v1201 = vadd.f32 %v1197, %v1200
        %vm1202 = vweird.f32 %v941
        %vm1203 = vweird.f32 %v1197
        %vm1204 = vmor %vm1202, %vm1203
        %v1205 = vsel %vm1204, %v1197, %v1201
        %v1206 = vand.u32 2147483647, %v941
        %vm1207 = vcmp.eq.f32.partialorder %v1206, 8.507059e+37
        %v1208 = vand.u32 %v941, 2147483648
        %v1209 = vor.u32 1.1754944e-38, %v1208
        %v1210 = vsel %vm1207, %v1209, %v1205
        %v1211 = vmul.f32 1.0, %v1210
        %v1212 = vrcp.pop %v942
        %v1213 = vmul.f32 %v942, %v1212
        %v1214 = vsub.f32 1.0, %v1213
        %v1215 = vmul.f32 %v1212, %v1214
        %v1216 = vadd.f32 %v1212, %v1215
        %vm1217 = vweird.f32 %v942
        %vm1218 = vweird.f32 %v1212
        %vm1219 = vmor %vm1217, %vm1218
        %v1220 = vsel %vm1219, %v1212, %v1216
        %v1221 = vand.u32 2147483647, %v942
        %vm1222 = vcmp.eq.f32.partialorder %v1221, 8.507059e+37
        %v1223 = vand.u32 %v942, 2147483648
        %v1224 = vor.u32 1.1754944e-38, %v1223
        %v1225 = vsel %vm1222, %v1224, %v1220
        %v1226 = vmul.f32 1.0, %v1225
        %v1227 = vrcp.pop %v943
        %v1228 = vmul.f32 %v943, %v1227
        %v1229 = vsub.f32 1.0, %v1228
        %v1230 = vmul.f32 %v1227, %v1229
        %v1231 = vadd.f32 %v1227, %v1230
        %vm1232 = vweird.f32 %v943
        %vm1233 = vweird.f32 %v1227
        %vm1234 = vmor %vm1232, %vm1233
        %v1235 = vsel %vm1234, %v1227, %v1231
        %v1236 = vand.u32 2147483647, %v943
        %vm1237 = vcmp.eq.f32.partialorder %v1236, 8.507059e+37
        %v1238 = vand.u32 %v943, 2147483648
        %v1239 = vor.u32 1.1754944e-38, %v1238
        %v1240 = vsel %vm1237, %v1239, %v1235
        %v1241 = vmul.f32 1.0, %v1240
        %v1242 = vrcp.pop %v944
        %v1243 = vmul.f32 %v944, %v1242
        %v1244 = vsub.f32 1.0, %v1243
        %v1245 = vmul.f32 %v1242, %v1244
        %v1246 = vadd.f32 %v1242, %v1245
        %vm1247 = vweird.f32 %v944
        %vm1248 = vweird.f32 %v1242
        %vm1249 = vmor %vm1247, %vm1248
        %v1250 = vsel %vm1249, %v1242, %v1246
        %v1251 = vand.u32 2147483647, %v944
        %vm1252 = vcmp.eq.f32.partialorder %v1251, 8.507059e+37
        %v1253 = vand.u32 %v944, 2147483648
        %v1254 = vor.u32 1.1754944e-38, %v1253
        %v1255 = vsel %vm1252, %v1254, %v1250
        %v1256 = vmul.f32 1.0, %v1255
        %v1257 = vrcp.pop %v945
        %v1258 = vmul.f32 %v945, %v1257
        %v1259 = vsub.f32 1.0, %v1258
        %v1260 = vmul.f32 %v1257, %v1259
        %v1261 = vadd.f32 %v1257, %v1260
        %vm1262 = vweird.f32 %v945
        %vm1263 = vweird.f32 %v1257
        %vm1264 = vmor %vm1262, %vm1263
        %v1265 = vsel %vm1264, %v1257, %v1261
        %v1266 = vand.u32 2147483647, %v945
        %vm1267 = vcmp.eq.f32.partialorder %v1266, 8.507059e+37
        %v1268 = vand.u32 %v945, 2147483648
        %v1269 = vor.u32 1.1754944e-38, %v1268
        %v1270 = vsel %vm1267, %v1269, %v1265
        %v1271 = vmul.f32 1.0, %v1270
        %v1272 = vrcp.pop %v946
        %v1273 = vmul.f32 %v946, %v1272
        %v1274 = vsub.f32 1.0, %v1273
        %v1275 = vmul.f32 %v1272, %v1274
        %v1276 = vadd.f32 %v1272, %v1275
        %vm1277 = vweird.f32 %v946
        %vm1278 = vweird.f32 %v1272
        %vm1279 = vmor %vm1277, %vm1278
        %v1280 = vsel %vm1279, %v1272, %v1276
        %v1281 = vand.u32 2147483647, %v946
        %vm1282 = vcmp.eq.f32.partialorder %v1281, 8.507059e+37
        %v1283 = vand.u32 %v946, 2147483648
        %v1284 = vor.u32 1.1754944e-38, %v1283
        %v1285 = vsel %vm1282, %v1284, %v1280
        %v1286 = vmul.f32 1.0, %v1285
        %v1287 = vrcp.pop %v947
        %v1288 = vmul.f32 %v947, %v1287
        %v1289 = vsub.f32 1.0, %v1288
        %v1290 = vmul.f32 %v1287, %v1289
        %v1291 = vadd.f32 %v1287, %v1290
        %vm1292 = vweird.f32 %v947
        %vm1293 = vweird.f32 %v1287
        %vm1294 = vmor %vm1292, %vm1293
        %v1295 = vsel %vm1294, %v1287, %v1291
        %v1296 = vand.u32 2147483647, %v947
        %vm1297 = vcmp.eq.f32.partialorder %v1296, 8.507059e+37
        %v1298 = vand.u32 %v947, 2147483648
        %v1299 = vor.u32 1.1754944e-38, %v1298
        %v1300 = vsel %vm1297, %v1299, %v1295
        %v1301 = vmul.f32 1.0, %v1300
        %v1302 = vrcp.pop %v948
        %v1303 = vmul.f32 %v948, %v1302
        %v1304 = vsub.f32 1.0, %v1303
        %v1305 = vmul.f32 %v1302, %v1304
        %v1306 = vadd.f32 %v1302, %v1305
        %vm1307 = vweird.f32 %v948
        %vm1308 = vweird.f32 %v1302
        %vm1309 = vmor %vm1307, %vm1308
        %v1310 = vsel %vm1309, %v1302, %v1306
        %v1311 = vand.u32 2147483647, %v948
        %vm1312 = vcmp.eq.f32.partialorder %v1311, 8.507059e+37
        %v1313 = vand.u32 %v948, 2147483648
        %v1314 = vor.u32 1.1754944e-38, %v1313
        %v1315 = vsel %vm1312, %v1314, %v1310
        %v1316 = vmul.f32 1.0, %v1315
        %v1317 = vrcp.pop %v949
        %v1318 = vmul.f32 %v949, %v1317
        %v1319 = vsub.f32 1.0, %v1318
        %v1320 = vmul.f32 %v1317, %v1319
        %v1321 = vadd.f32 %v1317, %v1320
        %vm1322 = vweird.f32 %v949
        %vm1323 = vweird.f32 %v1317
        %vm1324 = vmor %vm1322, %vm1323
        %v1325 = vsel %vm1324, %v1317, %v1321
        %v1326 = vand.u32 2147483647, %v949
        %vm1327 = vcmp.eq.f32.partialorder %v1326, 8.507059e+37
        %v1328 = vand.u32 %v949, 2147483648
        %v1329 = vor.u32 1.1754944e-38, %v1328
        %v1330 = vsel %vm1327, %v1329, %v1325
        %v1331 = vmul.f32 1.0, %v1330
        %v1332 = vrcp.pop %v950
        %v1333 = vmul.f32 %v950, %v1332
        %v1334 = vsub.f32 1.0, %v1333
        %v1335 = vmul.f32 %v1332, %v1334
        %v1336 = vadd.f32 %v1332, %v1335
        %vm1337 = vweird.f32 %v950
        %vm1338 = vweird.f32 %v1332
        %vm1339 = vmor %vm1337, %vm1338
        %v1340 = vsel %vm1339, %v1332, %v1336
        %v1341 = vand.u32 2147483647, %v950
        %vm1342 = vcmp.eq.f32.partialorder %v1341, 8.507059e+37
        %v1343 = vand.u32 %v950, 2147483648
        %v1344 = vor.u32 1.1754944e-38, %v1343
        %v1345 = vsel %vm1342, %v1344, %v1340
        %v1346 = vmul.f32 1.0, %v1345
        %v1347 = vrcp.pop %v951
        %v1348 = vmul.f32 %v951, %v1347
        %v1349 = vsub.f32 1.0, %v1348
        %v1350 = vmul.f32 %v1347, %v1349
        %v1351 = vadd.f32 %v1347, %v1350
        %vm1352 = vweird.f32 %v951
        %vm1353 = vweird.f32 %v1347
        %vm1354 = vmor %vm1352, %vm1353
        %v1355 = vsel %vm1354, %v1347, %v1351
        %v1356 = vand.u32 2147483647, %v951
        %vm1357 = vcmp.eq.f32.partialorder %v1356, 8.507059e+37
        %v1358 = vand.u32 %v951, 2147483648
        %v1359 = vor.u32 1.1754944e-38, %v1358
        %v1360 = vsel %vm1357, %v1359, %v1355
        %v1361 = vmul.f32 1.0, %v1360
        %v1362 = vrcp.pop %v952
        %v1363 = vmul.f32 %v952, %v1362
        %v1364 = vsub.f32 1.0, %v1363
        %v1365 = vmul.f32 %v1362, %v1364
        %v1366 = vadd.f32 %v1362, %v1365
        %vm1367 = vweird.f32 %v952
        %vm1368 = vweird.f32 %v1362
        %vm1369 = vmor %vm1367, %vm1368
        %v1370 = vsel %vm1369, %v1362, %v1366
        %v1371 = vand.u32 2147483647, %v952
        %vm1372 = vcmp.eq.f32.partialorder %v1371, 8.507059e+37
        %v1373 = vand.u32 %v952, 2147483648
        %v1374 = vor.u32 1.1754944e-38, %v1373
        %v1375 = vsel %vm1372, %v1374, %v1370
        %v1376 = vmul.f32 1.0, %v1375
        %v1377 = vrcp.pop %v953
        %v1378 = vmul.f32 %v953, %v1377
        %v1379 = vsub.f32 1.0, %v1378
        %v1380 = vmul.f32 %v1377, %v1379
        %v1381 = vadd.f32 %v1377, %v1380
        %vm1382 = vweird.f32 %v953
        %vm1383 = vweird.f32 %v1377
        %vm1384 = vmor %vm1382, %vm1383
        %v1385 = vsel %vm1384, %v1377, %v1381
        %v1386 = vand.u32 2147483647, %v953
        %vm1387 = vcmp.eq.f32.partialorder %v1386, 8.507059e+37
        %v1388 = vand.u32 %v953, 2147483648
        %v1389 = vor.u32 1.1754944e-38, %v1388
        %v1390 = vsel %vm1387, %v1389, %v1385
        %v1391 = vmul.f32 1.0, %v1390
        %v1392 = vrcp.pop %v954
        %v1393 = vmul.f32 %v954, %v1392
        %v1394 = vsub.f32 1.0, %v1393
        %v1395 = vmul.f32 %v1392, %v1394
        %v1396 = vadd.f32 %v1392, %v1395
        %vm1397 = vweird.f32 %v954
        %vm1398 = vweird.f32 %v1392
        %vm1399 = vmor %vm1397, %vm1398
        %v1400 = vsel %vm1399, %v1392, %v1396
        %v1401 = vand.u32 2147483647, %v954
        %vm1402 = vcmp.eq.f32.partialorder %v1401, 8.507059e+37
        %v1403 = vand.u32 %v954, 2147483648
        %v1404 = vor.u32 1.1754944e-38, %v1403
        %v1405 = vsel %vm1402, %v1404, %v1400
        %v1406 = vmul.f32 1.0, %v1405
        %v1407 = vrcp.pop %v955
        %v1408 = vmul.f32 %v955, %v1407
        %v1409 = vsub.f32 1.0, %v1408
        %v1410 = vmul.f32 %v1407, %v1409
        %v1411 = vadd.f32 %v1407, %v1410
        %vm1412 = vweird.f32 %v955
        %vm1413 = vweird.f32 %v1407
        %vm1414 = vmor %vm1412, %vm1413
        %v1415 = vsel %vm1414, %v1407, %v1411
        %v1416 = vand.u32 2147483647, %v955
        %vm1417 = vcmp.eq.f32.partialorder %v1416, 8.507059e+37
        %v1418 = vand.u32 %v955, 2147483648
        %v1419 = vor.u32 1.1754944e-38, %v1418
        %v1420 = vsel %vm1417, %v1419, %v1415
        %v1421 = vmul.f32 1.0, %v1420
        %v1422 = vrcp.pop %v956
        %v1423 = vmul.f32 %v956, %v1422
        %v1424 = vsub.f32 1.0, %v1423
        %v1425 = vmul.f32 %v1422, %v1424
        %v1426 = vadd.f32 %v1422, %v1425
        %vm1427 = vweird.f32 %v956
        %vm1428 = vweird.f32 %v1422
        %vm1429 = vmor %vm1427, %vm1428
        %v1430 = vsel %vm1429, %v1422, %v1426
        %v1431 = vand.u32 2147483647, %v956
        %vm1432 = vcmp.eq.f32.partialorder %v1431, 8.507059e+37
        %v1433 = vand.u32 %v956, 2147483648
        %v1434 = vor.u32 1.1754944e-38, %v1433
        %v1435 = vsel %vm1432, %v1434, %v1430
        %v1436 = vmul.f32 1.0, %v1435
        %v1437 = vmul.f32 %v797, %v971
        %v1438 = vmul.f32 %v798, %v986
        %v1439 = vmul.f32 %v799, %v1001
        %v1440 = vmul.f32 %v800, %v1016
        %v1441 = vmul.f32 %v801, %v1031
        %v1442 = vmul.f32 %v802, %v1046
        %v1443 = vmul.f32 %v803, %v1061
        %v1444 = vmul.f32 %v804, %v1076
        %v1445 = vmul.f32 %v805, %v1091
        %v1446 = vmul.f32 %v806, %v1106
        %v1447 = vmul.f32 %v807, %v1121
        %v1448 = vmul.f32 %v808, %v1136
        %v1449 = vmul.f32 %v809, %v1151
        %v1450 = vmul.f32 %v810, %v1166
        %v1451 = vmul.f32 %v811, %v1181
        %v1452 = vmul.f32 %v812, %v1196
        %v1453 = vmul.f32 %v813, %v1211
        %v1454 = vmul.f32 %v814, %v1226
        %v1455 = vmul.f32 %v815, %v1241
        %v1456 = vmul.f32 %v816, %v1256
        %v1457 = vmul.f32 %v817, %v1271
        %v1458 = vmul.f32 %v818, %v1286
        %v1459 = vmul.f32 %v819, %v1301
        %v1460 = vmul.f32 %v820, %v1316
        %v1461 = vmul.f32 %v821, %v1331
        %v1462 = vmul.f32 %v822, %v1346
        %v1463 = vmul.f32 %v823, %v1361
        %v1464 = vmul.f32 %v824, %v1376
        %v1465 = vmul.f32 %v825, %v1391
        %v1466 = vmul.f32 %v826, %v1406
        %v1467 = vmul.f32 %v827, %v1421
        %v1468 = vmul.f32 %v828, %v1436
        %1469 = vst.msk [vmem:[%s267] sm:$0xff] %vm583, %v1437
        %1470 = vst.msk [vmem:[%s267 + $0x8] sm:$0xff] %vm583, %v1438
        %1471 = vst.msk [vmem:[%s267 + $0x10] sm:$0xff] %vm583, %v1439
        %1472 = vst.msk [vmem:[%s267 + $0x18] sm:$0xff] %vm583, %v1440
        %1473 = vst.msk [vmem:[%s267 + $0x20] sm:$0xff] %vm583, %v1441
        %1474 = vst.msk [vmem:[%s267 + $0x28] sm:$0xff] %vm583, %v1442
        %1475 = vst.msk [vmem:[%s267 + $0x30] sm:$0xff] %vm583, %v1443
        %1476 = vst.msk [vmem:[%s267 + $0x38] sm:$0xff] %vm583, %v1444
        %1477 = vst.msk [vmem:[%s267 + $0x40] sm:$0xff] %vm583, %v1445
        %1478 = vst.msk [vmem:[%s267 + $0x48] sm:$0xff] %vm583, %v1446
        %1479 = vst.msk [vmem:[%s267 + $0x50] sm:$0xff] %vm583, %v1447
        %1480 = vst.msk [vmem:[%s267 + $0x58] sm:$0xff] %vm583, %v1448
        %1481 = vst.msk [vmem:[%s267 + $0x60] sm:$0xff] %vm583, %v1449
        %1482 = vst.msk [vmem:[%s267 + $0x68] sm:$0xff] %vm583, %v1450
        %1483 = vst.msk [vmem:[%s267 + $0x70] sm:$0xff] %vm583, %v1451
        %1484 = vst.msk [vmem:[%s267 + $0x78] sm:$0xff] %vm583, %v1452
        %1485 = vst.msk [vmem:[%s267 + $0x80] sm:$0xff] %vm583, %v1453
        %1486 = vst.msk [vmem:[%s267 + $0x88] sm:$0xff] %vm583, %v1454
        %1487 = vst.msk [vmem:[%s267 + $0x90] sm:$0xff] %vm583, %v1455
        %1488 = vst.msk [vmem:[%s267 + $0x98] sm:$0xff] %vm583, %v1456
        %1489 = vst.msk [vmem:[%s267 + $0xa0] sm:$0xff] %vm583, %v1457
        %1490 = vst.msk [vmem:[%s267 + $0xa8] sm:$0xff] %vm583, %v1458
        %1491 = vst.msk [vmem:[%s267 + $0xb0] sm:$0xff] %vm583, %v1459
        %1492 = vst.msk [vmem:[%s267 + $0xb8] sm:$0xff] %vm583, %v1460
        %1493 = vst.msk [vmem:[%s267 + $0xc0] sm:$0xff] %vm583, %v1461
        %1494 = vst.msk [vmem:[%s267 + $0xc8] sm:$0xff] %vm583, %v1462
        %1495 = vst.msk [vmem:[%s267 + $0xd0] sm:$0xff] %vm583, %v1463
        %1496 = vst.msk [vmem:[%s267 + $0xd8] sm:$0xff] %vm583, %v1464
        %1497 = vst.msk [vmem:[%s267 + $0xe0] sm:$0xff] %vm583, %v1465
        %1498 = vst.msk [vmem:[%s267 + $0xe8] sm:$0xff] %vm583, %v1466
        %1499 = vst.msk [vmem:[%s267 + $0xf0] sm:$0xff] %vm583, %v1467
        %1500 = vst.msk [vmem:[%s267 + $0xf8] sm:$0xff] %vm583, %v1468
        %s1501 = sand.u32 %s148, 1
        %s1502 = scalar_lea.sflag [#allocation3], %s1501
        %s1503 = sand.u32 %s148, 1
        %s1504 = smul.addr %s1503, 256
        %s1505 = scalar_lea.vmem [#allocation2], %s1504
        // Predicated region
        $region37: #{_lambda_.7} parent=35 // pred_check
          %p1506 = pneg %p158
        $region38: #{_lambda_.7} parent=35 // pred_check_branch
          %1508 = sbr.rel (%p1506) target = $region40
        $region39: #{_lambda_.7} parent=35 // pred_region
          %s1509 = smul.u32 32, %s23
          %1511 = vsyncadd %s1502, 0
          %s1512 = smul.addr %s22, 32
          %s1513 = sadd.s32 %s1509, %s1512
          %s1514 = smul.addr %s1513, 8
          %s1515 = scalar_lea.hbm %s4, %s1514
          %s1516 = sshll.u32 %s1505, 4
          %s1517 = int_to_ptr.vmem [resolvable:$true] %s1516
          %s1518 = sshll.u32 %s1515, 4
          %s1519 = int_to_ptr.hbm [resolvable:$true] %s1518
          %1524 = dma.vmem_to_hbm [thread:$0]  %s1517, 4096, %s1519, %s1502, 128, 128, 8
        $region40: #{_lambda_.7} parent=35 // pred_fallthru
          _
      $region36: #{_lambda_.7} parent=5 // pred_fallthru
        _
      %p1525 = scmp.le.s32.totalorder 2, %s13
      // Predicated region
      $region41: #{_lambda_.7} parent=5 // pred_check
        %p1526 = pneg %p1525
      $region42: #{_lambda_.7} parent=5 // pred_check_branch
        %1528 = sbr.rel (%p1526) target = $region44
      $region43: #{_lambda_.7} parent=5 // pred_region
        %s1529 = ssub.s32 %s13, 2
        // Predicated region
        $region45: #{_lambda_.7} parent=43 // pred_check
          %p1530 = pneg %p164
        $region46: #{_lambda_.7} parent=43 // pred_check_branch
          %1532 = sbr.rel (%p1530) target = $region48
        $region47: #{_lambda_.7} parent=43 // pred_region
          %s1533 = sand.u32 %s149, 1
          %s1534 = scalar_lea.sflag [#allocation3], %s1533
          %s1535 = sand.u32 %s149, 1
          %s1536 = smul.addr %s1535, 256
          %s1537 = scalar_lea.vmem [#allocation2], %s1536
          %1539 = dma.done %s1534, 4096
        $region48: #{_lambda_.7} parent=43 // pred_fallthru
          _
      $region44: #{_lambda_.7} parent=5 // pred_fallthru
        _
    $region6: #{_lambda_.7} parent=1 // loop_footer
      %s17 = sadd.s32 1, %s13
    $region7: #{_lambda_.7} parent=1 // loop_footer_branch
      %12 = sbr.rel target = $region3
    $region8: #{_lambda_.7} parent=1 // loop_exit
      _
    %1540 = vsyncpa [#allocation3], 1
    %s1541 = scalar_lea.sflag [#allocation3], 1
    %1542 = vsyncpa %s1541, 1

</llo_original>
